<compile_context>
chip_gen: v7x
topology: tpu7x:2x2x1
jax: 0.10.0
libtpu: 0.0.40
codegen_flags: <defaults>
</compile_context>

<pallas_src>
import functools

import jax
import jax.numpy as jnp
from jax import lax
from jax.experimental import pallas as pl
from jax.experimental.pallas import tpu as pltpu

VMEM_LIMIT = 48 * 1024 * 1024   # scoped VMEM ceiling: fits v7x (64 MiB) and v5e/v6e (128 MiB)


def _round_up(x, m):
    return (x + m - 1) // m * m


def _cdiv(a, b):
    return (a + b - 1) // b


# --------------------------- layer 1: 7x7 stride-2 conv --------------------------- #

def _matmul_bias_relu_kernel(p_ref, w_ref, b_ref, o_ref):
    """One M-tile of ReLU(patches @ W + b).  p:(TM,K) bf16, w:(K,Co) bf16, b:(1,Co) f32."""
    acc = jnp.dot(p_ref[...], w_ref[...], preferred_element_type=jnp.float32)
    o_ref[...] = jnp.maximum(acc + b_ref[...], 0.0).astype(o_ref.dtype)


def _extract_patches_7x7(x_pad, k, stride, k_zero_pad):
    """im2col on padded NHWC; patch channel order (kh, kw, cin).  The zero K-pad is
    appended inside the concat, so no separate full-array pad pass is needed."""
    n, hp, wp, cin = x_pad.shape
    ho = (hp - k) // stride + 1
    wo = (wp - k) // stride + 1
    slices = []
    for kh in range(k):
        for kw in range(k):
            sl = lax.slice(
                x_pad,
                (0, kh, kw, 0),
                (n, kh + stride * (ho - 1) + 1, kw + stride * (wo - 1) + 1, cin),
                (1, stride, stride, 1))
            slices.append(sl)
    if k_zero_pad:
        slices.append(jnp.zeros((n, ho, wo, k_zero_pad), x_pad.dtype))
    return jnp.concatenate(slices, axis=-1), ho, wo


def conv7x7s2_relu(x_nhwc, weight, bias, *, tm):
    """ReLU(Conv2d(ZeroPad2d(1)(x), 7x7, stride 2)) -> (N, Ho, Wo, Cout) bf16."""
    cout, cin, k, _ = weight.shape
    n = x_nhwc.shape[0]
    kd = k * k * cin                    # 147
    kp = _round_up(kd, 16)              # 160: 37% fewer patch HBM bytes than padding to 256

    x_p = jnp.pad(x_nhwc, ((0, 0), (1, 1), (1, 1), (0, 0)))
    patches, ho, wo = _extract_patches_7x7(x_p, k, 2, kp - kd)
    m = n * ho * wo
    patches = patches.reshape(m, kp)    # free reshape, no pad/copy pass

    w_mat = jnp.transpose(weight, (2, 3, 1, 0)).reshape(kd, cout)
    w_mat = jnp.pad(w_mat, ((0, kp - kd), (0, 0))).astype(jnp.bfloat16)
    b2 = bias.astype(jnp.float32).reshape(1, cout)

    tm_e = max(16, min(_round_up(tm, 16), _round_up(m, 16)))   # bf16-native 16-row granularity
    grid = (_cdiv(m, tm_e),)                                   # ragged last tile is masked by Pallas
    cost = pl.CostEstimate(
        flops=int(2 * m * kp * cout), transcendentals=0,
        bytes_accessed=int(patches.size * 2 + w_mat.size * 2 + b2.size * 4 + m * cout * 2))

    out = pl.pallas_call(
        _matmul_bias_relu_kernel,
        out_shape=jax.ShapeDtypeStruct((m, cout), jnp.bfloat16),
        grid=grid,
        in_specs=[
            pl.BlockSpec((tm_e, kp), lambda i: (i, 0)),
            pl.BlockSpec((kp, cout), lambda i: (0, 0)),
            pl.BlockSpec((1, cout), lambda i: (0, 0)),
        ],
        out_specs=pl.BlockSpec((tm_e, cout), lambda i: (i, 0)),
        compiler_params=pltpu.CompilerParams(
            dimension_semantics=("parallel",), vmem_limit_bytes=VMEM_LIMIT),
        cost_estimate=cost,
    )(patches, w_mat, b2)
    return out.reshape(n, ho, wo, cout)


# --------------------- layers 2/3: 3x3 stride-2 tap decomposition --------------------- #

def _prep_pair_input(h, tr, nrt, woc):
    """ZeroPad2d(1) + alignment zeros, then fold padded column PAIRS into channels.
    h:(N,H,W,C) -> (N, 2*tr*nrt + 2, woc + 1, 2C) bf16.  The last reshape is free in XLA."""
    n, hh, ww, c = h.shape
    hp = 2 * tr * nrt + 2
    wg = woc + 1
    wp = 2 * wg
    hpad = jnp.pad(h, ((0, 0), (1, hp - hh - 1), (1, wp - ww - 1), (0, 0)))
    return hpad.reshape(n, hp, wg, 2 * c)


def _prep_w3x3(weight, bias):
    """weight (Co,Ci,3,3) -> wa (3, 2Ci, Co) for taps kw=0,1 and wb (3, Ci, Co) for kw=2."""
    wt = jnp.transpose(weight, (2, 3, 1, 0))               # (kh, kw, Ci, Co)
    wa = jnp.concatenate([wt[:, 0], wt[:, 1]], axis=1)     # rows 0:C -> kw=0, rows C:2C -> kw=1
    wb = wt[:, 2]                                          # kw=2
    return (wa.astype(jnp.bfloat16), wb.astype(jnp.bfloat16),
            bias.astype(jnp.float32).reshape(1, -1))


def _tap_matmul_acc(xm_ref, xh_ref, wa_ref, wb_ref, *, tr, woc, cin):
    """Accumulate the 9-tap 3x3 stride-2 conv for one (tr output rows, woc cols) tile.
    xm:(2*tr, wg, 2C) rows [2*r*tr, 2*r*tr + 2*tr); xh:(1, wg, 2C) halo row 2*tr*(r+1)."""
    c2 = 2 * cin
    co = wa_ref.shape[2]
    wg = xm_ref.shape[1]

    xm = xm_ref[...]                              # (2*tr, wg, 2C) bf16
    xp = xm.reshape(tr, 2, wg, c2)                # leading-dim split: free
    even = xp[:, 0]                               # padded rows 2*t     (kh = 0)
    odd = xp[:, 1]                                # padded rows 2*t + 1 (kh = 1)
    halo = xh_ref[...]                            # padded row  2*tr
    if tr > 1:
        even_n = jnp.concatenate([even[1:], halo], axis=0)   # padded rows 2*t + 2 (kh = 2)
    else:
        even_n = halo

    acc = jnp.zeros((tr * woc, co), jnp.float32)
    for kh, rows in enumerate((even, odd, even_n)):
        a = rows[:, 0:woc, :].reshape(tr * woc, c2)            # cols 2*ow, 2*ow+1 (kw = 0, 1)
        b = rows[:, 1:woc + 1, 0:cin].reshape(tr * woc, cin)   # col  2*ow + 2     (kw = 2)
        acc = acc + jnp.dot(a, wa_ref[kh], preferred_element_type=jnp.float32)
        acc = acc + jnp.dot(b, wb_ref[kh], preferred_element_type=jnp.float32)
    return acc


def _conv3x3s2_relu_kernel(xm_ref, xh_ref, wa_ref, wb_ref, b_ref, o_ref, *, tr, woc, cin):
    acc = _tap_matmul_acc(xm_ref, xh_ref, wa_ref, wb_ref, tr=tr, woc=woc, cin=cin)
    y = jnp.maximum(acc + b_ref[...], 0.0)
    o_ref[...] = y.reshape(tr, woc, o_ref.shape[-1]).astype(o_ref.dtype)


def _conv3x3s2_relu_mean_kernel(xm_ref, xh_ref, wa_ref, wb_ref, b_ref, o_ref, *,
                                tr, woc, cin, ho, wo):
    """Fused conv3 + spatial mean.  o_ref (1, Co) f32 is the resident accumulator."""
    r = pl.program_id(1)

    @pl.when(r == 0)
    def _init():
        o_ref[...] = jnp.zeros_like(o_ref)

    acc = _tap_matmul_acc(xm_ref, xh_ref, wa_ref, wb_ref, tr=tr, woc=woc, cin=cin)
    co = o_ref.shape[-1]
    y = jnp.maximum(acc + b_ref[...], 0.0).reshape(tr, woc, co)
    # Mask positions outside the true (ho, wo) extent.  (A constant ReLU(bias)
    # correction would only be exact when those windows are all-zero, which fails
    # for even-sized inputs; layer 3 is the smallest layer so the mask is cheap.)
    row = lax.broadcasted_iota(jnp.int32, (tr, woc, 1), 0) + r * tr
    col = lax.broadcasted_iota(jnp.int32, (tr, woc, 1), 1)
    y = jnp.where((row < ho) & (col < wo), y, 0.0)
    o_ref[...] += jnp.sum(y, axis=(0, 1)).reshape(1, co)

    @pl.when(r == pl.num_programs(1) - 1)
    def _fin():
        o_ref[...] = o_ref[...] * (1.0 / (ho * wo))


def _conv3x3_geom(hh, ww, tr_req):
    ho = (hh - 1) // 2 + 1
    wo = (ww - 1) // 2 + 1
    tr = max(2, min(tr_req, _round_up(ho, 2)))
    nrt = _cdiv(ho, tr)
    woc = _round_up(wo, 16)          # 16-aligned so the in-kernel row/col merge is a layout no-op
    return ho, wo, tr, nrt, woc


def _conv3x3_specs(tr, woc, cin, cout):
    c2 = 2 * cin
    wg = woc + 1
    return [
        # main rows [2*tr*r, 2*tr*(r+1)) of the pair-grouped padded input
        pl.BlockSpec((None, 2 * tr, wg, c2), lambda b, r: (b, r, 0, 0)),
        # 1-row halo (row 2*tr*(r+1)) supplied by a second spec on the SAME array
        pl.BlockSpec((None, 1, wg, c2), lambda b, r: (b, 2 * tr * (r + 1), 0, 0)),
        pl.BlockSpec((3, c2, cout), lambda b, r: (0, 0, 0)),     # resident weights (kw=0,1)
        pl.BlockSpec((3, cin, cout), lambda b, r: (0, 0, 0)),    # resident weights (kw=2)
        pl.BlockSpec((1, cout), lambda b, r: (0, 0)),            # resident bias
    ]


def conv3x3s2_relu(h, weight, bias, *, tr):
    """ReLU(Conv2d(ZeroPad2d(1)(h), 3x3, stride 2)) without im2col -> (N, Ho, Wo, Cout) bf16."""
    n, hh, ww, cin = h.shape
    cout = weight.shape[0]
    ho, wo, tr_e, nrt, woc = _conv3x3_geom(hh, ww, tr)
    xg = _prep_pair_input(h, tr_e, nrt, woc)
    wa, wb, b2 = _prep_w3x3(weight, bias)
    kernel = functools.partial(_conv3x3s2_relu_kernel, tr=tr_e, woc=woc, cin=cin)
    cost = pl.CostEstimate(
        flops=int(2 * n * nrt * tr_e * woc * 9 * cin * cout), transcendentals=0,
        bytes_accessed=int(xg.size * 2 + wa.size * 2 + wb.size * 2 + b2.size * 4
                           + n * nrt * tr_e * woc * cout * 2))
    out = pl.pallas_call(
        kernel,
        out_shape=jax.ShapeDtypeStruct((n, tr_e * nrt, woc, cout), jnp.bfloat16),
        grid=(n, nrt),
        in_specs=_conv3x3_specs(tr_e, woc, cin, cout),
        out_specs=pl.BlockSpec((None, tr_e, woc, cout), lambda b, r: (b, r, 0, 0)),
        compiler_params=pltpu.CompilerParams(
            dimension_semantics=("parallel", "parallel"),
            vmem_limit_bytes=VMEM_LIMIT),
        cost_estimate=cost,
    )(xg, xg, wa, wb, b2)
    # Lazy slice of the alignment rows/cols; it fuses into the next layer's pad.
    return out[:, :ho, :wo, :]


def conv3x3s2_relu_mean(h, weight, bias, *, tr):
    """Fused ReLU(Conv2d(ZeroPad2d(1)(h), 3x3, stride 2)) + mean over (H, W) -> (N, Cout) f32."""
    n, hh, ww, cin = h.shape
    cout = weight.shape[0]
    ho, wo, tr_e, nrt, woc = _conv3x3_geom(hh, ww, tr)
    xg = _prep_pair_input(h, tr_e, nrt, woc)
    wa, wb, b2 = _prep_w3x3(weight, bias)
    kernel = functools.partial(_conv3x3s2_relu_mean_kernel,
                               tr=tr_e, woc=woc, cin=cin, ho=ho, wo=wo)
    cost = pl.CostEstimate(
        flops=int(2 * n * nrt * tr_e * woc * 9 * cin * cout), transcendentals=0,
        bytes_accessed=int(xg.size * 2 + wa.size * 2 + wb.size * 2 + b2.size * 4 + n * cout * 4))
    out = pl.pallas_call(
        kernel,
        out_shape=jax.ShapeDtypeStruct((n, 1, cout), jnp.float32),
        grid=(n, nrt),
        in_specs=_conv3x3_specs(tr_e, woc, cin, cout),
        out_specs=pl.BlockSpec((None, 1, cout), lambda b, r: (b, 0, 0)),
        compiler_params=pltpu.CompilerParams(
            dimension_semantics=("parallel", "arbitrary"),
            vmem_limit_bytes=VMEM_LIMIT),
        cost_estimate=cost,
    )(xg, xg, wa, wb, b2)
    return out.reshape(n, cout)


# ------------------------------------ forward ------------------------------------ #

def f_ext_forward(x_nchw, params, *, tm=1024, tr=16):
    """F_ext.forward.  x_nchw: (N, in_nc, H, W) f32 -> (N, nf) f32."""
    x = jnp.transpose(x_nchw, (0, 2, 3, 1)).astype(jnp.bfloat16)   # NCHW -> NHWC, bf16
    h1 = conv7x7s2_relu(x, params["w1"], params["b1"], tm=tm)
    h2 = conv3x3s2_relu(h1, params["w2"], params["b2"], tr=tr)
    return conv3x3s2_relu_mean(h2, params["w3"], params["b3"], tr=tr)


# -------------------------------- pure-XLA references ------------------------------ #

def _conv_ref(x_nhwc, weight, bias, stride, pad):
    x_p = jnp.pad(x_nhwc, ((0, 0), (pad, pad), (pad, pad), (0, 0)))
    w_hwio = jnp.transpose(weight, (2, 3, 1, 0)).astype(x_p.dtype)
    y = lax.conv_general_dilated(
        x_p, w_hwio, window_strides=(stride, stride), padding="VALID",
        dimension_numbers=("NHWC", "HWIO", "NHWC"),
        preferred_element_type=jnp.float32)
    return jnp.maximum(y + bias[None, None, None, :].astype(jnp.float32), 0.0)


def f_ext_reference(x_nchw, params, *, dtype=jnp.float32):
    """Reference; dtype=bf16 mirrors the kernel's precision regime (bf16 operands,
    f32 accumulation/epilogue)."""
    x = jnp.transpose(x_nchw, (0, 2, 3, 1)).astype(dtype)
    h1 = _conv_ref(x, params["w1"], params["b1"], 2, 1).astype(dtype)
    h2 = _conv_ref(h1, params["w2"], params["b2"], 2, 1).astype(dtype)
    h3 = _conv_ref(h2, params["w3"], params["b3"], 2, 1)            # f32
    return jnp.mean(h3, axis=(1, 2))


# -------------------------------------- main --------------------------------------- #

if __name__ == "__main__":
    in_nc, nf = 3, 64          # module defaults
    n, h, w = 2, 32, 32        # small spatial size

    key = jax.random.PRNGKey(0)
    kx, k1, k2, k3, kb1, kb2, kb3 = jax.random.split(key, 7)
    x = jax.random.normal(kx, (n, in_nc, h, w), dtype=jnp.float32)
    params = {
        "w1": 0.1 * jax.random.normal(k1, (nf, in_nc, 7, 7), dtype=jnp.float32),
        "b1": 0.1 * jax.random.normal(kb1, (nf,), dtype=jnp.float32),
        "w2": 0.1 * jax.random.normal(k2, (nf, nf, 3, 3), dtype=jnp.float32),
        "b2": 0.1 * jax.random.normal(kb2, (nf,), dtype=jnp.float32),
        "w3": 0.1 * jax.random.normal(k3, (nf, nf, 3, 3), dtype=jnp.float32),
        "b3": 0.1 * jax.random.normal(kb3, (nf,), dtype=jnp.float32),
    }

    # Small tiles so the tiny test shapes still exercise multi-tile grids, the
    # ragged conv1 edge tile, the halo BlockSpec across row tiles and multi-step
    # mean accumulation.  Production defaults are tm=1024, tr=16.
    fwd = jax.jit(functools.partial(f_ext_forward, tm=128, tr=2))
    out = jax.block_until_ready(fwd(x, params))
    assert out.shape == (n, nf), out.shape

    # Check vs an XLA reference in the SAME precision regime (bf16 operands, f32 acc).
    ref_bf16 = jax.block_until_ready(
        jax.jit(functools.partial(f_ext_reference, dtype=jnp.bfloat16))(x, params))
    err_bf16 = float(jnp.max(jnp.abs(out - ref_bf16)))
    assert jnp.allclose(out, ref_bf16, rtol=2e-2, atol=2e-2), err_bf16

    # Loose check vs the pure-f32 reference bounds total bf16 drift end-to-end.
    ref_f32 = jax.block_until_ready(jax.jit(f_ext_reference)(x, params))
    err_f32 = float(jnp.max(jnp.abs(out - ref_f32)))
    assert jnp.allclose(out, ref_f32, rtol=2e-1, atol=2e-1), err_f32

    print("KERNEL_OK")
</pallas_src>

<mosaic_0001>
module attributes {stable_mosaic.version = 11 : i64} {
  func.func @_matmul_bias_relu_kernel(%arg0: i32, %arg1: memref<128x160xbf16, #tpu.memory_space<vmem>>, %arg2: memref<160x64xbf16, #tpu.memory_space<vmem>>, %arg3: memref<1x64xf32, #tpu.memory_space<vmem>>, %arg4: memref<128x64xbf16, #tpu.memory_space<vmem>>) attributes {dimension_semantics = [#tpu.dimension_semantics<parallel>], iteration_bounds = array<i64: 4>, scalar_prefetch = 0 : i64, scratch_operands = 0 : i64, tpu.core_type = #tpu.core_type<tc>, window_params = [{transform_indices = @transform_0, window_bounds = array<i64: 128, 160>}, {pipeline_mode = #tpu.pipeline_mode<synchronous>, transform_indices = @transform_1, window_bounds = array<i64: 160, 64>}, {pipeline_mode = #tpu.pipeline_mode<synchronous>, transform_indices = @transform_2, window_bounds = array<i64: 1, 64>}, {transform_indices = @transform_3, window_bounds = array<i64: 128, 64>}]} {
    %c0 = arith.constant 0 : index
    %c0_0 = arith.constant 0 : index
    %0 = vector.load %arg1[%c0, %c0_0] : memref<128x160xbf16, #tpu.memory_space<vmem>>, vector<128x160xbf16>
    %c0_1 = arith.constant 0 : index
    %c0_2 = arith.constant 0 : index
    %1 = vector.load %arg2[%c0_1, %c0_2] : memref<160x64xbf16, #tpu.memory_space<vmem>>, vector<160x64xbf16>
    %cst = arith.constant dense<0.000000e+00> : vector<128x64xf32>
    %2 = tpu.matmul %0, %1, %cst {dimension_numbers = #tpu.dot_dimension_numbers<[1], [0], [0], [1], [0, 0, 1, 1], [], []>} : vector<128x160xbf16>, vector<160x64xbf16>, vector<128x64xf32> -> vector<128x64xf32>
    %c0_3 = arith.constant 0 : index
    %c0_4 = arith.constant 0 : index
    %3 = vector.load %arg3[%c0_3, %c0_4] : memref<1x64xf32, #tpu.memory_space<vmem>>, vector<1x64xf32>
    %4 = vector.broadcast %3 : vector<1x64xf32> to vector<128x64xf32>
    %5 = arith.addf %2, %4 : vector<128x64xf32>
    %cst_5 = arith.constant 0.000000e+00 : f32
    %6 = vector.broadcast %cst_5 : f32 to vector<128x64xf32>
    %7 = arith.maximumf %5, %6 : vector<128x64xf32>
    %8 = arith.truncf %7 : vector<128x64xf32> to vector<128x64xbf16>
    %c0_6 = arith.constant 0 : index
    %c0_7 = arith.constant 0 : index
    %9 = vector.load %arg4[%c0_6, %c0_7] : memref<128x64xbf16, #tpu.memory_space<vmem>>, vector<128x64xbf16>
    tpu.vector_store %arg4[%c0_6, %c0_7], %8 {strides = array<i32>} : memref<128x64xbf16, #tpu.memory_space<vmem>>, vector<128x64xbf16>,
    return
  }
  func.func @transform_0(%arg0: i32) -> (i32, i32) {
    %c0_i32 = arith.constant 0 : i32
    %c0_i32_0 = arith.constant 0 : i32
    return %arg0, %c0_i32 : i32, i32
  }
  func.func @transform_1(%arg0: i32) -> (i32, i32) {
    %c0_i32 = arith.constant 0 : i32
    %c0_i32_0 = arith.constant 0 : i32
    %c0_i32_1 = arith.constant 0 : i32
    return %c0_i32, %c0_i32_0 : i32, i32
  }
  func.func @transform_2(%arg0: i32) -> (i32, i32) {
    %c0_i32 = arith.constant 0 : i32
    %c0_i32_0 = arith.constant 0 : i32
    %c0_i32_1 = arith.constant 0 : i32
    return %c0_i32, %c0_i32_0 : i32, i32
  }
  func.func @transform_3(%arg0: i32) -> (i32, i32) {
    %c0_i32 = arith.constant 0 : i32
    %c0_i32_0 = arith.constant 0 : i32
    return %arg0, %c0_i32 : i32, i32
  }
}

module attributes {stable_mosaic.version = 11 : i64} {
  func.func @_conv3x3s2_relu_kernel(%arg0: i32, %arg1: i32, %arg2: memref<1x4x17x128xbf16, #tpu.memory_space<vmem>>, %arg3: memref<1x1x17x128xbf16, #tpu.memory_space<vmem>>, %arg4: memref<3x128x64xbf16, #tpu.memory_space<vmem>>, %arg5: memref<3x64x64xbf16, #tpu.memory_space<vmem>>, %arg6: memref<1x64xf32, #tpu.memory_space<vmem>>, %arg7: memref<1x2x16x64xbf16, #tpu.memory_space<vmem>>) attributes {dimension_semantics = [#tpu.dimension_semantics<parallel>, #tpu.dimension_semantics<parallel>], iteration_bounds = array<i64: 2, 4>, scalar_prefetch = 0 : i64, scratch_operands = 0 : i64, tpu.core_type = #tpu.core_type<tc>, window_params = [{transform_indices = @transform_0, window_bounds = array<i64: 1, 4, 17, 128>}, {transform_indices = @transform_1, window_bounds = array<i64: 1, 1, 17, 128>}, {pipeline_mode = #tpu.pipeline_mode<synchronous>, transform_indices = @transform_2, window_bounds = array<i64: 3, 128, 64>}, {pipeline_mode = #tpu.pipeline_mode<synchronous>, transform_indices = @transform_3, window_bounds = array<i64: 3, 64, 64>}, {pipeline_mode = #tpu.pipeline_mode<synchronous>, transform_indices = @transform_4, window_bounds = array<i64: 1, 64>}, {transform_indices = @transform_5, window_bounds = array<i64: 1, 2, 16, 64>}]} {
    %c0 = arith.constant 0 : index
    %c0_0 = arith.constant 0 : index
    %c0_1 = arith.constant 0 : index
    %c0_2 = arith.constant 0 : index
    %0 = vector.load %arg2[%c0, %c0_0, %c0_1, %c0_2] : memref<1x4x17x128xbf16, #tpu.memory_space<vmem>>, vector<1x4x17x128xbf16>
    %1 = vector.shape_cast %0 : vector<1x4x17x128xbf16> to vector<4x17x128xbf16>
    %2 = vector.shape_cast %1 : vector<4x17x128xbf16> to vector<2x2x17x128xbf16>
    %3 = vector.extract_strided_slice %2 {offsets = [0, 0, 0, 0], sizes = [2, 1, 17, 128], strides = [1, 1, 1, 1]} : vector<2x2x17x128xbf16> to vector<2x1x17x128xbf16>
    %4 = vector.shape_cast %3 : vector<2x1x17x128xbf16> to vector<2x17x128xbf16>
    %5 = vector.extract_strided_slice %2 {offsets = [0, 1, 0, 0], sizes = [2, 1, 17, 128], strides = [1, 1, 1, 1]} : vector<2x2x17x128xbf16> to vector<2x1x17x128xbf16>
    %6 = vector.shape_cast %5 : vector<2x1x17x128xbf16> to vector<2x17x128xbf16>
    %c0_3 = arith.constant 0 : index
    %c0_4 = arith.constant 0 : index
    %c0_5 = arith.constant 0 : index
    %c0_6 = arith.constant 0 : index
    %7 = vector.load %arg3[%c0_3, %c0_4, %c0_5, %c0_6] : memref<1x1x17x128xbf16, #tpu.memory_space<vmem>>, vector<1x1x17x128xbf16>
    %8 = vector.shape_cast %7 : vector<1x1x17x128xbf16> to vector<1x17x128xbf16>
    %9 = vector.extract_strided_slice %4 {offsets = [1, 0, 0], sizes = [1, 17, 128], strides = [1, 1, 1]} : vector<2x17x128xbf16> to vector<1x17x128xbf16>
    %10 = tpu.concatenate %9, %8 in 0 : vector<1x17x128xbf16>, vector<1x17x128xbf16> -> vector<2x17x128xbf16>
    %cst = arith.constant 0.000000e+00 : f32
    %11 = vector.broadcast %cst : f32 to vector<32x64xf32>
    %12 = vector.extract_strided_slice %4 {offsets = [0, 0, 0], sizes = [2, 16, 128], strides = [1, 1, 1]} : vector<2x17x128xbf16> to vector<2x16x128xbf16>
    %13 = vector.shape_cast %12 : vector<2x16x128xbf16> to vector<32x128xbf16>
    %14 = vector.extract_strided_slice %4 {offsets = [0, 1, 0], sizes = [2, 16, 64], strides = [1, 1, 1]} : vector<2x17x128xbf16> to vector<2x16x64xbf16>
    %15 = vector.shape_cast %14 : vector<2x16x64xbf16> to vector<32x64xbf16>
    %c0_7 = arith.constant 0 : index
    %c0_8 = arith.constant 0 : index
    %c0_9 = arith.constant 0 : index
    %16 = vector.load %arg4[%c0_7, %c0_8, %c0_9] : memref<3x128x64xbf16, #tpu.memory_space<vmem>>, vector<1x128x64xbf16>
    %17 = vector.shape_cast %16 : vector<1x128x64xbf16> to vector<128x64xbf16>
    %cst_10 = arith.constant dense<0.000000e+00> : vector<32x64xf32>
    %18 = tpu.matmul %13, %17, %cst_10 {dimension_numbers = #tpu.dot_dimension_numbers<[1], [0], [0], [1], [0, 0, 1, 1], [], []>} : vector<32x128xbf16>, vector<128x64xbf16>, vector<32x64xf32> -> vector<32x64xf32>
    %19 = arith.addf %11, %18 : vector<32x64xf32>
    %c0_11 = arith.constant 0 : index
    %c0_12 = arith.constant 0 : index
    %c0_13 = arith.constant 0 : index
    %20 = vector.load %arg5[%c0_11, %c0_12, %c0_13] : memref<3x64x64xbf16, #tpu.memory_space<vmem>>, vector<1x64x64xbf16>
    %21 = vector.shape_cast %20 : vector<1x64x64xbf16> to vector<64x64xbf16>
    %cst_14 = arith.constant dense<0.000000e+00> : vector<32x64xf32>
    %22 = tpu.matmul %15, %21, %cst_14 {dimension_numbers = #tpu.dot_dimension_numbers<[1], [0], [0], [1], [0, 0, 1, 1], [], []>} : vector<32x64xbf16>, vector<64x64xbf16>, vector<32x64xf32> -> vector<32x64xf32>
    %23 = arith.addf %19, %22 : vector<32x64xf32>
    %24 = vector.extract_strided_slice %6 {offsets = [0, 0, 0], sizes = [2, 16, 128], strides = [1, 1, 1]} : vector<2x17x128xbf16> to vector<2x16x128xbf16>
    %25 = vector.shape_cast %24 : vector<2x16x128xbf16> to vector<32x128xbf16>
    %26 = vector.extract_strided_slice %6 {offsets = [0, 1, 0], sizes = [2, 16, 64], strides = [1, 1, 1]} : vector<2x17x128xbf16> to vector<2x16x64xbf16>
    %27 = vector.shape_cast %26 : vector<2x16x64xbf16> to vector<32x64xbf16>
    %c1 = arith.constant 1 : index
    %c0_15 = arith.constant 0 : index
    %c0_16 = arith.constant 0 : index
    %28 = vector.load %arg4[%c1, %c0_15, %c0_16] : memref<3x128x64xbf16, #tpu.memory_space<vmem>>, vector<1x128x64xbf16>
    %29 = vector.shape_cast %28 : vector<1x128x64xbf16> to vector<128x64xbf16>
    %cst_17 = arith.constant dense<0.000000e+00> : vector<32x64xf32>
    %30 = tpu.matmul %25, %29, %cst_17 {dimension_numbers = #tpu.dot_dimension_numbers<[1], [0], [0], [1], [0, 0, 1, 1], [], []>} : vector<32x128xbf16>, vector<128x64xbf16>, vector<32x64xf32> -> vector<32x64xf32>
    %31 = arith.addf %23, %30 : vector<32x64xf32>
    %c1_18 = arith.constant 1 : index
    %c0_19 = arith.constant 0 : index
    %c0_20 = arith.constant 0 : index
    %32 = vector.load %arg5[%c1_18, %c0_19, %c0_20] : memref<3x64x64xbf16, #tpu.memory_space<vmem>>, vector<1x64x64xbf16>
    %33 = vector.shape_cast %32 : vector<1x64x64xbf16> to vector<64x64xbf16>
    %cst_21 = arith.constant dense<0.000000e+00> : vector<32x64xf32>
    %34 = tpu.matmul %27, %33, %cst_21 {dimension_numbers = #tpu.dot_dimension_numbers<[1], [0], [0], [1], [0, 0, 1, 1], [], []>} : vector<32x64xbf16>, vector<64x64xbf16>, vector<32x64xf32> -> vector<32x64xf32>
    %35 = arith.addf %31, %34 : vector<32x64xf32>
    %36 = vector.extract_strided_slice %10 {offsets = [0, 0, 0], sizes = [2, 16, 128], strides = [1, 1, 1]} : vector<2x17x128xbf16> to vector<2x16x128xbf16>
    %37 = vector.shape_cast %36 : vector<2x16x128xbf16> to vector<32x128xbf16>
    %38 = vector.extract_strided_slice %10 {offsets = [0, 1, 0], sizes = [2, 16, 64], strides = [1, 1, 1]} : vector<2x17x128xbf16> to vector<2x16x64xbf16>
    %39 = vector.shape_cast %38 : vector<2x16x64xbf16> to vector<32x64xbf16>
    %c2 = arith.constant 2 : index
    %c0_22 = arith.constant 0 : index
    %c0_23 = arith.constant 0 : index
    %40 = vector.load %arg4[%c2, %c0_22, %c0_23] : memref<3x128x64xbf16, #tpu.memory_space<vmem>>, vector<1x128x64xbf16>
    %41 = vector.shape_cast %40 : vector<1x128x64xbf16> to vector<128x64xbf16>
    %cst_24 = arith.constant dense<0.000000e+00> : vector<32x64xf32>
    %42 = tpu.matmul %37, %41, %cst_24 {dimension_numbers = #tpu.dot_dimension_numbers<[1], [0], [0], [1], [0, 0, 1, 1], [], []>} : vector<32x128xbf16>, vector<128x64xbf16>, vector<32x64xf32> -> vector<32x64xf32>
    %43 = arith.addf %35, %42 : vector<32x64xf32>
    %c2_25 = arith.constant 2 : index
    %c0_26 = arith.constant 0 : index
    %c0_27 = arith.constant 0 : index
    %44 = vector.load %arg5[%c2_25, %c0_26, %c0_27] : memref<3x64x64xbf16, #tpu.memory_space<vmem>>, vector<1x64x64xbf16>
    %45 = vector.shape_cast %44 : vector<1x64x64xbf16> to vector<64x64xbf16>
    %cst_28 = arith.constant dense<0.000000e+00> : vector<32x64xf32>
    %46 = tpu.matmul %39, %45, %cst_28 {dimension_numbers = #tpu.dot_dimension_numbers<[1], [0], [0], [1], [0, 0, 1, 1], [], []>} : vector<32x64xbf16>, vector<64x64xbf16>, vector<32x64xf32> -> vector<32x64xf32>
    %47 = arith.addf %43, %46 : vector<32x64xf32>
    %c0_29 = arith.constant 0 : index
    %c0_30 = arith.constant 0 : index
    %48 = vector.load %arg6[%c0_29, %c0_30] : memref<1x64xf32, #tpu.memory_space<vmem>>, vector<1x64xf32>
    %49 = vector.broadcast %48 : vector<1x64xf32> to vector<32x64xf32>
    %50 = arith.addf %47, %49 : vector<32x64xf32>
    %cst_31 = arith.constant 0.000000e+00 : f32
    %51 = vector.broadcast %cst_31 : f32 to vector<32x64xf32>
    %52 = arith.maximumf %50, %51 : vector<32x64xf32>
    %53 = vector.shape_cast %52 : vector<32x64xf32> to vector<2x16x64xf32>
    %54 = arith.truncf %53 : vector<2x16x64xf32> to vector<2x16x64xbf16>
    %c0_32 = arith.constant 0 : index
    %c0_33 = arith.constant 0 : index
    %c0_34 = arith.constant 0 : index
    %c0_35 = arith.constant 0 : index
    %55 = vector.load %arg7[%c0_32, %c0_33, %c0_34, %c0_35] : memref<1x2x16x64xbf16, #tpu.memory_space<vmem>>, vector<1x2x16x64xbf16>
    %56 = vector.shape_cast %55 : vector<1x2x16x64xbf16> to vector<2x16x64xbf16>
    %57 = vector.shape_cast %54 : vector<2x16x64xbf16> to vector<1x2x16x64xbf16>
    tpu.vector_store %arg7[%c0_32, %c0_33, %c0_34, %c0_35], %57 {strides = array<i32>} : memref<1x2x16x64xbf16, #tpu.memory_space<vmem>>, vector<1x2x16x64xbf16>,
    return
  }
  func.func @transform_0(%arg0: i32, %arg1: i32) -> (i32, i32, i32, i32) {
    %c0_i32 = arith.constant 0 : i32
    %c0_i32_0 = arith.constant 0 : i32
    %c0_i32_1 = arith.constant 0 : i32
    return %arg0, %arg1, %c0_i32, %c0_i32_0 : i32, i32, i32, i32
  }
  func.func @transform_1(%arg0: i32, %arg1: i32) -> (i32, i32, i32, i32) {
    %c1_i32 = arith.constant 1 : i32
    %0 = arith.addi %arg1, %c1_i32 : i32
    %c4_i32 = arith.constant 4 : i32
    %1 = arith.muli %c4_i32, %0 : i32
    %c0_i32 = arith.constant 0 : i32
    %c0_i32_0 = arith.constant 0 : i32
    %c0_i32_1 = arith.constant 0 : i32
    return %arg0, %1, %c0_i32, %c0_i32_0 : i32, i32, i32, i32
  }
  func.func @transform_2(%arg0: i32, %arg1: i32) -> (i32, i32, i32) {
    %c0_i32 = arith.constant 0 : i32
    %c0_i32_0 = arith.constant 0 : i32
    %c0_i32_1 = arith.constant 0 : i32
    %c0_i32_2 = arith.constant 0 : i32
    return %c0_i32, %c0_i32_0, %c0_i32_1 : i32, i32, i32
  }
  func.func @transform_3(%arg0: i32, %arg1: i32) -> (i32, i32, i32) {
    %c0_i32 = arith.constant 0 : i32
    %c0_i32_0 = arith.constant 0 : i32
    %c0_i32_1 = arith.constant 0 : i32
    %c0_i32_2 = arith.constant 0 : i32
    return %c0_i32, %c0_i32_0, %c0_i32_1 : i32, i32, i32
  }
  func.func @transform_4(%arg0: i32, %arg1: i32) -> (i32, i32) {
    %c0_i32 = arith.constant 0 : i32
    %c0_i32_0 = arith.constant 0 : i32
    %c0_i32_1 = arith.constant 0 : i32
    return %c0_i32, %c0_i32_0 : i32, i32
  }
  func.func @transform_5(%arg0: i32, %arg1: i32) -> (i32, i32, i32, i32) {
    %c0_i32 = arith.constant 0 : i32
    %c0_i32_0 = arith.constant 0 : i32
    %c0_i32_1 = arith.constant 0 : i32
    return %arg0, %arg1, %c0_i32, %c0_i32_0 : i32, i32, i32, i32
  }
}

module attributes {stable_mosaic.version = 11 : i64} {
  func.func @_conv3x3s2_relu_mean_kernel(%arg0: i32, %arg1: i32, %arg2: memref<1x4x17x128xbf16, #tpu.memory_space<vmem>>, %arg3: memref<1x1x17x128xbf16, #tpu.memory_space<vmem>>, %arg4: memref<3x128x64xbf16, #tpu.memory_space<vmem>>, %arg5: memref<3x64x64xbf16, #tpu.memory_space<vmem>>, %arg6: memref<1x64xf32, #tpu.memory_space<vmem>>, %arg7: memref<1x1x64xf32, #tpu.memory_space<vmem>>) attributes {dimension_semantics = [#tpu.dimension_semantics<parallel>, #tpu.dimension_semantics<arbitrary>], iteration_bounds = array<i64: 2, 2>, scalar_prefetch = 0 : i64, scratch_operands = 0 : i64, tpu.core_type = #tpu.core_type<tc>, window_params = [{transform_indices = @transform_0, window_bounds = array<i64: 1, 4, 17, 128>}, {transform_indices = @transform_1, window_bounds = array<i64: 1, 1, 17, 128>}, {pipeline_mode = #tpu.pipeline_mode<synchronous>, transform_indices = @transform_2, window_bounds = array<i64: 3, 128, 64>}, {pipeline_mode = #tpu.pipeline_mode<synchronous>, transform_indices = @transform_3, window_bounds = array<i64: 3, 64, 64>}, {pipeline_mode = #tpu.pipeline_mode<synchronous>, transform_indices = @transform_4, window_bounds = array<i64: 1, 64>}, {transform_indices = @transform_5, window_bounds = array<i64: 1, 1, 64>}]} {
    %c0_i32 = arith.constant 0 : i32
    %0 = arith.cmpi eq, %arg1, %c0_i32 : i32
    %1 = arith.extui %0 : i1 to i32
    %c0_i32_0 = arith.constant 0 : i32
    %2 = arith.cmpi ne, %1, %c0_i32_0 : i32
    scf.if %2 {
      %cst_43 = arith.constant 0.000000e+00 : f32
      %82 = vector.broadcast %cst_43 : f32 to vector<1x64xf32>
      %c0_44 = arith.constant 0 : index
      %c0_45 = arith.constant 0 : index
      %c0_46 = arith.constant 0 : index
      %83 = vector.load %arg7[%c0_44, %c0_45, %c0_46] : memref<1x1x64xf32, #tpu.memory_space<vmem>>, vector<1x1x64xf32>
      %84 = vector.shape_cast %83 : vector<1x1x64xf32> to vector<1x64xf32>
      %85 = vector.shape_cast %82 : vector<1x64xf32> to vector<1x1x64xf32>
      tpu.vector_store %arg7[%c0_44, %c0_45, %c0_46], %85 {strides = array<i32>} : memref<1x1x64xf32, #tpu.memory_space<vmem>>, vector<1x1x64xf32>,
    } else {
    }
    %c0 = arith.constant 0 : index
    %c0_1 = arith.constant 0 : index
    %c0_2 = arith.constant 0 : index
    %c0_3 = arith.constant 0 : index
    %3 = vector.load %arg2[%c0, %c0_1, %c0_2, %c0_3] : memref<1x4x17x128xbf16, #tpu.memory_space<vmem>>, vector<1x4x17x128xbf16>
    %4 = vector.shape_cast %3 : vector<1x4x17x128xbf16> to vector<4x17x128xbf16>
    %5 = vector.shape_cast %4 : vector<4x17x128xbf16> to vector<2x2x17x128xbf16>
    %6 = vector.extract_strided_slice %5 {offsets = [0, 0, 0, 0], sizes = [2, 1, 17, 128], strides = [1, 1, 1, 1]} : vector<2x2x17x128xbf16> to vector<2x1x17x128xbf16>
    %7 = vector.shape_cast %6 : vector<2x1x17x128xbf16> to vector<2x17x128xbf16>
    %8 = vector.extract_strided_slice %5 {offsets = [0, 1, 0, 0], sizes = [2, 1, 17, 128], strides = [1, 1, 1, 1]} : vector<2x2x17x128xbf16> to vector<2x1x17x128xbf16>
    %9 = vector.shape_cast %8 : vector<2x1x17x128xbf16> to vector<2x17x128xbf16>
    %c0_4 = arith.constant 0 : index
    %c0_5 = arith.constant 0 : index
    %c0_6 = arith.constant 0 : index
    %c0_7 = arith.constant 0 : index
    %10 = vector.load %arg3[%c0_4, %c0_5, %c0_6, %c0_7] : memref<1x1x17x128xbf16, #tpu.memory_space<vmem>>, vector<1x1x17x128xbf16>
    %11 = vector.shape_cast %10 : vector<1x1x17x128xbf16> to vector<1x17x128xbf16>
    %12 = vector.extract_strided_slice %7 {offsets = [1, 0, 0], sizes = [1, 17, 128], strides = [1, 1, 1]} : vector<2x17x128xbf16> to vector<1x17x128xbf16>
    %13 = tpu.concatenate %12, %11 in 0 : vector<1x17x128xbf16>, vector<1x17x128xbf16> -> vector<2x17x128xbf16>
    %cst = arith.constant 0.000000e+00 : f32
    %14 = vector.broadcast %cst : f32 to vector<32x64xf32>
    %15 = vector.extract_strided_slice %7 {offsets = [0, 0, 0], sizes = [2, 16, 128], strides = [1, 1, 1]} : vector<2x17x128xbf16> to vector<2x16x128xbf16>
    %16 = vector.shape_cast %15 : vector<2x16x128xbf16> to vector<32x128xbf16>
    %17 = vector.extract_strided_slice %7 {offsets = [0, 1, 0], sizes = [2, 16, 64], strides = [1, 1, 1]} : vector<2x17x128xbf16> to vector<2x16x64xbf16>
    %18 = vector.shape_cast %17 : vector<2x16x64xbf16> to vector<32x64xbf16>
    %c0_8 = arith.constant 0 : index
    %c0_9 = arith.constant 0 : index
    %c0_10 = arith.constant 0 : index
    %19 = vector.load %arg4[%c0_8, %c0_9, %c0_10] : memref<3x128x64xbf16, #tpu.memory_space<vmem>>, vector<1x128x64xbf16>
    %20 = vector.shape_cast %19 : vector<1x128x64xbf16> to vector<128x64xbf16>
    %cst_11 = arith.constant dense<0.000000e+00> : vector<32x64xf32>
    %21 = tpu.matmul %16, %20, %cst_11 {dimension_numbers = #tpu.dot_dimension_numbers<[1], [0], [0], [1], [0, 0, 1, 1], [], []>} : vector<32x128xbf16>, vector<128x64xbf16>, vector<32x64xf32> -> vector<32x64xf32>
    %22 = arith.addf %14, %21 : vector<32x64xf32>
    %c0_12 = arith.constant 0 : index
    %c0_13 = arith.constant 0 : index
    %c0_14 = arith.constant 0 : index
    %23 = vector.load %arg5[%c0_12, %c0_13, %c0_14] : memref<3x64x64xbf16, #tpu.memory_space<vmem>>, vector<1x64x64xbf16>
    %24 = vector.shape_cast %23 : vector<1x64x64xbf16> to vector<64x64xbf16>
    %cst_15 = arith.constant dense<0.000000e+00> : vector<32x64xf32>
    %25 = tpu.matmul %18, %24, %cst_15 {dimension_numbers = #tpu.dot_dimension_numbers<[1], [0], [0], [1], [0, 0, 1, 1], [], []>} : vector<32x64xbf16>, vector<64x64xbf16>, vector<32x64xf32> -> vector<32x64xf32>
    %26 = arith.addf %22, %25 : vector<32x64xf32>
    %27 = vector.extract_strided_slice %9 {offsets = [0, 0, 0], sizes = [2, 16, 128], strides = [1, 1, 1]} : vector<2x17x128xbf16> to vector<2x16x128xbf16>
    %28 = vector.shape_cast %27 : vector<2x16x128xbf16> to vector<32x128xbf16>
    %29 = vector.extract_strided_slice %9 {offsets = [0, 1, 0], sizes = [2, 16, 64], strides = [1, 1, 1]} : vector<2x17x128xbf16> to vector<2x16x64xbf16>
    %30 = vector.shape_cast %29 : vector<2x16x64xbf16> to vector<32x64xbf16>
    %c1 = arith.constant 1 : index
    %c0_16 = arith.constant 0 : index
    %c0_17 = arith.constant 0 : index
    %31 = vector.load %arg4[%c1, %c0_16, %c0_17] : memref<3x128x64xbf16, #tpu.memory_space<vmem>>, vector<1x128x64xbf16>
    %32 = vector.shape_cast %31 : vector<1x128x64xbf16> to vector<128x64xbf16>
    %cst_18 = arith.constant dense<0.000000e+00> : vector<32x64xf32>
    %33 = tpu.matmul %28, %32, %cst_18 {dimension_numbers = #tpu.dot_dimension_numbers<[1], [0], [0], [1], [0, 0, 1, 1], [], []>} : vector<32x128xbf16>, vector<128x64xbf16>, vector<32x64xf32> -> vector<32x64xf32>
    %34 = arith.addf %26, %33 : vector<32x64xf32>
    %c1_19 = arith.constant 1 : index
    %c0_20 = arith.constant 0 : index
    %c0_21 = arith.constant 0 : index
    %35 = vector.load %arg5[%c1_19, %c0_20, %c0_21] : memref<3x64x64xbf16, #tpu.memory_space<vmem>>, vector<1x64x64xbf16>
    %36 = vector.shape_cast %35 : vector<1x64x64xbf16> to vector<64x64xbf16>
    %cst_22 = arith.constant dense<0.000000e+00> : vector<32x64xf32>
    %37 = tpu.matmul %30, %36, %cst_22 {dimension_numbers = #tpu.dot_dimension_numbers<[1], [0], [0], [1], [0, 0, 1, 1], [], []>} : vector<32x64xbf16>, vector<64x64xbf16>, vector<32x64xf32> -> vector<32x64xf32>
    %38 = arith.addf %34, %37 : vector<32x64xf32>
    %39 = vector.extract_strided_slice %13 {offsets = [0, 0, 0], sizes = [2, 16, 128], strides = [1, 1, 1]} : vector<2x17x128xbf16> to vector<2x16x128xbf16>
    %40 = vector.shape_cast %39 : vector<2x16x128xbf16> to vector<32x128xbf16>
    %41 = vector.extract_strided_slice %13 {offsets = [0, 1, 0], sizes = [2, 16, 64], strides = [1, 1, 1]} : vector<2x17x128xbf16> to vector<2x16x64xbf16>
    %42 = vector.shape_cast %41 : vector<2x16x64xbf16> to vector<32x64xbf16>
    %c2 = arith.constant 2 : index
    %c0_23 = arith.constant 0 : index
    %c0_24 = arith.constant 0 : index
    %43 = vector.load %arg4[%c2, %c0_23, %c0_24] : memref<3x128x64xbf16, #tpu.memory_space<vmem>>, vector<1x128x64xbf16>
    %44 = vector.shape_cast %43 : vector<1x128x64xbf16> to vector<128x64xbf16>
    %cst_25 = arith.constant dense<0.000000e+00> : vector<32x64xf32>
    %45 = tpu.matmul %40, %44, %cst_25 {dimension_numbers = #tpu.dot_dimension_numbers<[1], [0], [0], [1], [0, 0, 1, 1], [], []>} : vector<32x128xbf16>, vector<128x64xbf16>, vector<32x64xf32> -> vector<32x64xf32>
    %46 = arith.addf %38, %45 : vector<32x64xf32>
    %c2_26 = arith.constant 2 : index
    %c0_27 = arith.constant 0 : index
    %c0_28 = arith.constant 0 : index
    %47 = vector.load %arg5[%c2_26, %c0_27, %c0_28] : memref<3x64x64xbf16, #tpu.memory_space<vmem>>, vector<1x64x64xbf16>
    %48 = vector.shape_cast %47 : vector<1x64x64xbf16> to vector<64x64xbf16>
    %cst_29 = arith.constant dense<0.000000e+00> : vector<32x64xf32>
    %49 = tpu.matmul %42, %48, %cst_29 {dimension_numbers = #tpu.dot_dimension_numbers<[1], [0], [0], [1], [0, 0, 1, 1], [], []>} : vector<32x64xbf16>, vector<64x64xbf16>, vector<32x64xf32> -> vector<32x64xf32>
    %50 = arith.addf %46, %49 : vector<32x64xf32>
    %c0_30 = arith.constant 0 : index
    %c0_31 = arith.constant 0 : index
    %51 = vector.load %arg6[%c0_30, %c0_31] : memref<1x64xf32, #tpu.memory_space<vmem>>, vector<1x64xf32>
    %52 = vector.broadcast %51 : vector<1x64xf32> to vector<32x64xf32>
    %53 = arith.addf %50, %52 : vector<32x64xf32>
    %cst_32 = arith.constant 0.000000e+00 : f32
    %54 = vector.broadcast %cst_32 : f32 to vector<32x64xf32>
    %55 = arith.maximumf %53, %54 : vector<32x64xf32>
    %56 = vector.shape_cast %55 : vector<32x64xf32> to vector<2x16x64xf32>
    %57 = tpu.iota {dimensions = array<i32: 0>} : vector<2x16x1xi32>
    %c2_i32 = arith.constant 2 : i32
    %58 = arith.muli %arg1, %c2_i32 : i32
    %59 = vector.broadcast %58 : i32 to vector<2x16x1xi32>
    %60 = arith.addi %57, %59 : vector<2x16x1xi32>
    %61 = tpu.iota {dimensions = array<i32: 1>} : vector<2x16x1xi32>
    %c4_i32 = arith.constant 4 : i32
    %62 = vector.broadcast %c4_i32 : i32 to vector<2x16x1xi32>
    %63 = arith.cmpi slt, %60, %62 : vector<2x16x1xi32>
    %c4_i32_33 = arith.constant 4 : i32
    %64 = vector.broadcast %c4_i32_33 : i32 to vector<2x16x1xi32>
    %65 = arith.cmpi slt, %61, %64 : vector<2x16x1xi32>
    %66 = arith.andi %63, %65 : vector<2x16x1xi1>
    %cst_34 = arith.constant 0.000000e+00 : f32
    %67 = vector.shape_cast %66 : vector<2x16x1xi1> to vector<2x16x1xi1>
    %68 = vector.broadcast %67 : vector<2x16x1xi1> to vector<2x16x64xi1>
    %69 = vector.broadcast %cst_34 : f32 to vector<2x16x64xf32>
    %70 = arith.select %68, %56, %69 : vector<2x16x64xi1>, vector<2x16x64xf32>
    %c0_35 = arith.constant 0 : index
    %c0_36 = arith.constant 0 : index
    %c0_37 = arith.constant 0 : index
    %71 = vector.load %arg7[%c0_35, %c0_36, %c0_37] : memref<1x1x64xf32, #tpu.memory_space<vmem>>, vector<1x1x64xf32>
    %72 = vector.shape_cast %71 : vector<1x1x64xf32> to vector<1x64xf32>
    %cst_38 = arith.constant dense<0.000000e+00> : vector<64xf32>
    %73 = vector.multi_reduction <add>, %70, %cst_38 [0, 1] : vector<2x16x64xf32> to vector<64xf32>
    %74 = vector.shape_cast %73 : vector<64xf32> to vector<1x64xf32>
    %75 = arith.addf %72, %74 : vector<1x64xf32>
    %c0_39 = arith.constant 0 : index
    %c0_40 = arith.constant 0 : index
    %c0_41 = arith.constant 0 : index
    %76 = vector.load %arg7[%c0_39, %c0_40, %c0_41] : memref<1x1x64xf32, #tpu.memory_space<vmem>>, vector<1x1x64xf32>
    %77 = vector.shape_cast %76 : vector<1x1x64xf32> to vector<1x64xf32>
    %78 = vector.shape_cast %75 : vector<1x64xf32> to vector<1x1x64xf32>
    tpu.vector_store %arg7[%c0_39, %c0_40, %c0_41], %78 {strides = array<i32>} : memref<1x1x64xf32, #tpu.memory_space<vmem>>, vector<1x1x64xf32>,
    %c1_i32 = arith.constant 1 : i32
    %79 = arith.cmpi eq, %arg1, %c1_i32 : i32
    %80 = arith.extui %79 : i1 to i32
    %c0_i32_42 = arith.constant 0 : i32
    %81 = arith.cmpi ne, %80, %c0_i32_42 : i32
    scf.if %81 {
      %c0_43 = arith.constant 0 : index
      %c0_44 = arith.constant 0 : index
      %c0_45 = arith.constant 0 : index
      %82 = vector.load %arg7[%c0_43, %c0_44, %c0_45] : memref<1x1x64xf32, #tpu.memory_space<vmem>>, vector<1x1x64xf32>
      %83 = vector.shape_cast %82 : vector<1x1x64xf32> to vector<1x64xf32>
      %cst_46 = arith.constant 6.250000e-02 : f32
      %84 = vector.broadcast %cst_46 : f32 to vector<1x64xf32>
      %85 = arith.mulf %83, %84 : vector<1x64xf32>
      %c0_47 = arith.constant 0 : index
      %c0_48 = arith.constant 0 : index
      %c0_49 = arith.constant 0 : index
      %86 = vector.load %arg7[%c0_47, %c0_48, %c0_49] : memref<1x1x64xf32, #tpu.memory_space<vmem>>, vector<1x1x64xf32>
      %87 = vector.shape_cast %86 : vector<1x1x64xf32> to vector<1x64xf32>
      %88 = vector.shape_cast %85 : vector<1x64xf32> to vector<1x1x64xf32>
      tpu.vector_store %arg7[%c0_47, %c0_48, %c0_49], %88 {strides = array<i32>} : memref<1x1x64xf32, #tpu.memory_space<vmem>>, vector<1x1x64xf32>,
    } else {
    }
    return
  }
  func.func @transform_0(%arg0: i32, %arg1: i32) -> (i32, i32, i32, i32) {
    %c0_i32 = arith.constant 0 : i32
    %c0_i32_0 = arith.constant 0 : i32
    %c0_i32_1 = arith.constant 0 : i32
    return %arg0, %arg1, %c0_i32, %c0_i32_0 : i32, i32, i32, i32
  }
  func.func @transform_1(%arg0: i32, %arg1: i32) -> (i32, i32, i32, i32) {
    %c1_i32 = arith.constant 1 : i32
    %0 = arith.addi %arg1, %c1_i32 : i32
    %c4_i32 = arith.constant 4 : i32
    %1 = arith.muli %c4_i32, %0 : i32
    %c0_i32 = arith.constant 0 : i32
    %c0_i32_0 = arith.constant 0 : i32
    %c0_i32_1 = arith.constant 0 : i32
    return %arg0, %1, %c0_i32, %c0_i32_0 : i32, i32, i32, i32
  }
  func.func @transform_2(%arg0: i32, %arg1: i32) -> (i32, i32, i32) {
    %c0_i32 = arith.constant 0 : i32
    %c0_i32_0 = arith.constant 0 : i32
    %c0_i32_1 = arith.constant 0 : i32
    %c0_i32_2 = arith.constant 0 : i32
    return %c0_i32, %c0_i32_0, %c0_i32_1 : i32, i32, i32
  }
  func.func @transform_3(%arg0: i32, %arg1: i32) -> (i32, i32, i32) {
    %c0_i32 = arith.constant 0 : i32
    %c0_i32_0 = arith.constant 0 : i32
    %c0_i32_1 = arith.constant 0 : i32
    %c0_i32_2 = arith.constant 0 : i32
    return %c0_i32, %c0_i32_0, %c0_i32_1 : i32, i32, i32
  }
  func.func @transform_4(%arg0: i32, %arg1: i32) -> (i32, i32) {
    %c0_i32 = arith.constant 0 : i32
    %c0_i32_0 = arith.constant 0 : i32
    %c0_i32_1 = arith.constant 0 : i32
    return %c0_i32, %c0_i32_0 : i32, i32
  }
  func.func @transform_5(%arg0: i32, %arg1: i32) -> (i32, i32, i32) {
    %c0_i32 = arith.constant 0 : i32
    %c0_i32_0 = arith.constant 0 : i32
    %c0_i32_1 = arith.constant 0 : i32
    return %arg0, %c0_i32, %c0_i32_0 : i32, i32, i32
  }
}

</mosaic_0001>

<llo_original>
// kernel: f_ext_forward.3
$region0: #{f_ext_forward.3}
  #allocation0 [shape = 'u32[]', space=smem, size = 0x4, offset = 0x4, fixed_abs, tag = 'smem constant byte address 0x4 - core index']
  #allocation1 [shape = 'u32[144,128]{1,0:T(1,128)}', space=vmem, size = 0x12000, scoped, tag = 'internal scratch']
  %s0 = inlined_call_operand.vmem [shape: bf16[392,160], index: 0, kind: input, shape index: {}]
  %s1 = inlined_call_operand.vmem [shape: bf16[160,64], index: 1, kind: input, shape index: {}]
  %s2 = inlined_call_operand.vmem [shape: f32[1,64], index: 2, kind: input, shape index: {}]
  %s3 = inlined_call_operand.vmem [shape: bf16[392,64], index: 3, kind: output, shape index: {}]
  %s4 = sld [smem:[#allocation0]]
  $region89: #{f_ext_forward.3} parent=0
    _
  %s6 = ssub.s32 1, %s4
  %s7 = scalar_select 0, %s6, %s4
  $region1: #{f_ext_forward.3} parent=0
    #allocation2 [shape = 'u8[65536]{0}', space=vmem, size = 0x10000, scoped, tag = 'output window, operand 0']
    loop: start=0, step=1, limit=6
    $region2: #{f_ext_forward.3} parent=1 // loop_pre_header
      _
    $region3: #{f_ext_forward.3} parent=1 // loop_header
      %s9 = sphi 0, %s13
      %p10 = scmp.ge.s32.totalorder %s9, 6
      %s19 = sphi 0, %s21
      %s22 = sphi 0, %s19
      %s23 = sphi 0, %s22
      %s39 = sphi 0, %s23
      %s43 = sphi 0, %s43
      %s45 = sphi 0, %s43
      %s46 = sphi 0, %s45
      %s60 = sphi 0, %s46
      %s64 = sphi 0, %s64
      %s66 = sphi 0, %s64
      %s67 = sphi 0, %s66
      %s81 = sphi 0, %s67
      %s87 = sphi 0, %s89
      %s90 = sphi 0, %s87
      %s91 = sphi 0, %s90
      %s107 = sphi 0, %s91
    $region4: #{f_ext_forward.3} parent=1 // loop_header_branch
      %12 = sbr.rel (%p10) target = $region8
    $region5: #{f_ext_forward.3} parent=1 // loop_body
      %s14 = ssub.s32 %s9, 1
      %s15 = ssub.s32 %s9, 2
      %s16 = sadd.s32 %s9, 1
      %s17 = ssub.s32 %s9, %s16
      %p18 = scmp.eq.s32.totalorder %s17, 0
      %s20 = sadd.s32 %s19, 1
      %s21 = scalar_select %p18, %s19, %s20
      %p24 = pneg %p18
      %p25 = scmp.eq.s32.totalorder %s9, 3
      %p26 = por %p24, %p25
      %p27 = scmp.ne.s32.totalorder %s19, %s22
      %p28 = scmp.eq.s32.totalorder %s9, 0
      %p29 = por %p27, %p28
      %p30 = scmp.ne.s32.totalorder %s19, %s22
      %p31 = scmp.eq.s32.totalorder %s14, 3
      %p32 = por %p30, %p31
      %p33 = scmp.ne.s32.totalorder %s22, %s23
      %p34 = scmp.eq.s32.totalorder %s14, 0
      %p35 = por %p33, %p34
      %p36 = scmp.ne.s32.totalorder %s22, %s23
      %p37 = scmp.eq.s32.totalorder %s15, 3
      %p38 = por %p36, %p37
      %p40 = scmp.ne.s32.totalorder %s23, %s39
      %p41 = scmp.eq.s32.totalorder %s15, 0
      %p42 = por %p40, %p41
      %s44 = sadd.s32 %s43, 1
      %p47 = scmp.eq.s32.totalorder %s9, 3
      %p48 = scmp.ne.s32.totalorder %s43, %s45
      %p49 = scmp.eq.s32.totalorder %s9, 0
      %p50 = por %p48, %p49
      %p51 = scmp.ne.s32.totalorder %s43, %s45
      %p52 = scmp.eq.s32.totalorder %s14, 3
      %p53 = por %p51, %p52
      %p54 = scmp.ne.s32.totalorder %s45, %s46
      %p55 = scmp.eq.s32.totalorder %s14, 0
      %p56 = por %p54, %p55
      %p57 = scmp.ne.s32.totalorder %s45, %s46
      %p58 = scmp.eq.s32.totalorder %s15, 3
      %p59 = por %p57, %p58
      %p61 = scmp.ne.s32.totalorder %s46, %s60
      %p62 = scmp.eq.s32.totalorder %s15, 0
      %p63 = por %p61, %p62
      %s65 = sadd.s32 %s64, 1
      %p68 = scmp.eq.s32.totalorder %s9, 3
      %p69 = scmp.ne.s32.totalorder %s64, %s66
      %p70 = scmp.eq.s32.totalorder %s9, 0
      %p71 = por %p69, %p70
      %p72 = scmp.ne.s32.totalorder %s64, %s66
      %p73 = scmp.eq.s32.totalorder %s14, 3
      %p74 = por %p72, %p73
      %p75 = scmp.ne.s32.totalorder %s66, %s67
      %p76 = scmp.eq.s32.totalorder %s14, 0
      %p77 = por %p75, %p76
      %p78 = scmp.ne.s32.totalorder %s66, %s67
      %p79 = scmp.eq.s32.totalorder %s15, 3
      %p80 = por %p78, %p79
      %p82 = scmp.ne.s32.totalorder %s67, %s81
      %p83 = scmp.eq.s32.totalorder %s15, 0
      %p84 = por %p82, %p83
      %s85 = ssub.s32 %s9, %s16
      %p86 = scmp.eq.s32.totalorder %s85, 0
      %s88 = sadd.s32 %s87, 1
      %s89 = scalar_select %p86, %s87, %s88
      %p92 = pneg %p86
      %p93 = scmp.eq.s32.totalorder %s9, 3
      %p94 = por %p92, %p93
      %p95 = scmp.ne.s32.totalorder %s87, %s90
      %p96 = scmp.eq.s32.totalorder %s9, 0
      %p97 = por %p95, %p96
      %p98 = scmp.ne.s32.totalorder %s87, %s90
      %p99 = scmp.eq.s32.totalorder %s14, 3
      %p100 = por %p98, %p99
      %p101 = scmp.ne.s32.totalorder %s90, %s91
      %p102 = scmp.eq.s32.totalorder %s14, 0
      %p103 = por %p101, %p102
      %p104 = scmp.ne.s32.totalorder %s90, %s91
      %p105 = scmp.eq.s32.totalorder %s15, 3
      %p106 = por %p104, %p105
      %p108 = scmp.ne.s32.totalorder %s91, %s107
      %p109 = scmp.eq.s32.totalorder %s15, 0
      %p110 = por %p108, %p109
      %p111 = scmp.le.s32.totalorder 1, %s9
      %p112 = scmp.lt.s32.totalorder %s9, 5
      %p113 = pnand %p111, %p112
      %p114 = pneg %p113
      // Predicated region
      $region9: #{f_ext_forward.3} parent=5 // pred_check
        _
      $region10: #{f_ext_forward.3} parent=5 // pred_check_branch
        %116 = sbr.rel (%p113) target = $region12
      $region11: #{f_ext_forward.3} parent=5 // pred_region
        %s117 = ssub.s32 %s9, 1
        // Predicated region
        $region13: #{f_ext_forward.3} parent=11 // pred_check
          %p118 = pneg %p56
        $region14: #{f_ext_forward.3} parent=11 // pred_check_branch
          %120 = sbr.rel (%p118) target = $region16
        $region15: #{f_ext_forward.3} parent=11 // pred_region
          _
        $region16: #{f_ext_forward.3} parent=11 // pred_fallthru
          _
        // Predicated region
        $region17: #{f_ext_forward.3} parent=11 // pred_check
          %p121 = pneg %p77
        $region18: #{f_ext_forward.3} parent=11 // pred_check_branch
          %123 = sbr.rel (%p121) target = $region20
        $region19: #{f_ext_forward.3} parent=11 // pred_region
          _
        $region20: #{f_ext_forward.3} parent=11 // pred_fallthru
          _
      $region12: #{f_ext_forward.3} parent=5 // pred_fallthru
        _
      %p124 = scmp.lt.s32.totalorder %s9, 4
      // Predicated region
      $region21: #{f_ext_forward.3} parent=5 // pred_check
        %p125 = pneg %p124
      $region22: #{f_ext_forward.3} parent=5 // pred_check_branch
        %127 = sbr.rel (%p125) target = $region24
      $region23: #{f_ext_forward.3} parent=5 // pred_region
        // Predicated region
        $region25: #{f_ext_forward.3} parent=23 // pred_check
          %p128 = pneg %p29
        $region26: #{f_ext_forward.3} parent=23 // pred_check_branch
          %130 = sbr.rel (%p128) target = $region28
        $region27: #{f_ext_forward.3} parent=23 // pred_region
          %s131 = smul.u32 16, %s9
          %s132 = ssub.s32 49, %s131
          %p133 = scmp.lt.s32.totalorder %s132, 16
          %s134 = scalar_select %p133, %s132, 16
          %s135 = smul.u32 64, %s134
          %s136 = smul.u32 %s135, 2
          %p137 = scmp.lt.s32.totalorder %s131, 48
          %s138 = scalar_select %p137, %s131, 48
          %s139 = smul.addr %s138, 2
          %s140 = smul.addr %s139, 4
          %s141 = scalar_lea.vmem %s0, %s140
          %s142 = smul.u32 16, %s9
          %s143 = ssub.s32 49, %s142
          %p144 = scmp.lt.s32.totalorder %s143, 16
          %s145 = scalar_select %p144, %s143, 16
          %s146 = smul.u32 64, %s145
          %s147 = smul.u32 %s146, 2
        $region28: #{f_ext_forward.3} parent=23 // pred_fallthru
          _
      $region24: #{f_ext_forward.3} parent=5 // pred_fallthru
        _
      %p148 = scmp.le.s32.totalorder 1, %s9
      %p149 = scmp.lt.s32.totalorder %s9, 5
      %p150 = pnand %p148, %p149
      %p151 = pneg %p150
      // Predicated region
      $region29: #{f_ext_forward.3} parent=5 // pred_check
        _
      $region30: #{f_ext_forward.3} parent=5 // pred_check_branch
        %153 = sbr.rel (%p150) target = $region32
      $region31: #{f_ext_forward.3} parent=5 // pred_region
        %s154 = ssub.s32 %s9, 1
        %s155 = smul.u32 16, %s14
        %s156 = ssub.s32 49, %s155
        %p157 = scmp.lt.s32.totalorder %s156, 16
        %s158 = scalar_select %p157, %s156, 16
        %s159 = smul.u32 64, %s158
        %s160 = smul.u32 %s159, 2
        %p161 = scmp.lt.s32.totalorder %s155, 48
        %s162 = scalar_select %p161, %s155, 48
        %s163 = smul.addr %s162, 2
        %s164 = smul.addr %s163, 4
        %s165 = scalar_lea.vmem %s0, %s164
        %p166 = pneg %p35
        %p167 = pneg %p32
        %p168 = pneg %p56
        %p169 = pneg %p53
        %p170 = pneg %p77
        %p171 = pneg %p74
        %p172 = pneg %p103
        %p173 = pneg %p100
        %s174 = sand.u32 %s90, 1
        %s175 = sand.u32 %s90, 1
        %s176 = smul.addr %s175, 64
        %s177 = scalar_lea.vmem [#allocation2], %s176
        %s178 = smul.u32 16, %s14
        %s179 = ssub.s32 49, %s178
        %p180 = scmp.lt.s32.totalorder %s179, 16
        %s181 = scalar_select %p180, %s179, 16
        %s182 = smul.u32 64, %s181
        %s183 = smul.u32 %s182, 2
        %p184 = scmp.lt.s32.totalorder %s178, 48
        %s185 = scalar_select %p184, %s178, 48
        %s186 = smul.addr %s185, 2
        %s187 = smul.addr %s186, 4
        %s188 = scalar_lea.vmem %s0, %s187
        %s189 = smul.u32 16, %s14
        %s190 = ssub.s32 49, %s189
        %p191 = scmp.lt.s32.totalorder %s190, 16
        %s192 = scalar_select %p191, %s190, 16
        %s193 = smul.u32 64, %s192
        %s194 = smul.u32 %s193, 2
        %s195 = smul.u32 16, %s14
        %s196 = ssub.s32 49, %s195
        %p197 = scmp.lt.s32.totalorder %s196, 16
        %s198 = scalar_select %p197, %s196, 16
        %s199 = smul.u32 64, %s198
        %v201 = vld [vmem:[%s188] sm:$0xff]
        %v202 = vld [vmem:[%s188 + $0x8] sm:$0xff]
        %v203 = vld [vmem:[%s188 + $0x10] sm:$0xff]
        %v204 = vld [vmem:[%s188 + $0x18] sm:$0xff]
        %v205 = vld [vmem:[%s188 + $0x20] sm:$0xff]
        %v206 = vld [vmem:[%s188 + $0x28] sm:$0xff]
        %v207 = vld [vmem:[%s188 + $0x30] sm:$0xff]
        %v208 = vld [vmem:[%s188 + $0x38] sm:$0xff]
        %v209 = vld [vmem:[%s188 + $0x40] sm:$0xff]
        %v210 = vld [vmem:[%s188 + $0x48] sm:$0xff]
        %v211 = vld [vmem:[%s188 + $0x50] sm:$0xff]
        %v212 = vld [vmem:[%s188 + $0x58] sm:$0xff]
        %v213 = vld [vmem:[%s188 + $0x60] sm:$0xff]
        %v214 = vld [vmem:[%s188 + $0x68] sm:$0xff]
        %v215 = vld [vmem:[%s188 + $0x70] sm:$0xff]
        %v216 = vld [vmem:[%s188 + $0x78] sm:$0xff]
        %v217 = vld [vmem:[%s1] sm:$0xf]
        %v218 = vld [vmem:[%s1 + $0x4] sm:$0xf]
        %v219 = vld [vmem:[%s1 + $0x8] sm:$0xf]
        %v220 = vld [vmem:[%s1 + $0xc] sm:$0xf]
        %v221 = vld [vmem:[%s1 + $0x10] sm:$0xf]
        %v222 = vld [vmem:[%s1 + $0x14] sm:$0xf]
        %v223 = vld [vmem:[%s1 + $0x18] sm:$0xf]
        %v224 = vld [vmem:[%s1 + $0x1c] sm:$0xf]
        %v225 = vld [vmem:[%s1 + $0x20] sm:$0xf]
        %v226 = vld [vmem:[%s1 + $0x24] sm:$0xf]
        %v227 = vld [vmem:[%s1 + $0x28] sm:$0xf]
        %v228 = vld [vmem:[%s1 + $0x2c] sm:$0xf]
        %v229 = vld [vmem:[%s1 + $0x30] sm:$0xf]
        %v230 = vld [vmem:[%s1 + $0x34] sm:$0xf]
        %v231 = vld [vmem:[%s1 + $0x38] sm:$0xf]
        %v232 = vld [vmem:[%s1 + $0x3c] sm:$0xf]
        %v233 = vld [vmem:[%s1 + $0x40] sm:$0xf]
        %v234 = vld [vmem:[%s1 + $0x44] sm:$0xf]
        %v235 = vld [vmem:[%s1 + $0x48] sm:$0xf]
        %v236 = vld [vmem:[%s1 + $0x4c] sm:$0xf]
        %v237 = vld [vmem:[%s2] sm:$0x1]
        %v239 = vlaneseq
        %v240 = vshrl.u32 %v239, 7
        %v241 = vsub.s32 0, %v240
        %v242 = vrot.slane %v237, %v241
        %v260 = vunpack.c.l.b16 %v201
        %v261 = vunpack.c.h.b16 %v201
        %v262 = vunpack.c.l.b16 %v202
        %v263 = vunpack.c.h.b16 %v202
        %v264 = vunpack.c.l.b16 %v203
        %v265 = vunpack.c.h.b16 %v203
        %v266 = vunpack.c.l.b16 %v204
        %v267 = vunpack.c.h.b16 %v204
        %v268 = vunpack.c.l.b16 %v205
        %v269 = vunpack.c.h.b16 %v205
        %v270 = vunpack.c.l.b16 %v206
        %v271 = vunpack.c.h.b16 %v206
        %v272 = vunpack.c.l.b16 %v207
        %v273 = vunpack.c.h.b16 %v207
        %v274 = vunpack.c.l.b16 %v208
        %v275 = vunpack.c.h.b16 %v208
        %v276 = vunpack.c.l.b16 %v209
        %v277 = vunpack.c.h.b16 %v209
        %v278 = vunpack.c.l.b16 %v210
        %v279 = vunpack.c.h.b16 %v210
        %v280 = vunpack.c.l.b16 %v211
        %v281 = vunpack.c.h.b16 %v211
        %v282 = vunpack.c.l.b16 %v212
        %v283 = vunpack.c.h.b16 %v212
        %v284 = vunpack.c.l.b16 %v213
        %v285 = vunpack.c.h.b16 %v213
        %v286 = vunpack.c.l.b16 %v214
        %v287 = vunpack.c.h.b16 %v214
        %v288 = vunpack.c.l.b16 %v215
        %v289 = vunpack.c.h.b16 %v215
        %v290 = vunpack.c.l.b16 %v216
        %v291 = vunpack.c.h.b16 %v216
        %v292 = vpack.c.b16 %v262, %v260
        %v293 = vpack.c.b16 %v263, %v261
        %v294 = vpack.c.b16 %v266, %v264
        %v295 = vpack.c.b16 %v267, %v265
        %v296 = vpack.c.b16 %v270, %v268
        %v297 = vpack.c.b16 %v271, %v269
        %v298 = vpack.c.b16 %v274, %v272
        %v299 = vpack.c.b16 %v275, %v273
        %v300 = vpack.c.b16 %v278, %v276
        %v301 = vpack.c.b16 %v279, %v277
        %v302 = vpack.c.b16 %v282, %v280
        %v303 = vpack.c.b16 %v283, %v281
        %v304 = vpack.c.b16 %v286, %v284
        %v305 = vpack.c.b16 %v287, %v285
        %v306 = vpack.c.b16 %v290, %v288
        %v307 = vpack.c.b16 %v291, %v289
        %v336 = vunpack.c.l.b16 %v217
        %v337 = vunpack.c.l.b16 %v218
        %v338 = vunpack.c.l.b16 %v219
        %v339 = vunpack.c.l.b16 %v220
        %v340 = vunpack.c.l.b16 %v221
        %v341 = vunpack.c.l.b16 %v222
        %v342 = vunpack.c.l.b16 %v223
        %v343 = vunpack.c.l.b16 %v224
        %v344 = vunpack.c.l.b16 %v225
        %v345 = vunpack.c.l.b16 %v226
        %v346 = vunpack.c.l.b16 %v227
        %v347 = vunpack.c.l.b16 %v228
        %v348 = vunpack.c.l.b16 %v229
        %v349 = vunpack.c.l.b16 %v230
        %v350 = vunpack.c.l.b16 %v231
        %v351 = vunpack.c.l.b16 %v232
        %v352 = vunpack.c.l.b16 %v233
        %v353 = vunpack.c.l.b16 %v234
        %v354 = vunpack.c.l.b16 %v235
        %v355 = vunpack.c.l.b16 %v236
        %v356 = vpack.c.b16 %v337, %v336
        %v357 = vpack.c.b16 %v339, %v338
        %v358 = vpack.c.b16 %v341, %v340
        %v359 = vpack.c.b16 %v343, %v342
        %v360 = vpack.c.b16 %v345, %v344
        %v361 = vpack.c.b16 %v347, %v346
        %v362 = vpack.c.b16 %v349, %v348
        %v363 = vpack.c.b16 %v351, %v350
        %v364 = vpack.c.b16 %v353, %v352
        %v365 = vpack.c.b16 %v355, %v354
        %vm376 = vcmask 261120
        %v378 = vsel %vm376, %v293, 0
        %v381 = vsel %vm376, %v295, 0
        %v384 = vsel %vm376, %v297, 0
        %v387 = vsel %vm376, %v299, 0
        %v390 = vsel %vm376, %v301, 0
        %v393 = vsel %vm376, %v303, 0
        %v396 = vsel %vm376, %v305, 0
        %v399 = vsel %vm376, %v307, 0
        %401 = vmatprep.subr.bf16.mxu0 0
        %402 = vmatpush1.bf16.msra.mxu0 %v356
        %403 = vmatprep.subr.bf16.mxu0 0
        %404 = vmatpush1.bf16.msra.mxu0 %v357
        %405 = vmatprep.subr.bf16.mxu0 0
        %406 = vmatpush1.bf16.msra.mxu0 %v358
        %407 = vmatprep.subr.bf16.mxu0 0
        %408 = vmatpush1.bf16.msra.mxu0 %v359
        %409 = vmatprep.subr.bf16.mxu0 0
        %410 = vmatpush1.bf16.msra.mxu0 %v360
        %411 = vmatprep.subr.bf16.mxu0 0
        %412 = vmatpush1.bf16.msra.mxu0 %v361
        %413 = vmatprep.subr.bf16.mxu0 0
        %414 = vmatpush1.bf16.msra.mxu0 %v362
        %415 = vmatprep.subr.bf16.mxu0 0
        %416 = vmatpush1.bf16.msra.mxu0 %v363
        %417 = vmatprep.subr.bf16.mxu0 0
        %418 = vmatpush1.bf16.msra.mxu0 %v364
        %419 = vmatprep.subr.bf16.mxu0 0
        %420 = vmatpush1.bf16.msra.mxu0 %v365
        %421 = vmatprep.subr.bf16.mxu0 0
        %422 = vmatpush1.bf16.msra.mxu0 0
        %423 = vmatprep.subr.bf16.mxu0 0
        %424 = vmatpush1.bf16.msra.mxu0 0
        %425 = vmatprep.subr.bf16.mxu0 0
        %426 = vmatpush1.bf16.msra.mxu0 0
        %427 = vmatprep.subr.bf16.mxu0 0
        %428 = vmatpush1.bf16.msra.mxu0 0
        %429 = vmatprep.subr.bf16.mxu0 0
        %430 = vmatpush1.bf16.msra.mxu0 0
        %431 = vmatprep.subr.bf16.mxu0 0
        %432 = vmatpush1.bf16.msra.mxu0 0
        %433 = vmatprep.mubr.bf16.mxu0 %v378
        %434 = vmatmul.mubr.bf16.gmra.mrb[0].mxu0 %v292
        %v435 = vpop.f32.mrb[0].mxu0
        %v436 = vadd.f32 %v242, %v435
        %v437 = vpop.f32.mrb[0].mxu0
        %v438 = vpop.f32.mrb[0].mxu0
        %v439 = vadd.f32 %v242, %v438
        %v440 = vpop.f32.mrb[0].mxu0
        %441 = vmatprep.mubr.bf16.mxu0 %v381
        %442 = vmatmul.mubr.bf16.gmra.mrb[0].mxu0 %v294
        %v443 = vpop.f32.mrb[0].mxu0
        %v444 = vadd.f32 %v242, %v443
        %v445 = vpop.f32.mrb[0].mxu0
        %v446 = vpop.f32.mrb[0].mxu0
        %v447 = vadd.f32 %v242, %v446
        %v448 = vpop.f32.mrb[0].mxu0
        %449 = vmatprep.mubr.bf16.mxu0 %v384
        %450 = vmatmul.mubr.bf16.gmra.mrb[0].mxu0 %v296
        %v451 = vpop.f32.mrb[0].mxu0
        %v452 = vadd.f32 %v242, %v451
        %v453 = vpop.f32.mrb[0].mxu0
        %v454 = vpop.f32.mrb[0].mxu0
        %v455 = vadd.f32 %v242, %v454
        %v456 = vpop.f32.mrb[0].mxu0
        %457 = vmatprep.mubr.bf16.mxu0 %v387
        %458 = vmatmul.mubr.bf16.gmra.mrb[0].mxu0 %v298
        %v459 = vpop.f32.mrb[0].mxu0
        %v460 = vadd.f32 %v242, %v459
        %v461 = vpop.f32.mrb[0].mxu0
        %v462 = vpop.f32.mrb[0].mxu0
        %v463 = vadd.f32 %v242, %v462
        %v464 = vpop.f32.mrb[0].mxu0
        %465 = vmatprep.mubr.bf16.mxu0 %v390
        %466 = vmatmul.mubr.bf16.gmra.mrb[0].mxu0 %v300
        %v467 = vpop.f32.mrb[0].mxu0
        %v468 = vadd.f32 %v242, %v467
        %v469 = vpop.f32.mrb[0].mxu0
        %v470 = vpop.f32.mrb[0].mxu0
        %v471 = vadd.f32 %v242, %v470
        %v472 = vpop.f32.mrb[0].mxu0
        %473 = vmatprep.mubr.bf16.mxu0 %v393
        %474 = vmatmul.mubr.bf16.gmra.mrb[0].mxu0 %v302
        %v475 = vpop.f32.mrb[0].mxu0
        %v476 = vadd.f32 %v242, %v475
        %v477 = vpop.f32.mrb[0].mxu0
        %v478 = vpop.f32.mrb[0].mxu0
        %v479 = vadd.f32 %v242, %v478
        %v480 = vpop.f32.mrb[0].mxu0
        %481 = vmatprep.mubr.bf16.mxu0 %v396
        %482 = vmatmul.mubr.bf16.gmra.mrb[0].mxu0 %v304
        %v483 = vpop.f32.mrb[0].mxu0
        %v484 = vadd.f32 %v242, %v483
        %v485 = vpop.f32.mrb[0].mxu0
        %v486 = vpop.f32.mrb[0].mxu0
        %v487 = vadd.f32 %v242, %v486
        %v488 = vpop.f32.mrb[0].mxu0
        %489 = vmatprep.mubr.bf16.mxu0 %v399
        %490 = vmatmul.mubr.bf16.gmra.mrb[0].mxu0 %v306
        %v491 = vpop.f32.mrb[0].mxu0
        %v492 = vadd.f32 %v242, %v491
        %v493 = vpop.f32.mrb[0].mxu0
        %v494 = vpop.f32.mrb[0].mxu0
        %v495 = vadd.f32 %v242, %v494
        %v496 = vpop.f32.mrb[0].mxu0
        %497 = vdwg.mxu0
        %v498 = vmax.f32 %v436, 0.0
        %v499 = vmax.f32 %v439, 0.0
        %v500 = vmax.f32 %v444, 0.0
        %v501 = vmax.f32 %v447, 0.0
        %v502 = vmax.f32 %v452, 0.0
        %v503 = vmax.f32 %v455, 0.0
        %v504 = vmax.f32 %v460, 0.0
        %v505 = vmax.f32 %v463, 0.0
        %v506 = vmax.f32 %v468, 0.0
        %v507 = vmax.f32 %v471, 0.0
        %v508 = vmax.f32 %v476, 0.0
        %v509 = vmax.f32 %v479, 0.0
        %v510 = vmax.f32 %v484, 0.0
        %v511 = vmax.f32 %v487, 0.0
        %v512 = vmax.f32 %v492, 0.0
        %v513 = vmax.f32 %v495, 0.0
        %v514 = vpack.c.bf16 %v499, %v498
        %v515 = vpack.c.bf16 %v501, %v500
        %v516 = vpack.c.bf16 %v503, %v502
        %v517 = vpack.c.bf16 %v505, %v504
        %v518 = vpack.c.bf16 %v507, %v506
        %v519 = vpack.c.bf16 %v509, %v508
        %v520 = vpack.c.bf16 %v511, %v510
        %v521 = vpack.c.bf16 %v513, %v512
        %v530 = vunpack.c.l.b16 %v514
        %v531 = vunpack.c.h.b16 %v514
        %v532 = vunpack.c.l.b16 %v515
        %v533 = vunpack.c.h.b16 %v515
        %v534 = vunpack.c.l.b16 %v516
        %v535 = vunpack.c.h.b16 %v516
        %v536 = vunpack.c.l.b16 %v517
        %v537 = vunpack.c.h.b16 %v517
        %v538 = vunpack.c.l.b16 %v518
        %v539 = vunpack.c.h.b16 %v518
        %v540 = vunpack.c.l.b16 %v519
        %v541 = vunpack.c.h.b16 %v519
        %v542 = vunpack.c.l.b16 %v520
        %v543 = vunpack.c.h.b16 %v520
        %v544 = vunpack.c.l.b16 %v521
        %v545 = vunpack.c.h.b16 %v521
        %v546 = vpack.c.b16 %v530, %v530
        %v547 = vpack.c.b16 %v531, %v531
        %v548 = vpack.c.b16 %v532, %v532
        %v549 = vpack.c.b16 %v533, %v533
        %v550 = vpack.c.b16 %v534, %v534
        %v551 = vpack.c.b16 %v535, %v535
        %v552 = vpack.c.b16 %v536, %v536
        %v553 = vpack.c.b16 %v537, %v537
        %v554 = vpack.c.b16 %v538, %v538
        %v555 = vpack.c.b16 %v539, %v539
        %v556 = vpack.c.b16 %v540, %v540
        %v557 = vpack.c.b16 %v541, %v541
        %v558 = vpack.c.b16 %v542, %v542
        %v559 = vpack.c.b16 %v543, %v543
        %v560 = vpack.c.b16 %v544, %v544
        %v561 = vpack.c.b16 %v545, %v545
        %vm578 = vcmask 519168
        %579 = vst.msk [vmem:[%s177] sm:$0xf] %vm578, %v546
        %580 = vst.msk [vmem:[%s177 + $0x4] sm:$0xf] %vm578, %v547
        %581 = vst.msk [vmem:[%s177 + $0x8] sm:$0xf] %vm578, %v548
        %582 = vst.msk [vmem:[%s177 + $0xc] sm:$0xf] %vm578, %v549
        %583 = vst.msk [vmem:[%s177 + $0x10] sm:$0xf] %vm578, %v550
        %584 = vst.msk [vmem:[%s177 + $0x14] sm:$0xf] %vm578, %v551
        %585 = vst.msk [vmem:[%s177 + $0x18] sm:$0xf] %vm578, %v552
        %586 = vst.msk [vmem:[%s177 + $0x1c] sm:$0xf] %vm578, %v553
        %587 = vst.msk [vmem:[%s177 + $0x20] sm:$0xf] %vm578, %v554
        %588 = vst.msk [vmem:[%s177 + $0x24] sm:$0xf] %vm578, %v555
        %589 = vst.msk [vmem:[%s177 + $0x28] sm:$0xf] %vm578, %v556
        %590 = vst.msk [vmem:[%s177 + $0x2c] sm:$0xf] %vm578, %v557
        %591 = vst.msk [vmem:[%s177 + $0x30] sm:$0xf] %vm578, %v558
        %592 = vst.msk [vmem:[%s177 + $0x34] sm:$0xf] %vm578, %v559
        %593 = vst.msk [vmem:[%s177 + $0x38] sm:$0xf] %vm578, %v560
        %594 = vst.msk [vmem:[%s177 + $0x3c] sm:$0xf] %vm578, %v561
        %s595 = sand.u32 %s90, 1
        %s596 = sand.u32 %s90, 1
        %s597 = smul.addr %s596, 64
        %s598 = scalar_lea.vmem [#allocation2], %s597
        // Predicated region
        $region33: #{f_ext_forward.3} parent=31 // pred_check
          %p599 = pneg %p100
        $region34: #{f_ext_forward.3} parent=31 // pred_check_branch
          %601 = sbr.rel (%p599) target = $region36
        $region35: #{f_ext_forward.3} parent=31 // pred_region
          %s602 = smul.u32 16, %s14
          %s603 = ssub.s32 49, %s602
          %p604 = scmp.lt.s32.totalorder %s603, 16
          %s605 = scalar_select %p604, %s603, 16
          %s606 = smul.u32 64, %s605
          %p607 = scmp.ne.s32.totalorder 0, %s606
          %s608 = smul.addr %s602, 4
          %s609 = scalar_lea.vmem %s3, %s608
          // Predicated region
          $region37: #{f_ext_forward.3} parent=35 // pred_check
            %p610 = pneg %p607
          $region38: #{f_ext_forward.3} parent=35 // pred_check_branch
            %612 = sbr.rel (%p610) target = $region40
          $region39: #{f_ext_forward.3} parent=35 // pred_region
            // Predicated region
            $region41: #{f_ext_forward.3} parent=39 // pred_check
              _
            $region42: #{f_ext_forward.3} parent=39 // pred_check_branch
              %614 = sbr.rel target = $region44
            $region43: #{f_ext_forward.3} parent=39 // pred_region
              // Predicated region
              $region63: #{f_ext_forward.3} parent=43 // pred_check
                _
              $region64: #{f_ext_forward.3} parent=43 // pred_check_branch
                %693 = sbr.rel (0) target = $region66
              $region65: #{f_ext_forward.3} parent=43 // pred_region
                %s695 = sshrl.u32 %s605, 4
                // While loop
                $region67: #{f_ext_forward.3} parent=65 // loop_pre_header
                  _
                $region68: #{f_ext_forward.3} parent=65 // loop_header
                  %s697 = sphi 0, %s699
                  %p698 = scmp.ge.s32.totalorder %s697, %s695
                  %s702 = sphi 0, %s739
                  %s703 = sphi %s598, %s742
                  %s704 = sphi %s609, %s743
                $region69: #{f_ext_forward.3} parent=65 // loop_header_branch
                  %701 = sbr.rel (%p698) target = $region73
                $region70: #{f_ext_forward.3} parent=65 // loop_body
                  %v705 = vld [vmem:[%s703] sm:$0xf]
                  %706 = vst [vmem:[%s704] sm:$0xf] %v705
                  %v707 = vld [vmem:[%s703 + $0x4] sm:$0xf]
                  %708 = vst [vmem:[%s704 + $0x4] sm:$0xf] %v707
                  %v709 = vld [vmem:[%s703 + $0x8] sm:$0xf]
                  %710 = vst [vmem:[%s704 + $0x8] sm:$0xf] %v709
                  %v711 = vld [vmem:[%s703 + $0xc] sm:$0xf]
                  %712 = vst [vmem:[%s704 + $0xc] sm:$0xf] %v711
                  %v713 = vld [vmem:[%s703 + $0x10] sm:$0xf]
                  %714 = vst [vmem:[%s704 + $0x10] sm:$0xf] %v713
                  %v715 = vld [vmem:[%s703 + $0x14] sm:$0xf]
                  %716 = vst [vmem:[%s704 + $0x14] sm:$0xf] %v715
                  %v717 = vld [vmem:[%s703 + $0x18] sm:$0xf]
                  %718 = vst [vmem:[%s704 + $0x18] sm:$0xf] %v717
                  %v719 = vld [vmem:[%s703 + $0x1c] sm:$0xf]
                  %720 = vst [vmem:[%s704 + $0x1c] sm:$0xf] %v719
                  %v721 = vld [vmem:[%s703 + $0x20] sm:$0xf]
                  %722 = vst [vmem:[%s704 + $0x20] sm:$0xf] %v721
                  %v723 = vld [vmem:[%s703 + $0x24] sm:$0xf]
                  %724 = vst [vmem:[%s704 + $0x24] sm:$0xf] %v723
                  %v725 = vld [vmem:[%s703 + $0x28] sm:$0xf]
                  %726 = vst [vmem:[%s704 + $0x28] sm:$0xf] %v725
                  %v727 = vld [vmem:[%s703 + $0x2c] sm:$0xf]
                  %728 = vst [vmem:[%s704 + $0x2c] sm:$0xf] %v727
                  %v729 = vld [vmem:[%s703 + $0x30] sm:$0xf]
                  %730 = vst [vmem:[%s704 + $0x30] sm:$0xf] %v729
                  %v731 = vld [vmem:[%s703 + $0x34] sm:$0xf]
                  %732 = vst [vmem:[%s704 + $0x34] sm:$0xf] %v731
                  %v733 = vld [vmem:[%s703 + $0x38] sm:$0xf]
                  %734 = vst [vmem:[%s704 + $0x38] sm:$0xf] %v733
                  %v735 = vld [vmem:[%s703 + $0x3c] sm:$0xf]
                  %736 = vst [vmem:[%s704 + $0x3c] sm:$0xf] %v735
                  %s737 = sadd.s32 1, %s702
                  %p738 = scmp.ge.s32.totalorder %s737, %s695
                  %s739 = scalar_select %p738, 0, %s737
                  %s740 = smul.u32 %s739, 64
                  %s741 = smul.u32 %s739, 64
                  %s742 = scalar_lea.vmem %s598, %s740 [#allocation2]
                  %s743 = scalar_lea.vmem %s609, %s741
                $region71: #{f_ext_forward.3} parent=65 // loop_footer
                  %s699 = sadd.s32 %s697, 1
                $region72: #{f_ext_forward.3} parent=65 // loop_footer_branch
                  %696 = sbr.rel target = $region68
                $region73: #{f_ext_forward.3} parent=65 // loop_exit
                  _
                %s744 = sshrl.u32 %s605, 4
                %s745 = sand.u32 %s605, 15
                %s746 = smul.u32 %s744, 16
                %s747 = smul.u32 4, %s746
                %s748 = scalar_lea.vmem %s598, %s747 [#allocation2]
                %s749 = smul.u32 4, %s746
                %s750 = scalar_lea.vmem %s609, %s749
                // While loop
                $region74: #{f_ext_forward.3} parent=65 // loop_pre_header
                  _
                $region75: #{f_ext_forward.3} parent=65 // loop_header
                  %s752 = sphi 0, %s754
                  %p753 = scmp.ge.s32.totalorder %s752, %s745
                  %s757 = sphi 0, %s764
                  %s758 = sphi %s748, %s767
                  %s759 = sphi %s750, %s768
                $region76: #{f_ext_forward.3} parent=65 // loop_header_branch
                  %756 = sbr.rel (%p753) target = $region80
                $region77: #{f_ext_forward.3} parent=65 // loop_body
                  %v760 = vld [vmem:[%s758] sm:$0xf]
                  %761 = vst [vmem:[%s759] sm:$0xf] %v760
                  %s762 = sadd.s32 1, %s757
                  %p763 = scmp.ge.s32.totalorder %s762, %s745
                  %s764 = scalar_select %p763, 0, %s762
                  %s765 = smul.u32 %s764, 4
                  %s766 = smul.u32 %s764, 4
                  %s767 = scalar_lea.vmem %s748, %s765 [#allocation2]
                  %s768 = scalar_lea.vmem %s750, %s766
                $region78: #{f_ext_forward.3} parent=65 // loop_footer
                  %s754 = sadd.s32 %s752, 1
                $region79: #{f_ext_forward.3} parent=65 // loop_footer_branch
                  %751 = sbr.rel target = $region75
                $region80: #{f_ext_forward.3} parent=65 // loop_exit
                  _
              $region66: #{f_ext_forward.3} parent=43 // pred_fallthru
                _
            $region44: #{f_ext_forward.3} parent=39 // pred_fallthru
              _
            // Predicated region
            $region45: #{f_ext_forward.3} parent=39 // pred_check
              _
            $region46: #{f_ext_forward.3} parent=39 // pred_check_branch
              %616 = sbr.rel (0) target = $region48
            $region47: #{f_ext_forward.3} parent=39 // pred_region
              %s618 = sshrl.u32 %s605, 4
              // While loop
              $region49: #{f_ext_forward.3} parent=47 // loop_pre_header
                _
              $region50: #{f_ext_forward.3} parent=47 // loop_header
                %s620 = sphi 0, %s622
                %p621 = scmp.ge.s32.totalorder %s620, %s618
                %s625 = sphi 0, %s662
                %s626 = sphi %s598, %s665
                %s627 = sphi %s609, %s666
              $region51: #{f_ext_forward.3} parent=47 // loop_header_branch
                %624 = sbr.rel (%p621) target = $region55
              $region52: #{f_ext_forward.3} parent=47 // loop_body
                %v628 = vld [vmem:[%s626] sm:$0xf]
                %629 = vst [vmem:[%s627] sm:$0xf] %v628
                %v630 = vld [vmem:[%s626 + $0x4] sm:$0xf]
                %631 = vst [vmem:[%s627 + $0x4] sm:$0xf] %v630
                %v632 = vld [vmem:[%s626 + $0x8] sm:$0xf]
                %633 = vst [vmem:[%s627 + $0x8] sm:$0xf] %v632
                %v634 = vld [vmem:[%s626 + $0xc] sm:$0xf]
                %635 = vst [vmem:[%s627 + $0xc] sm:$0xf] %v634
                %v636 = vld [vmem:[%s626 + $0x10] sm:$0xf]
                %637 = vst [vmem:[%s627 + $0x10] sm:$0xf] %v636
                %v638 = vld [vmem:[%s626 + $0x14] sm:$0xf]
                %639 = vst [vmem:[%s627 + $0x14] sm:$0xf] %v638
                %v640 = vld [vmem:[%s626 + $0x18] sm:$0xf]
                %641 = vst [vmem:[%s627 + $0x18] sm:$0xf] %v640
                %v642 = vld [vmem:[%s626 + $0x1c] sm:$0xf]
                %643 = vst [vmem:[%s627 + $0x1c] sm:$0xf] %v642
                %v644 = vld [vmem:[%s626 + $0x20] sm:$0xf]
                %645 = vst [vmem:[%s627 + $0x20] sm:$0xf] %v644
                %v646 = vld [vmem:[%s626 + $0x24] sm:$0xf]
                %647 = vst [vmem:[%s627 + $0x24] sm:$0xf] %v646
                %v648 = vld [vmem:[%s626 + $0x28] sm:$0xf]
                %649 = vst [vmem:[%s627 + $0x28] sm:$0xf] %v648
                %v650 = vld [vmem:[%s626 + $0x2c] sm:$0xf]
                %651 = vst [vmem:[%s627 + $0x2c] sm:$0xf] %v650
                %v652 = vld [vmem:[%s626 + $0x30] sm:$0xf]
                %653 = vst [vmem:[%s627 + $0x30] sm:$0xf] %v652
                %v654 = vld [vmem:[%s626 + $0x34] sm:$0xf]
                %655 = vst [vmem:[%s627 + $0x34] sm:$0xf] %v654
                %v656 = vld [vmem:[%s626 + $0x38] sm:$0xf]
                %657 = vst [vmem:[%s627 + $0x38] sm:$0xf] %v656
                %v658 = vld [vmem:[%s626 + $0x3c] sm:$0xf]
                %659 = vst [vmem:[%s627 + $0x3c] sm:$0xf] %v658
                %s660 = sadd.s32 1, %s625
                %p661 = scmp.ge.s32.totalorder %s660, %s618
                %s662 = scalar_select %p661, 0, %s660
                %s663 = smul.u32 %s662, 64
                %s664 = smul.u32 %s662, 64
                %s665 = scalar_lea.vmem %s598, %s663 [#allocation2]
                %s666 = scalar_lea.vmem %s609, %s664
              $region53: #{f_ext_forward.3} parent=47 // loop_footer
                %s622 = sadd.s32 %s620, 1
              $region54: #{f_ext_forward.3} parent=47 // loop_footer_branch
                %619 = sbr.rel target = $region50
              $region55: #{f_ext_forward.3} parent=47 // loop_exit
                _
              %s667 = sshrl.u32 %s605, 4
              %s668 = sand.u32 %s605, 15
              %s669 = smul.u32 %s667, 16
              %s670 = smul.u32 4, %s669
              %s671 = scalar_lea.vmem %s598, %s670 [#allocation2]
              %s672 = smul.u32 4, %s669
              %s673 = scalar_lea.vmem %s609, %s672
              // While loop
              $region56: #{f_ext_forward.3} parent=47 // loop_pre_header
                _
              $region57: #{f_ext_forward.3} parent=47 // loop_header
                %s675 = sphi 0, %s677
                %p676 = scmp.ge.s32.totalorder %s675, %s668
                %s680 = sphi 0, %s687
                %s681 = sphi %s671, %s690
                %s682 = sphi %s673, %s691
              $region58: #{f_ext_forward.3} parent=47 // loop_header_branch
                %679 = sbr.rel (%p676) target = $region62
              $region59: #{f_ext_forward.3} parent=47 // loop_body
                %v683 = vld [vmem:[%s681] sm:$0xf]
                %684 = vst [vmem:[%s682] sm:$0xf] %v683
                %s685 = sadd.s32 1, %s680
                %p686 = scmp.ge.s32.totalorder %s685, %s668
                %s687 = scalar_select %p686, 0, %s685
                %s688 = smul.u32 %s687, 4
                %s689 = smul.u32 %s687, 4
                %s690 = scalar_lea.vmem %s671, %s688 [#allocation2]
                %s691 = scalar_lea.vmem %s673, %s689
              $region60: #{f_ext_forward.3} parent=47 // loop_footer
                %s677 = sadd.s32 %s675, 1
              $region61: #{f_ext_forward.3} parent=47 // loop_footer_branch
                %674 = sbr.rel target = $region57
              $region62: #{f_ext_forward.3} parent=47 // loop_exit
                _
            $region48: #{f_ext_forward.3} parent=39 // pred_fallthru
              _
          $region40: #{f_ext_forward.3} parent=35 // pred_fallthru
            _
          %769 = vnop
        $region36: #{f_ext_forward.3} parent=31 // pred_fallthru
          _
      $region32: #{f_ext_forward.3} parent=5 // pred_fallthru
        _
      %p770 = scmp.le.s32.totalorder 2, %s9
      // Predicated region
      $region81: #{f_ext_forward.3} parent=5 // pred_check
        %p771 = pneg %p770
      $region82: #{f_ext_forward.3} parent=5 // pred_check_branch
        %773 = sbr.rel (%p771) target = $region84
      $region83: #{f_ext_forward.3} parent=5 // pred_region
        %s774 = ssub.s32 %s9, 2
        // Predicated region
        $region85: #{f_ext_forward.3} parent=83 // pred_check
          %p775 = pneg %p106
        $region86: #{f_ext_forward.3} parent=83 // pred_check_branch
          %777 = sbr.rel (%p775) target = $region88
        $region87: #{f_ext_forward.3} parent=83 // pred_region
          %s778 = sand.u32 %s91, 1
          %s779 = sand.u32 %s91, 1
          %s780 = smul.addr %s779, 64
          %s781 = scalar_lea.vmem [#allocation2], %s780
        $region88: #{f_ext_forward.3} parent=83 // pred_fallthru
          _
      $region84: #{f_ext_forward.3} parent=5 // pred_fallthru
        _
    $region6: #{f_ext_forward.3} parent=1 // loop_footer
      %s13 = sadd.s32 1, %s9
    $region7: #{f_ext_forward.3} parent=1 // loop_footer_branch
      %8 = sbr.rel target = $region3
    $region8: #{f_ext_forward.3} parent=1 // loop_exit
      _

// kernel: f_ext_forward.4
$region0: #{f_ext_forward.4}
  #allocation0 [shape = 'u32[]', space=smem, size = 0x4, offset = 0x4, fixed_abs, tag = 'smem constant byte address 0x4 - core index']
  #allocation1 [shape = 'u32[144,128]{1,0:T(1,128)}', space=vmem, size = 0x12000, scoped, tag = 'internal scratch']
  %s0 = inlined_call_operand.vmem [shape: bf16[2,18,17,128], index: 0, kind: input, shape index: {}, may-alias: {0,1}]
  %s1 = inlined_call_operand.vmem [shape: bf16[2,18,17,128], index: 1, kind: input, shape index: {}, may-alias: {0,1}]
  %s2 = inlined_call_operand.vmem [shape: bf16[3,128,64], index: 2, kind: input, shape index: {}]
  %s3 = inlined_call_operand.vmem [shape: bf16[3,64,64], index: 3, kind: input, shape index: {}]
  %s4 = inlined_call_operand.vmem [shape: f32[1,64], index: 4, kind: input, shape index: {}]
  %s5 = inlined_call_operand.vmem [shape: bf16[2,8,16,64], index: 5, kind: output, shape index: {}]
  %s6 = sld [smem:[#allocation0]]
  $region53: #{f_ext_forward.4} parent=0
    _
  %s8 = ssub.s32 1, %s6
  %s9 = scalar_select 0, %s8, %s6
  loop: start=0, step=1, limit=10
  $region2: #{f_ext_forward.4} parent=0 // loop_pre_header
    _
  $region3: #{f_ext_forward.4} parent=0 // loop_header
    %s11 = sphi 0, %s15
    %p12 = scmp.ge.s32.totalorder %s11, 10
    %s18 = sphi 0, %s30
    %s19 = sphi 0, %s26
    %s20 = sphi 0, %s18
    %s21 = sphi 0, %s19
    %s22 = sphi 0, %s20
    %s23 = sphi 0, %s21
    %s35 = sphi 0, %s37
    %s38 = sphi 0, %s35
    %s39 = sphi 0, %s38
    %s55 = sphi 0, %s39
    %s67 = sphi 0, %s69
    %s70 = sphi 0, %s67
    %s71 = sphi 0, %s70
    %s87 = sphi 0, %s71
    %s91 = sphi 0, %s91
    %s93 = sphi 0, %s91
    %s94 = sphi 0, %s93
    %s108 = sphi 0, %s94
    %s112 = sphi 0, %s112
    %s114 = sphi 0, %s112
    %s115 = sphi 0, %s114
    %s129 = sphi 0, %s115
    %s133 = sphi 0, %s133
    %s135 = sphi 0, %s133
    %s136 = sphi 0, %s135
    %s150 = sphi 0, %s136
    %s158 = sphi 0, %s160
    %s161 = sphi 0, %s158
    %s162 = sphi 0, %s161
    %s178 = sphi 0, %s162
  $region4: #{f_ext_forward.4} parent=0 // loop_header_branch
    %14 = sbr.rel (%p12) target = $region8
  $region5: #{f_ext_forward.4} parent=0 // loop_body
    %s16 = ssub.s32 %s11, 1
    %s17 = ssub.s32 %s11, 2
    %s24 = sadd.s32 1, %s19
    %p25 = scmp.ge.s32.totalorder %s24, 4
    %s26 = scalar_select %p25, 0, %s24
    %s27 = sadd.s32 1, %s18
    %s28 = scalar_select %p25, %s27, %s18
    %p29 = scmp.ge.s32.totalorder %s28, 2
    %s30 = scalar_select %p29, 0, %s28
    %s31 = ssub.s32 %s18, %s30
    %s32 = ssub.s32 %s19, %s26
    %s33 = sor.u32 %s31, %s32
    %p34 = scmp.eq.s32.totalorder %s33, 0
    %s36 = sadd.s32 %s35, 1
    %s37 = scalar_select %p34, %s35, %s36
    %p40 = pneg %p34
    %p41 = scmp.eq.s32.totalorder %s11, 7
    %p42 = por %p40, %p41
    %p43 = scmp.ne.s32.totalorder %s35, %s38
    %p44 = scmp.eq.s32.totalorder %s11, 0
    %p45 = por %p43, %p44
    %p46 = scmp.ne.s32.totalorder %s35, %s38
    %p47 = scmp.eq.s32.totalorder %s16, 7
    %p48 = por %p46, %p47
    %p49 = scmp.ne.s32.totalorder %s38, %s39
    %p50 = scmp.eq.s32.totalorder %s16, 0
    %p51 = por %p49, %p50
    %p52 = scmp.ne.s32.totalorder %s38, %s39
    %p53 = scmp.eq.s32.totalorder %s17, 7
    %p54 = por %p52, %p53
    %p56 = scmp.ne.s32.totalorder %s39, %s55
    %p57 = scmp.eq.s32.totalorder %s17, 0
    %p58 = por %p56, %p57
    %s59 = sadd.s32 %s19, 1
    %s60 = smul.u32 %s59, 4
    %s61 = sadd.s32 %s26, 1
    %s62 = smul.u32 %s61, 4
    %s63 = ssub.s32 %s18, %s30
    %s64 = ssub.s32 %s60, %s62
    %s65 = sor.u32 %s63, %s64
    %p66 = scmp.eq.s32.totalorder %s65, 0
    %s68 = sadd.s32 %s67, 1
    %s69 = scalar_select %p66, %s67, %s68
    %p72 = pneg %p66
    %p73 = scmp.eq.s32.totalorder %s11, 7
    %p74 = por %p72, %p73
    %p75 = scmp.ne.s32.totalorder %s67, %s70
    %p76 = scmp.eq.s32.totalorder %s11, 0
    %p77 = por %p75, %p76
    %p78 = scmp.ne.s32.totalorder %s67, %s70
    %p79 = scmp.eq.s32.totalorder %s16, 7
    %p80 = por %p78, %p79
    %p81 = scmp.ne.s32.totalorder %s70, %s71
    %p82 = scmp.eq.s32.totalorder %s16, 0
    %p83 = por %p81, %p82
    %p84 = scmp.ne.s32.totalorder %s70, %s71
    %p85 = scmp.eq.s32.totalorder %s17, 7
    %p86 = por %p84, %p85
    %p88 = scmp.ne.s32.totalorder %s71, %s87
    %p89 = scmp.eq.s32.totalorder %s17, 0
    %p90 = por %p88, %p89
    %s92 = sadd.s32 %s91, 1
    %p95 = scmp.eq.s32.totalorder %s11, 7
    %p96 = scmp.ne.s32.totalorder %s91, %s93
    %p97 = scmp.eq.s32.totalorder %s11, 0
    %p98 = por %p96, %p97
    %p99 = scmp.ne.s32.totalorder %s91, %s93
    %p100 = scmp.eq.s32.totalorder %s16, 7
    %p101 = por %p99, %p100
    %p102 = scmp.ne.s32.totalorder %s93, %s94
    %p103 = scmp.eq.s32.totalorder %s16, 0
    %p104 = por %p102, %p103
    %p105 = scmp.ne.s32.totalorder %s93, %s94
    %p106 = scmp.eq.s32.totalorder %s17, 7
    %p107 = por %p105, %p106
    %p109 = scmp.ne.s32.totalorder %s94, %s108
    %p110 = scmp.eq.s32.totalorder %s17, 0
    %p111 = por %p109, %p110
    %s113 = sadd.s32 %s112, 1
    %p116 = scmp.eq.s32.totalorder %s11, 7
    %p117 = scmp.ne.s32.totalorder %s112, %s114
    %p118 = scmp.eq.s32.totalorder %s11, 0
    %p119 = por %p117, %p118
    %p120 = scmp.ne.s32.totalorder %s112, %s114
    %p121 = scmp.eq.s32.totalorder %s16, 7
    %p122 = por %p120, %p121
    %p123 = scmp.ne.s32.totalorder %s114, %s115
    %p124 = scmp.eq.s32.totalorder %s16, 0
    %p125 = por %p123, %p124
    %p126 = scmp.ne.s32.totalorder %s114, %s115
    %p127 = scmp.eq.s32.totalorder %s17, 7
    %p128 = por %p126, %p127
    %p130 = scmp.ne.s32.totalorder %s115, %s129
    %p131 = scmp.eq.s32.totalorder %s17, 0
    %p132 = por %p130, %p131
    %s134 = sadd.s32 %s133, 1
    %p137 = scmp.eq.s32.totalorder %s11, 7
    %p138 = scmp.ne.s32.totalorder %s133, %s135
    %p139 = scmp.eq.s32.totalorder %s11, 0
    %p140 = por %p138, %p139
    %p141 = scmp.ne.s32.totalorder %s133, %s135
    %p142 = scmp.eq.s32.totalorder %s16, 7
    %p143 = por %p141, %p142
    %p144 = scmp.ne.s32.totalorder %s135, %s136
    %p145 = scmp.eq.s32.totalorder %s16, 0
    %p146 = por %p144, %p145
    %p147 = scmp.ne.s32.totalorder %s135, %s136
    %p148 = scmp.eq.s32.totalorder %s17, 7
    %p149 = por %p147, %p148
    %p151 = scmp.ne.s32.totalorder %s136, %s150
    %p152 = scmp.eq.s32.totalorder %s17, 0
    %p153 = por %p151, %p152
    %s154 = ssub.s32 %s18, %s30
    %s155 = ssub.s32 %s19, %s26
    %s156 = sor.u32 %s154, %s155
    %p157 = scmp.eq.s32.totalorder %s156, 0
    %s159 = sadd.s32 %s158, 1
    %s160 = scalar_select %p157, %s158, %s159
    %p163 = pneg %p157
    %p164 = scmp.eq.s32.totalorder %s11, 7
    %p165 = por %p163, %p164
    %p166 = scmp.ne.s32.totalorder %s158, %s161
    %p167 = scmp.eq.s32.totalorder %s11, 0
    %p168 = por %p166, %p167
    %p169 = scmp.ne.s32.totalorder %s158, %s161
    %p170 = scmp.eq.s32.totalorder %s16, 7
    %p171 = por %p169, %p170
    %p172 = scmp.ne.s32.totalorder %s161, %s162
    %p173 = scmp.eq.s32.totalorder %s16, 0
    %p174 = por %p172, %p173
    %p175 = scmp.ne.s32.totalorder %s161, %s162
    %p176 = scmp.eq.s32.totalorder %s17, 7
    %p177 = por %p175, %p176
    %p179 = scmp.ne.s32.totalorder %s162, %s178
    %p180 = scmp.eq.s32.totalorder %s17, 0
    %p181 = por %p179, %p180
    %p182 = scmp.le.s32.totalorder 1, %s11
    %p183 = scmp.lt.s32.totalorder %s11, 9
    %p184 = pnand %p182, %p183
    %p185 = pneg %p184
    // Predicated region
    $region9: #{f_ext_forward.4} parent=5 // pred_check
      _
    $region10: #{f_ext_forward.4} parent=5 // pred_check_branch
      %187 = sbr.rel (%p184) target = $region12
    $region11: #{f_ext_forward.4} parent=5 // pred_region
      %s188 = ssub.s32 %s11, 1
      // Predicated region
      $region13: #{f_ext_forward.4} parent=11 // pred_check
        %p189 = pneg %p104
      $region14: #{f_ext_forward.4} parent=11 // pred_check_branch
        %191 = sbr.rel (%p189) target = $region16
      $region15: #{f_ext_forward.4} parent=11 // pred_region
        _
      $region16: #{f_ext_forward.4} parent=11 // pred_fallthru
        _
      // Predicated region
      $region17: #{f_ext_forward.4} parent=11 // pred_check
        %p192 = pneg %p125
      $region18: #{f_ext_forward.4} parent=11 // pred_check_branch
        %194 = sbr.rel (%p192) target = $region20
      $region19: #{f_ext_forward.4} parent=11 // pred_region
        _
      $region20: #{f_ext_forward.4} parent=11 // pred_fallthru
        _
      // Predicated region
      $region21: #{f_ext_forward.4} parent=11 // pred_check
        %p195 = pneg %p146
      $region22: #{f_ext_forward.4} parent=11 // pred_check_branch
        %197 = sbr.rel (%p195) target = $region24
      $region23: #{f_ext_forward.4} parent=11 // pred_region
        _
      $region24: #{f_ext_forward.4} parent=11 // pred_fallthru
        _
    $region12: #{f_ext_forward.4} parent=5 // pred_fallthru
      _
    %p198 = scmp.lt.s32.totalorder %s11, 8
    // Predicated region
    $region25: #{f_ext_forward.4} parent=5 // pred_check
      %p199 = pneg %p198
    $region26: #{f_ext_forward.4} parent=5 // pred_check_branch
      %201 = sbr.rel (%p199) target = $region28
    $region27: #{f_ext_forward.4} parent=5 // pred_region
      // Predicated region
      $region29: #{f_ext_forward.4} parent=27 // pred_check
        %p202 = pneg %p45
      $region30: #{f_ext_forward.4} parent=27 // pred_check_branch
        %204 = sbr.rel (%p202) target = $region32
      $region31: #{f_ext_forward.4} parent=27 // pred_region
        %s205 = smul.u32 4, %s19
        %s206 = ssub.s32 18, %s205
        %p207 = scmp.lt.s32.totalorder %s206, 4
        %s208 = scalar_select %p207, %s206, 4
        %s209 = smul.u32 64, %s208
        %s210 = smul.u32 %s209, 3
        %p211 = scmp.lt.s32.totalorder %s18, 1
        %s212 = scalar_select %p211, %s18, 1
        %p213 = scmp.lt.s32.totalorder %s205, 17
        %s214 = scalar_select %p213, %s205, 17
        %s215 = smul.addr %s214, 3
        %s216 = smul.addr %s212, 54
        %s217 = sadd.s32 %s215, %s216
        %s218 = smul.addr %s217, 4
        %s219 = scalar_lea.vmem %s0, %s218
        %s220 = smul.u32 4, %s19
        %s221 = ssub.s32 18, %s220
        %p222 = scmp.lt.s32.totalorder %s221, 4
        %s223 = scalar_select %p222, %s221, 4
        %s224 = smul.u32 64, %s223
        %s225 = smul.u32 %s224, 3
      $region32: #{f_ext_forward.4} parent=27 // pred_fallthru
        _
      // Predicated region
      $region33: #{f_ext_forward.4} parent=27 // pred_check
        %p226 = pneg %p77
      $region34: #{f_ext_forward.4} parent=27 // pred_check_branch
        %228 = sbr.rel (%p226) target = $region36
      $region35: #{f_ext_forward.4} parent=27 // pred_region
        %s229 = sadd.s32 %s19, 1
        %s230 = smul.u32 %s229, 4
        %p231 = scmp.lt.s32.totalorder %s18, 1
        %s232 = scalar_select %p231, %s18, 1
        %p233 = scmp.lt.s32.totalorder %s230, 17
        %s234 = scalar_select %p233, %s230, 17
        %s235 = smul.addr %s234, 3
        %s236 = smul.addr %s232, 54
        %s237 = sadd.s32 %s235, %s236
        %s238 = smul.addr %s237, 4
        %s239 = scalar_lea.vmem %s1, %s238
        %s240 = sadd.s32 %s19, 1
        %s241 = smul.u32 %s240, 4
      $region36: #{f_ext_forward.4} parent=27 // pred_fallthru
        _
    $region28: #{f_ext_forward.4} parent=5 // pred_fallthru
      _
    %p242 = scmp.le.s32.totalorder 1, %s11
    %p243 = scmp.lt.s32.totalorder %s11, 9
    %p244 = pnand %p242, %p243
    %p245 = pneg %p244
    // Predicated region
    $region37: #{f_ext_forward.4} parent=5 // pred_check
      _
    $region38: #{f_ext_forward.4} parent=5 // pred_check_branch
      %247 = sbr.rel (%p244) target = $region40
    $region39: #{f_ext_forward.4} parent=5 // pred_region
      %s248 = ssub.s32 %s11, 1
      %s249 = smul.u32 4, %s21
      %s250 = ssub.s32 18, %s249
      %p251 = scmp.lt.s32.totalorder %s250, 4
      %s252 = scalar_select %p251, %s250, 4
      %s253 = smul.u32 64, %s252
      %s254 = smul.u32 %s253, 3
      %p255 = scmp.lt.s32.totalorder %s20, 1
      %s256 = scalar_select %p255, %s20, 1
      %p257 = scmp.lt.s32.totalorder %s249, 17
      %s258 = scalar_select %p257, %s249, 17
      %s259 = smul.addr %s258, 3
      %s260 = smul.addr %s256, 54
      %s261 = sadd.s32 %s259, %s260
      %s262 = smul.addr %s261, 4
      %s263 = scalar_lea.vmem %s0, %s262
      %p264 = pneg %p51
      %p265 = pneg %p48
      %s266 = sadd.s32 %s21, 1
      %s267 = smul.u32 %s266, 4
      %p268 = scmp.lt.s32.totalorder %s20, 1
      %s269 = scalar_select %p268, %s20, 1
      %p270 = scmp.lt.s32.totalorder %s267, 17
      %s271 = scalar_select %p270, %s267, 17
      %s272 = smul.addr %s271, 3
      %s273 = smul.addr %s269, 54
      %s274 = sadd.s32 %s272, %s273
      %s275 = smul.addr %s274, 4
      %s276 = scalar_lea.vmem %s1, %s275
      %p277 = pneg %p83
      %p278 = pneg %p80
      %p279 = pneg %p104
      %p280 = pneg %p101
      %p281 = pneg %p125
      %p282 = pneg %p122
      %p283 = pneg %p146
      %p284 = pneg %p143
      %p285 = pneg %p174
      %p286 = pneg %p171
      %s287 = smul.u32 2, %s21
      %p288 = scmp.lt.s32.totalorder %s20, 1
      %s289 = scalar_select %p288, %s20, 1
      %p290 = scmp.lt.s32.totalorder %s287, 7
      %s291 = scalar_select %p290, %s287, 7
      %s292 = smul.addr %s291, 2
      %s293 = smul.addr %s289, 16
      %s294 = sadd.s32 %s292, %s293
      %s295 = smul.addr %s294, 4
      %s296 = scalar_lea.vmem %s5, %s295
      %s297 = smul.u32 4, %s21
      %s298 = ssub.s32 18, %s297
      %p299 = scmp.lt.s32.totalorder %s298, 4
      %s300 = scalar_select %p299, %s298, 4
      %s301 = smul.u32 64, %s300
      %s302 = smul.u32 %s301, 3
      %p303 = scmp.lt.s32.totalorder %s20, 1
      %s304 = scalar_select %p303, %s20, 1
      %p305 = scmp.lt.s32.totalorder %s297, 17
      %s306 = scalar_select %p305, %s297, 17
      %s307 = smul.addr %s306, 3
      %s308 = smul.addr %s304, 54
      %s309 = sadd.s32 %s307, %s308
      %s310 = smul.addr %s309, 4
      %s311 = scalar_lea.vmem %s0, %s310
      %s312 = smul.u32 4, %s21
      %s313 = ssub.s32 18, %s312
      %p314 = scmp.lt.s32.totalorder %s313, 4
      %s315 = scalar_select %p314, %s313, 4
      %s316 = smul.u32 64, %s315
      %s317 = smul.u32 %s316, 3
      %s318 = sadd.s32 %s21, 1
      %s319 = smul.u32 %s318, 4
      %p320 = scmp.lt.s32.totalorder %s20, 1
      %s321 = scalar_select %p320, %s20, 1
      %p322 = scmp.lt.s32.totalorder %s319, 17
      %s323 = scalar_select %p322, %s319, 17
      %s324 = smul.addr %s323, 3
      %s325 = smul.addr %s321, 54
      %s326 = sadd.s32 %s324, %s325
      %s327 = smul.addr %s326, 4
      %s328 = scalar_lea.vmem %s1, %s327
      %s329 = sadd.s32 %s21, 1
      %s330 = smul.u32 %s329, 4
      %s331 = smul.u32 2, %s21
      %p332 = scmp.lt.s32.totalorder %s20, 1
      %s333 = scalar_select %p332, %s20, 1
      %p334 = scmp.lt.s32.totalorder %s331, 7
      %s335 = scalar_select %p334, %s331, 7
      %s336 = smul.addr %s335, 2
      %s337 = smul.addr %s333, 16
      %s338 = sadd.s32 %s336, %s337
      %s339 = smul.addr %s338, 4
      %s340 = scalar_lea.vmem %s5, %s339
      %s341 = smul.u32 2, %s21
      %v343 = vld [vmem:[%s311] sm:$0xf]
      %v344 = vld [vmem:[%s311 + $0x4] sm:$0xf]
      %v345 = vld [vmem:[%s311 + $0x8] sm:$0x1]
      %v346 = vld [vmem:[%s311 + $0xc] sm:$0xf]
      %v347 = vld [vmem:[%s311 + $0x10] sm:$0xf]
      %v348 = vld [vmem:[%s311 + $0x14] sm:$0x1]
      %v349 = vld [vmem:[%s311 + $0x18] sm:$0xf]
      %v350 = vld [vmem:[%s311 + $0x1c] sm:$0xf]
      %v351 = vld [vmem:[%s311 + $0x20] sm:$0x1]
      %v352 = vld [vmem:[%s311 + $0x24] sm:$0xf]
      %v353 = vld [vmem:[%s311 + $0x28] sm:$0xf]
      %v354 = vld [vmem:[%s311 + $0x2c] sm:$0x1]
      %v355 = vld [vmem:[%s328] sm:$0xf]
      %v356 = vld [vmem:[%s328 + $0x4] sm:$0xf]
      %v357 = vld [vmem:[%s328 + $0x8] sm:$0x1]
      %vm358 = vsmask.f32 3328
      %vm359 = vsmask.f32 7440
      %vm360 = vmor %vm358, %vm359
      %v362 = vshrl.u32 %v343, 16
      %v364 = vrot.slane %v362, 4
      %v365 = vshll.u32 %v343, 16
      %v367 = vrot.slane %v365, 5
      %v368 = vor.u32 %v364, %v367
      %v369 = vrot.slane %v368, 4
      %v371 = vshll.u32 %v344, 16
      %v373 = vrot.slane %v371, 5
      %v374 = vsel %vm360, %v369, %v373
      %v375 = vshrl.u32 %v344, 16
      %v377 = vrot.slane %v375, 4
      %v378 = vor.u32 %v377, %v373
      %v379 = vrot.slane %v378, 4
      %v381 = vshll.u32 %v345, 16
      %v383 = vrot.slane %v381, 5
      %v384 = vsel %vm360, %v379, %v383
      %v386 = vshrl.u32 %v349, 16
      %v388 = vrot.slane %v386, 4
      %v389 = vshll.u32 %v349, 16
      %v391 = vrot.slane %v389, 5
      %v392 = vor.u32 %v388, %v391
      %v393 = vrot.slane %v392, 4
      %v395 = vshll.u32 %v350, 16
      %v397 = vrot.slane %v395, 5
      %v398 = vsel %vm360, %v393, %v397
      %v399 = vshrl.u32 %v350, 16
      %v401 = vrot.slane %v399, 4
      %v402 = vor.u32 %v401, %v397
      %v403 = vrot.slane %v402, 4
      %v405 = vshll.u32 %v351, 16
      %v407 = vrot.slane %v405, 5
      %v408 = vsel %vm360, %v403, %v407
      %v409 = vld [vmem:[%s2] sm:$0xf]
      %v410 = vld [vmem:[%s2 + $0x4] sm:$0xf]
      %v411 = vld [vmem:[%s2 + $0x8] sm:$0xf]
      %v412 = vld [vmem:[%s2 + $0xc] sm:$0xf]
      %v413 = vld [vmem:[%s2 + $0x10] sm:$0xf]
      %v414 = vld [vmem:[%s2 + $0x14] sm:$0xf]
      %v415 = vld [vmem:[%s2 + $0x18] sm:$0xf]
      %v416 = vld [vmem:[%s2 + $0x1c] sm:$0xf]
      %v417 = vld [vmem:[%s2 + $0x20] sm:$0xf]
      %v418 = vld [vmem:[%s2 + $0x24] sm:$0xf]
      %v419 = vld [vmem:[%s2 + $0x28] sm:$0xf]
      %v420 = vld [vmem:[%s2 + $0x2c] sm:$0xf]
      %v421 = vld [vmem:[%s2 + $0x30] sm:$0xf]
      %v422 = vld [vmem:[%s2 + $0x34] sm:$0xf]
      %v423 = vld [vmem:[%s2 + $0x38] sm:$0xf]
      %v424 = vld [vmem:[%s2 + $0x3c] sm:$0xf]
      %v425 = vld [vmem:[%s3] sm:$0xf]
      %v426 = vld [vmem:[%s3 + $0x4] sm:$0xf]
      %v427 = vld [vmem:[%s3 + $0x8] sm:$0xf]
      %v428 = vld [vmem:[%s3 + $0xc] sm:$0xf]
      %v429 = vld [vmem:[%s3 + $0x10] sm:$0xf]
      %v430 = vld [vmem:[%s3 + $0x14] sm:$0xf]
      %v431 = vld [vmem:[%s3 + $0x18] sm:$0xf]
      %v432 = vld [vmem:[%s3 + $0x1c] sm:$0xf]
      %v433 = vunpack.c.l.b16 %v374
      %v434 = vunpack.c.l.b16 %v384
      %v435 = vunpack.c.l.b16 %v398
      %v436 = vunpack.c.l.b16 %v408
      %v437 = vpack.c.b16 %v434, %v433
      %v438 = vpack.c.b16 %v436, %v435
      %v447 = vunpack.c.l.b16 %v425
      %v448 = vunpack.c.l.b16 %v426
      %v449 = vunpack.c.l.b16 %v427
      %v450 = vunpack.c.l.b16 %v428
      %v451 = vunpack.c.l.b16 %v429
      %v452 = vunpack.c.l.b16 %v430
      %v453 = vunpack.c.l.b16 %v431
      %v454 = vunpack.c.l.b16 %v432
      %v455 = vpack.c.b16 %v448, %v447
      %v456 = vpack.c.b16 %v450, %v449
      %v457 = vpack.c.b16 %v452, %v451
      %v458 = vpack.c.b16 %v454, %v453
      %vm463 = vcmask 523264
      %v465 = vsel %vm463, %v437, 0
      %v468 = vsel %vm463, %v438, 0
      %470 = vmatprep.subr.bf16.mxu0 0
      %471 = vmatpush1.bf16.msra.mxu0 %v455
      %472 = vmatprep.subr.bf16.mxu0 0
      %473 = vmatpush1.bf16.msra.mxu0 %v456
      %474 = vmatprep.subr.bf16.mxu0 0
      %475 = vmatpush1.bf16.msra.mxu0 %v457
      %476 = vmatprep.subr.bf16.mxu0 0
      %477 = vmatpush1.bf16.msra.mxu0 %v458
      %478 = vmatprep.subr.bf16.mxu0 0
      %479 = vmatpush1.bf16.msra.mxu0 0
      %480 = vmatprep.subr.bf16.mxu0 0
      %481 = vmatpush1.bf16.msra.mxu0 0
      %482 = vmatprep.subr.bf16.mxu0 0
      %483 = vmatpush1.bf16.msra.mxu0 0
      %484 = vmatprep.subr.bf16.mxu0 0
      %485 = vmatpush1.bf16.msra.mxu0 0
      %486 = vmatprep.subr.bf16.mxu0 0
      %487 = vmatpush1.bf16.msra.mxu0 0
      %488 = vmatprep.subr.bf16.mxu0 0
      %489 = vmatpush1.bf16.msra.mxu0 0
      %490 = vmatprep.subr.bf16.mxu0 0
      %491 = vmatpush1.bf16.msra.mxu0 0
      %492 = vmatprep.subr.bf16.mxu0 0
      %493 = vmatpush1.bf16.msra.mxu0 0
      %494 = vmatprep.subr.bf16.mxu0 0
      %495 = vmatpush1.bf16.msra.mxu0 0
      %496 = vmatprep.subr.bf16.mxu0 0
      %497 = vmatpush1.bf16.msra.mxu0 0
      %498 = vmatprep.subr.bf16.mxu0 0
      %499 = vmatpush1.bf16.msra.mxu0 0
      %500 = vmatprep.subr.bf16.mxu0 0
      %501 = vmatpush1.bf16.msra.mxu0 0
      %502 = vmatprep.mubr.bf16.mxu0 0
      %503 = vmatmul.mubr.bf16.gmra.mrb[0].mxu0 %v465
      %v504 = vpop.f32.mrb[0].mxu0
      %v505 = vadd.f32 0.0, %v504
      %v506 = vpop.f32.mrb[0].mxu0
      %v507 = vpop.f32.mrb[0].mxu0
      %v508 = vadd.f32 0.0, %v507
      %v509 = vpop.f32.mrb[0].mxu0
      %510 = vmatprep.mubr.bf16.mxu0 0
      %511 = vmatmul.mubr.bf16.gmra.mrb[0].mxu0 %v468
      %v512 = vpop.f32.mrb[0].mxu0
      %v513 = vadd.f32 0.0, %v512
      %v514 = vpop.f32.mrb[0].mxu0
      %v515 = vpop.f32.mrb[0].mxu0
      %v516 = vadd.f32 0.0, %v515
      %v517 = vpop.f32.mrb[0].mxu0
      %518 = vdwg.mxu0
      %v523 = vunpack.c.l.b16 %v343
      %v524 = vunpack.c.l.b16 %v344
      %v525 = vunpack.c.l.b16 %v349
      %v526 = vunpack.c.l.b16 %v350
      %v527 = vpack.c.b16 %v524, %v523
      %v528 = vpack.c.b16 %v526, %v525
      %v547 = vunpack.c.l.b16 %v409
      %v548 = vunpack.c.l.b16 %v410
      %v549 = vunpack.c.l.b16 %v411
      %v550 = vunpack.c.l.b16 %v412
      %v551 = vunpack.c.l.b16 %v413
      %v552 = vunpack.c.l.b16 %v414
      %v553 = vunpack.c.l.b16 %v415
      %v554 = vunpack.c.l.b16 %v416
      %v555 = vunpack.c.l.b16 %v417
      %v556 = vunpack.c.l.b16 %v418
      %v557 = vunpack.c.l.b16 %v419
      %v558 = vunpack.c.l.b16 %v420
      %v559 = vunpack.c.l.b16 %v421
      %v560 = vunpack.c.l.b16 %v422
      %v561 = vunpack.c.l.b16 %v423
      %v562 = vunpack.c.l.b16 %v424
      %v563 = vpack.c.b16 %v548, %v547
      %v564 = vpack.c.b16 %v550, %v549
      %v565 = vpack.c.b16 %v552, %v551
      %v566 = vpack.c.b16 %v554, %v553
      %v567 = vpack.c.b16 %v556, %v555
      %v568 = vpack.c.b16 %v558, %v557
      %v569 = vpack.c.b16 %v560, %v559
      %v570 = vpack.c.b16 %v562, %v561
      %579 = vmatprep.subr.bf16.mxu0 0
      %580 = vmatpush1.bf16.msra.mxu0 %v563
      %581 = vmatprep.subr.bf16.mxu0 0
      %582 = vmatpush1.bf16.msra.mxu0 %v564
      %583 = vmatprep.subr.bf16.mxu0 0
      %584 = vmatpush1.bf16.msra.mxu0 %v565
      %585 = vmatprep.subr.bf16.mxu0 0
      %586 = vmatpush1.bf16.msra.mxu0 %v566
      %587 = vmatprep.subr.bf16.mxu0 0
      %588 = vmatpush1.bf16.msra.mxu0 %v567
      %589 = vmatprep.subr.bf16.mxu0 0
      %590 = vmatpush1.bf16.msra.mxu0 %v568
      %591 = vmatprep.subr.bf16.mxu0 0
      %592 = vmatpush1.bf16.msra.mxu0 %v569
      %593 = vmatprep.subr.bf16.mxu0 0
      %594 = vmatpush1.bf16.msra.mxu0 %v570
      %595 = vmatprep.subr.bf16.mxu0 0
      %596 = vmatpush1.bf16.msra.mxu0 0
      %597 = vmatprep.subr.bf16.mxu0 0
      %598 = vmatpush1.bf16.msra.mxu0 0
      %599 = vmatprep.subr.bf16.mxu0 0
      %600 = vmatpush1.bf16.msra.mxu0 0
      %601 = vmatprep.subr.bf16.mxu0 0
      %602 = vmatpush1.bf16.msra.mxu0 0
      %603 = vmatprep.subr.bf16.mxu0 0
      %604 = vmatpush1.bf16.msra.mxu0 0
      %605 = vmatprep.subr.bf16.mxu0 0
      %606 = vmatpush1.bf16.msra.mxu0 0
      %607 = vmatprep.subr.bf16.mxu0 0
      %608 = vmatpush1.bf16.msra.mxu0 0
      %609 = vmatprep.subr.bf16.mxu0 0
      %610 = vmatpush1.bf16.msra.mxu0 0
      %611 = vmatprep.mubr.bf16.mxu0 0
      %612 = vmatmul.mubr.bf16.gmra.mrb[0].mxu0 %v527
      %v613 = vpop.f32.mrb[0].mxu0
      %v614 = vadd.f32 %v505, %v613
      %v615 = vpop.f32.mrb[0].mxu0
      %v616 = vpop.f32.mrb[0].mxu0
      %v617 = vadd.f32 %v508, %v616
      %v618 = vpop.f32.mrb[0].mxu0
      %619 = vmatprep.mubr.bf16.mxu0 0
      %620 = vmatmul.mubr.bf16.gmra.mrb[0].mxu0 %v528
      %v621 = vpop.f32.mrb[0].mxu0
      %v622 = vadd.f32 %v513, %v621
      %v623 = vpop.f32.mrb[0].mxu0
      %v624 = vpop.f32.mrb[0].mxu0
      %v625 = vadd.f32 %v516, %v624
      %v626 = vpop.f32.mrb[0].mxu0
      %627 = vdwg.mxu0
      %v629 = vshrl.u32 %v346, 16
      %v631 = vrot.slane %v629, 4
      %v632 = vshll.u32 %v346, 16
      %v634 = vrot.slane %v632, 5
      %v635 = vor.u32 %v631, %v634
      %v636 = vrot.slane %v635, 4
      %v638 = vshll.u32 %v347, 16
      %v640 = vrot.slane %v638, 5
      %v641 = vsel %vm360, %v636, %v640
      %v642 = vshrl.u32 %v347, 16
      %v644 = vrot.slane %v642, 4
      %v645 = vor.u32 %v644, %v640
      %v646 = vrot.slane %v645, 4
      %v648 = vshll.u32 %v348, 16
      %v650 = vrot.slane %v648, 5
      %v651 = vsel %vm360, %v646, %v650
      %v653 = vshrl.u32 %v352, 16
      %v655 = vrot.slane %v653, 4
      %v656 = vshll.u32 %v352, 16
      %v658 = vrot.slane %v656, 5
      %v659 = vor.u32 %v655, %v658
      %v660 = vrot.slane %v659, 4
      %v662 = vshll.u32 %v353, 16
      %v664 = vrot.slane %v662, 5
      %v665 = vsel %vm360, %v660, %v664
      %v666 = vshrl.u32 %v353, 16
      %v668 = vrot.slane %v666, 4
      %v669 = vor.u32 %v668, %v664
      %v670 = vrot.slane %v669, 4
      %v672 = vshll.u32 %v354, 16
      %v674 = vrot.slane %v672, 5
      %v675 = vsel %vm360, %v670, %v674
      %s676 = scalar_lea.vmem %s2, 64
      %v677 = vld [vmem:[%s676] sm:$0xf]
      %v678 = vld [vmem:[%s676 + $0x4] sm:$0xf]
      %v679 = vld [vmem:[%s676 + $0x8] sm:$0xf]
      %v680 = vld [vmem:[%s676 + $0xc] sm:$0xf]
      %v681 = vld [vmem:[%s676 + $0x10] sm:$0xf]
      %v682 = vld [vmem:[%s676 + $0x14] sm:$0xf]
      %v683 = vld [vmem:[%s676 + $0x18] sm:$0xf]
      %v684 = vld [vmem:[%s676 + $0x1c] sm:$0xf]
      %v685 = vld [vmem:[%s676 + $0x20] sm:$0xf]
      %v686 = vld [vmem:[%s676 + $0x24] sm:$0xf]
      %v687 = vld [vmem:[%s676 + $0x28] sm:$0xf]
      %v688 = vld [vmem:[%s676 + $0x2c] sm:$0xf]
      %v689 = vld [vmem:[%s676 + $0x30] sm:$0xf]
      %v690 = vld [vmem:[%s676 + $0x34] sm:$0xf]
      %v691 = vld [vmem:[%s676 + $0x38] sm:$0xf]
      %v692 = vld [vmem:[%s676 + $0x3c] sm:$0xf]
      %v697 = vunpack.c.l.b16 %v346
      %v698 = vunpack.c.l.b16 %v347
      %v699 = vunpack.c.l.b16 %v352
      %v700 = vunpack.c.l.b16 %v353
      %v701 = vpack.c.b16 %v698, %v697
      %v702 = vpack.c.b16 %v700, %v699
      %v721 = vunpack.c.l.b16 %v677
      %v722 = vunpack.c.l.b16 %v678
      %v723 = vunpack.c.l.b16 %v679
      %v724 = vunpack.c.l.b16 %v680
      %v725 = vunpack.c.l.b16 %v681
      %v726 = vunpack.c.l.b16 %v682
      %v727 = vunpack.c.l.b16 %v683
      %v728 = vunpack.c.l.b16 %v684
      %v729 = vunpack.c.l.b16 %v685
      %v730 = vunpack.c.l.b16 %v686
      %v731 = vunpack.c.l.b16 %v687
      %v732 = vunpack.c.l.b16 %v688
      %v733 = vunpack.c.l.b16 %v689
      %v734 = vunpack.c.l.b16 %v690
      %v735 = vunpack.c.l.b16 %v691
      %v736 = vunpack.c.l.b16 %v692
      %v737 = vpack.c.b16 %v722, %v721
      %v738 = vpack.c.b16 %v724, %v723
      %v739 = vpack.c.b16 %v726, %v725
      %v740 = vpack.c.b16 %v728, %v727
      %v741 = vpack.c.b16 %v730, %v729
      %v742 = vpack.c.b16 %v732, %v731
      %v743 = vpack.c.b16 %v734, %v733
      %v744 = vpack.c.b16 %v736, %v735
      %753 = vmatprep.subr.bf16.mxu0 0
      %754 = vmatpush1.bf16.msra.mxu0 %v737
      %755 = vmatprep.subr.bf16.mxu0 0
      %756 = vmatpush1.bf16.msra.mxu0 %v738
      %757 = vmatprep.subr.bf16.mxu0 0
      %758 = vmatpush1.bf16.msra.mxu0 %v739
      %759 = vmatprep.subr.bf16.mxu0 0
      %760 = vmatpush1.bf16.msra.mxu0 %v740
      %761 = vmatprep.subr.bf16.mxu0 0
      %762 = vmatpush1.bf16.msra.mxu0 %v741
      %763 = vmatprep.subr.bf16.mxu0 0
      %764 = vmatpush1.bf16.msra.mxu0 %v742
      %765 = vmatprep.subr.bf16.mxu0 0
      %766 = vmatpush1.bf16.msra.mxu0 %v743
      %767 = vmatprep.subr.bf16.mxu0 0
      %768 = vmatpush1.bf16.msra.mxu0 %v744
      %769 = vmatprep.subr.bf16.mxu0 0
      %770 = vmatpush1.bf16.msra.mxu0 0
      %771 = vmatprep.subr.bf16.mxu0 0
      %772 = vmatpush1.bf16.msra.mxu0 0
      %773 = vmatprep.subr.bf16.mxu0 0
      %774 = vmatpush1.bf16.msra.mxu0 0
      %775 = vmatprep.subr.bf16.mxu0 0
      %776 = vmatpush1.bf16.msra.mxu0 0
      %777 = vmatprep.subr.bf16.mxu0 0
      %778 = vmatpush1.bf16.msra.mxu0 0
      %779 = vmatprep.subr.bf16.mxu0 0
      %780 = vmatpush1.bf16.msra.mxu0 0
      %781 = vmatprep.subr.bf16.mxu0 0
      %782 = vmatpush1.bf16.msra.mxu0 0
      %783 = vmatprep.subr.bf16.mxu0 0
      %784 = vmatpush1.bf16.msra.mxu0 0
      %785 = vmatprep.mubr.bf16.mxu0 0
      %786 = vmatmul.mubr.bf16.gmra.mrb[0].mxu0 %v701
      %v787 = vpop.f32.mrb[0].mxu0
      %v788 = vadd.f32 0.0, %v787
      %v789 = vpop.f32.mrb[0].mxu0
      %v790 = vpop.f32.mrb[0].mxu0
      %v791 = vadd.f32 0.0, %v790
      %v792 = vpop.f32.mrb[0].mxu0
      %793 = vmatprep.mubr.bf16.mxu0 0
      %794 = vmatmul.mubr.bf16.gmra.mrb[0].mxu0 %v702
      %v795 = vpop.f32.mrb[0].mxu0
      %v796 = vadd.f32 0.0, %v795
      %v797 = vpop.f32.mrb[0].mxu0
      %v798 = vpop.f32.mrb[0].mxu0
      %v799 = vadd.f32 0.0, %v798
      %v800 = vpop.f32.mrb[0].mxu0
      %801 = vdwg.mxu0
      %v802 = vadd.f32 %v614, %v788
      %v803 = vadd.f32 %v617, %v791
      %v804 = vadd.f32 %v622, %v796
      %v805 = vadd.f32 %v625, %v799
      %s806 = scalar_lea.vmem %s3, 32
      %v807 = vld [vmem:[%s806] sm:$0xf]
      %v808 = vld [vmem:[%s806 + $0x4] sm:$0xf]
      %v809 = vld [vmem:[%s806 + $0x8] sm:$0xf]
      %v810 = vld [vmem:[%s806 + $0xc] sm:$0xf]
      %v811 = vld [vmem:[%s806 + $0x10] sm:$0xf]
      %v812 = vld [vmem:[%s806 + $0x14] sm:$0xf]
      %v813 = vld [vmem:[%s806 + $0x18] sm:$0xf]
      %v814 = vld [vmem:[%s806 + $0x1c] sm:$0xf]
      %v815 = vunpack.c.l.b16 %v641
      %v816 = vunpack.c.l.b16 %v651
      %v817 = vunpack.c.l.b16 %v665
      %v818 = vunpack.c.l.b16 %v675
      %v819 = vpack.c.b16 %v816, %v815
      %v820 = vpack.c.b16 %v818, %v817
      %v829 = vunpack.c.l.b16 %v807
      %v830 = vunpack.c.l.b16 %v808
      %v831 = vunpack.c.l.b16 %v809
      %v832 = vunpack.c.l.b16 %v810
      %v833 = vunpack.c.l.b16 %v811
      %v834 = vunpack.c.l.b16 %v812
      %v835 = vunpack.c.l.b16 %v813
      %v836 = vunpack.c.l.b16 %v814
      %v837 = vpack.c.b16 %v830, %v829
      %v838 = vpack.c.b16 %v832, %v831
      %v839 = vpack.c.b16 %v834, %v833
      %v840 = vpack.c.b16 %v836, %v835
      %v846 = vsel %vm463, %v819, 0
      %v849 = vsel %vm463, %v820, 0
      %851 = vmatprep.subr.bf16.mxu0 0
      %852 = vmatpush1.bf16.msra.mxu0 %v837
      %853 = vmatprep.subr.bf16.mxu0 0
      %854 = vmatpush1.bf16.msra.mxu0 %v838
      %855 = vmatprep.subr.bf16.mxu0 0
      %856 = vmatpush1.bf16.msra.mxu0 %v839
      %857 = vmatprep.subr.bf16.mxu0 0
      %858 = vmatpush1.bf16.msra.mxu0 %v840
      %859 = vmatprep.subr.bf16.mxu0 0
      %860 = vmatpush1.bf16.msra.mxu0 0
      %861 = vmatprep.subr.bf16.mxu0 0
      %862 = vmatpush1.bf16.msra.mxu0 0
      %863 = vmatprep.subr.bf16.mxu0 0
      %864 = vmatpush1.bf16.msra.mxu0 0
      %865 = vmatprep.subr.bf16.mxu0 0
      %866 = vmatpush1.bf16.msra.mxu0 0
      %867 = vmatprep.subr.bf16.mxu0 0
      %868 = vmatpush1.bf16.msra.mxu0 0
      %869 = vmatprep.subr.bf16.mxu0 0
      %870 = vmatpush1.bf16.msra.mxu0 0
      %871 = vmatprep.subr.bf16.mxu0 0
      %872 = vmatpush1.bf16.msra.mxu0 0
      %873 = vmatprep.subr.bf16.mxu0 0
      %874 = vmatpush1.bf16.msra.mxu0 0
      %875 = vmatprep.subr.bf16.mxu0 0
      %876 = vmatpush1.bf16.msra.mxu0 0
      %877 = vmatprep.subr.bf16.mxu0 0
      %878 = vmatpush1.bf16.msra.mxu0 0
      %879 = vmatprep.subr.bf16.mxu0 0
      %880 = vmatpush1.bf16.msra.mxu0 0
      %881 = vmatprep.subr.bf16.mxu0 0
      %882 = vmatpush1.bf16.msra.mxu0 0
      %883 = vmatprep.mubr.bf16.mxu0 0
      %884 = vmatmul.mubr.bf16.gmra.mrb[0].mxu0 %v846
      %v885 = vpop.f32.mrb[0].mxu0
      %v886 = vadd.f32 0.0, %v885
      %v887 = vpop.f32.mrb[0].mxu0
      %v888 = vpop.f32.mrb[0].mxu0
      %v889 = vadd.f32 0.0, %v888
      %v890 = vpop.f32.mrb[0].mxu0
      %891 = vmatprep.mubr.bf16.mxu0 0
      %892 = vmatmul.mubr.bf16.gmra.mrb[0].mxu0 %v849
      %v893 = vpop.f32.mrb[0].mxu0
      %v894 = vadd.f32 0.0, %v893
      %v895 = vpop.f32.mrb[0].mxu0
      %v896 = vpop.f32.mrb[0].mxu0
      %v897 = vadd.f32 0.0, %v896
      %v898 = vpop.f32.mrb[0].mxu0
      %899 = vdwg.mxu0
      %v900 = vadd.f32 %v802, %v886
      %v901 = vadd.f32 %v803, %v889
      %v902 = vadd.f32 %v804, %v894
      %v903 = vadd.f32 %v805, %v897
      %v905 = vshrl.u32 %v355, 16
      %v907 = vrot.slane %v905, 4
      %v908 = vshll.u32 %v355, 16
      %v910 = vrot.slane %v908, 5
      %v911 = vor.u32 %v907, %v910
      %v912 = vrot.slane %v911, 4
      %v914 = vshll.u32 %v356, 16
      %v916 = vrot.slane %v914, 5
      %v917 = vsel %vm360, %v912, %v916
      %v918 = vshrl.u32 %v356, 16
      %v920 = vrot.slane %v918, 4
      %v921 = vor.u32 %v920, %v916
      %v922 = vrot.slane %v921, 4
      %v924 = vshll.u32 %v357, 16
      %v926 = vrot.slane %v924, 5
      %v927 = vsel %vm360, %v922, %v926
      %s928 = scalar_lea.vmem %s2, 128
      %v929 = vld [vmem:[%s928] sm:$0xf]
      %v930 = vld [vmem:[%s928 + $0x4] sm:$0xf]
      %v931 = vld [vmem:[%s928 + $0x8] sm:$0xf]
      %v932 = vld [vmem:[%s928 + $0xc] sm:$0xf]
      %v933 = vld [vmem:[%s928 + $0x10] sm:$0xf]
      %v934 = vld [vmem:[%s928 + $0x14] sm:$0xf]
      %v935 = vld [vmem:[%s928 + $0x18] sm:$0xf]
      %v936 = vld [vmem:[%s928 + $0x1c] sm:$0xf]
      %v937 = vld [vmem:[%s928 + $0x20] sm:$0xf]
      %v938 = vld [vmem:[%s928 + $0x24] sm:$0xf]
      %v939 = vld [vmem:[%s928 + $0x28] sm:$0xf]
      %v940 = vld [vmem:[%s928 + $0x2c] sm:$0xf]
      %v941 = vld [vmem:[%s928 + $0x30] sm:$0xf]
      %v942 = vld [vmem:[%s928 + $0x34] sm:$0xf]
      %v943 = vld [vmem:[%s928 + $0x38] sm:$0xf]
      %v944 = vld [vmem:[%s928 + $0x3c] sm:$0xf]
      %v947 = vunpack.c.l.b16 %v355
      %v948 = vunpack.c.l.b16 %v356
      %v949 = vpack.c.b16 %v948, %v947
      %v967 = vunpack.c.l.b16 %v929
      %v968 = vunpack.c.l.b16 %v930
      %v969 = vunpack.c.l.b16 %v931
      %v970 = vunpack.c.l.b16 %v932
      %v971 = vunpack.c.l.b16 %v933
      %v972 = vunpack.c.l.b16 %v934
      %v973 = vunpack.c.l.b16 %v935
      %v974 = vunpack.c.l.b16 %v936
      %v975 = vunpack.c.l.b16 %v937
      %v976 = vunpack.c.l.b16 %v938
      %v977 = vunpack.c.l.b16 %v939
      %v978 = vunpack.c.l.b16 %v940
      %v979 = vunpack.c.l.b16 %v941
      %v980 = vunpack.c.l.b16 %v942
      %v981 = vunpack.c.l.b16 %v943
      %v982 = vunpack.c.l.b16 %v944
      %v983 = vpack.c.b16 %v968, %v967
      %v984 = vpack.c.b16 %v970, %v969
      %v985 = vpack.c.b16 %v972, %v971
      %v986 = vpack.c.b16 %v974, %v973
      %v987 = vpack.c.b16 %v976, %v975
      %v988 = vpack.c.b16 %v978, %v977
      %v989 = vpack.c.b16 %v980, %v979
      %v990 = vpack.c.b16 %v982, %v981
      %999 = vmatprep.subr.bf16.mxu0 0
      %1000 = vmatpush1.bf16.msra.mxu0 %v983
      %1001 = vmatprep.subr.bf16.mxu0 0
      %1002 = vmatpush1.bf16.msra.mxu0 %v984
      %1003 = vmatprep.subr.bf16.mxu0 0
      %1004 = vmatpush1.bf16.msra.mxu0 %v985
      %1005 = vmatprep.subr.bf16.mxu0 0
      %1006 = vmatpush1.bf16.msra.mxu0 %v986
      %1007 = vmatprep.subr.bf16.mxu0 0
      %1008 = vmatpush1.bf16.msra.mxu0 %v987
      %1009 = vmatprep.subr.bf16.mxu0 0
      %1010 = vmatpush1.bf16.msra.mxu0 %v988
      %1011 = vmatprep.subr.bf16.mxu0 0
      %1012 = vmatpush1.bf16.msra.mxu0 %v989
      %1013 = vmatprep.subr.bf16.mxu0 0
      %1014 = vmatpush1.bf16.msra.mxu0 %v990
      %1015 = vmatprep.subr.bf16.mxu0 0
      %1016 = vmatpush1.bf16.msra.mxu0 0
      %1017 = vmatprep.subr.bf16.mxu0 0
      %1018 = vmatpush1.bf16.msra.mxu0 0
      %1019 = vmatprep.subr.bf16.mxu0 0
      %1020 = vmatpush1.bf16.msra.mxu0 0
      %1021 = vmatprep.subr.bf16.mxu0 0
      %1022 = vmatpush1.bf16.msra.mxu0 0
      %1023 = vmatprep.subr.bf16.mxu0 0
      %1024 = vmatpush1.bf16.msra.mxu0 0
      %1025 = vmatprep.subr.bf16.mxu0 0
      %1026 = vmatpush1.bf16.msra.mxu0 0
      %1027 = vmatprep.subr.bf16.mxu0 0
      %1028 = vmatpush1.bf16.msra.mxu0 0
      %1029 = vmatprep.subr.bf16.mxu0 0
      %1030 = vmatpush1.bf16.msra.mxu0 0
      %1031 = vmatprep.mubr.bf16.mxu0 0
      %1032 = vmatmul.mubr.bf16.gmra.mrb[0].mxu0 %v528
      %v1033 = vpop.f32.mrb[0].mxu0
      %v1034 = vadd.f32 0.0, %v1033
      %v1035 = vpop.f32.mrb[0].mxu0
      %v1036 = vpop.f32.mrb[0].mxu0
      %v1037 = vadd.f32 0.0, %v1036
      %v1038 = vpop.f32.mrb[0].mxu0
      %1039 = vmatprep.mubr.bf16.mxu0 0
      %1040 = vmatmul.mubr.bf16.gmra.mrb[0].mxu0 %v949
      %v1041 = vpop.f32.mrb[0].mxu0
      %v1042 = vadd.f32 0.0, %v1041
      %v1043 = vpop.f32.mrb[0].mxu0
      %v1044 = vpop.f32.mrb[0].mxu0
      %v1045 = vadd.f32 0.0, %v1044
      %v1046 = vpop.f32.mrb[0].mxu0
      %1047 = vdwg.mxu0
      %v1048 = vadd.f32 %v900, %v1034
      %v1049 = vadd.f32 %v901, %v1037
      %v1050 = vadd.f32 %v902, %v1042
      %v1051 = vadd.f32 %v903, %v1045
      %s1052 = scalar_lea.vmem %s3, 64
      %v1053 = vld [vmem:[%s1052] sm:$0xf]
      %v1054 = vld [vmem:[%s1052 + $0x4] sm:$0xf]
      %v1055 = vld [vmem:[%s1052 + $0x8] sm:$0xf]
      %v1056 = vld [vmem:[%s1052 + $0xc] sm:$0xf]
      %v1057 = vld [vmem:[%s1052 + $0x10] sm:$0xf]
      %v1058 = vld [vmem:[%s1052 + $0x14] sm:$0xf]
      %v1059 = vld [vmem:[%s1052 + $0x18] sm:$0xf]
      %v1060 = vld [vmem:[%s1052 + $0x1c] sm:$0xf]
      %v1061 = vunpack.c.l.b16 %v917
      %v1062 = vunpack.c.l.b16 %v927
      %v1063 = vpack.c.b16 %v1062, %v1061
      %v1072 = vunpack.c.l.b16 %v1053
      %v1073 = vunpack.c.l.b16 %v1054
      %v1074 = vunpack.c.l.b16 %v1055
      %v1075 = vunpack.c.l.b16 %v1056
      %v1076 = vunpack.c.l.b16 %v1057
      %v1077 = vunpack.c.l.b16 %v1058
      %v1078 = vunpack.c.l.b16 %v1059
      %v1079 = vunpack.c.l.b16 %v1060
      %v1080 = vpack.c.b16 %v1073, %v1072
      %v1081 = vpack.c.b16 %v1075, %v1074
      %v1082 = vpack.c.b16 %v1077, %v1076
      %v1083 = vpack.c.b16 %v1079, %v1078
      %v1089 = vsel %vm463, %v1063, 0
      %1091 = vmatprep.subr.bf16.mxu0 0
      %1092 = vmatpush1.bf16.msra.mxu0 %v1080
      %1093 = vmatprep.subr.bf16.mxu0 0
      %1094 = vmatpush1.bf16.msra.mxu0 %v1081
      %1095 = vmatprep.subr.bf16.mxu0 0
      %1096 = vmatpush1.bf16.msra.mxu0 %v1082
      %1097 = vmatprep.subr.bf16.mxu0 0
      %1098 = vmatpush1.bf16.msra.mxu0 %v1083
      %1099 = vmatprep.subr.bf16.mxu0 0
      %1100 = vmatpush1.bf16.msra.mxu0 0
      %1101 = vmatprep.subr.bf16.mxu0 0
      %1102 = vmatpush1.bf16.msra.mxu0 0
      %1103 = vmatprep.subr.bf16.mxu0 0
      %1104 = vmatpush1.bf16.msra.mxu0 0
      %1105 = vmatprep.subr.bf16.mxu0 0
      %1106 = vmatpush1.bf16.msra.mxu0 0
      %1107 = vmatprep.subr.bf16.mxu0 0
      %1108 = vmatpush1.bf16.msra.mxu0 0
      %1109 = vmatprep.subr.bf16.mxu0 0
      %1110 = vmatpush1.bf16.msra.mxu0 0
      %1111 = vmatprep.subr.bf16.mxu0 0
      %1112 = vmatpush1.bf16.msra.mxu0 0
      %1113 = vmatprep.subr.bf16.mxu0 0
      %1114 = vmatpush1.bf16.msra.mxu0 0
      %1115 = vmatprep.subr.bf16.mxu0 0
      %1116 = vmatpush1.bf16.msra.mxu0 0
      %1117 = vmatprep.subr.bf16.mxu0 0
      %1118 = vmatpush1.bf16.msra.mxu0 0
      %1119 = vmatprep.subr.bf16.mxu0 0
      %1120 = vmatpush1.bf16.msra.mxu0 0
      %1121 = vmatprep.subr.bf16.mxu0 0
      %1122 = vmatpush1.bf16.msra.mxu0 0
      %1123 = vmatprep.mubr.bf16.mxu0 0
      %1124 = vmatmul.mubr.bf16.gmra.mrb[0].mxu0 %v468
      %v1125 = vpop.f32.mrb[0].mxu0
      %v1126 = vadd.f32 0.0, %v1125
      %v1127 = vpop.f32.mrb[0].mxu0
      %v1128 = vpop.f32.mrb[0].mxu0
      %v1129 = vadd.f32 0.0, %v1128
      %v1130 = vpop.f32.mrb[0].mxu0
      %1131 = vmatprep.mubr.bf16.mxu0 0
      %1132 = vmatmul.mubr.bf16.gmra.mrb[0].mxu0 %v1089
      %v1133 = vpop.f32.mrb[0].mxu0
      %v1134 = vadd.f32 0.0, %v1133
      %v1135 = vpop.f32.mrb[0].mxu0
      %v1136 = vpop.f32.mrb[0].mxu0
      %v1137 = vadd.f32 0.0, %v1136
      %v1138 = vpop.f32.mrb[0].mxu0
      %1139 = vdwg.mxu0
      %v1140 = vadd.f32 %v1048, %v1126
      %v1141 = vadd.f32 %v1049, %v1129
      %v1142 = vadd.f32 %v1050, %v1134
      %v1143 = vadd.f32 %v1051, %v1137
      %v1144 = vld [vmem:[%s4] sm:$0x1]
      %v1146 = vlaneseq
      %v1147 = vshrl.u32 %v1146, 7
      %v1148 = vsub.s32 0, %v1147
      %v1149 = vrot.slane %v1144, %v1148
      %v1151 = vadd.f32 %v1140, %v1149
      %v1152 = vadd.f32 %v1141, %v1149
      %v1153 = vadd.f32 %v1142, %v1149
      %v1154 = vadd.f32 %v1143, %v1149
      %v1155 = vmax.f32 %v1151, 0.0
      %v1156 = vmax.f32 %v1152, 0.0
      %v1157 = vmax.f32 %v1153, 0.0
      %v1158 = vmax.f32 %v1154, 0.0
      %v1159 = vpack.c.bf16 %v1156, %v1155
      %v1160 = vpack.c.bf16 %v1158, %v1157
      %v1163 = vunpack.c.l.b16 %v1159
      %v1164 = vunpack.c.h.b16 %v1159
      %v1165 = vunpack.c.l.b16 %v1160
      %v1166 = vunpack.c.h.b16 %v1160
      %v1167 = vpack.c.b16 %v1163, %v1163
      %v1168 = vpack.c.b16 %v1164, %v1164
      %v1169 = vpack.c.b16 %v1165, %v1165
      %v1170 = vpack.c.b16 %v1166, %v1166
      %vm1175 = vcmask 519168
      %1176 = vst.msk [vmem:[%s340] sm:$0xf] %vm1175, %v1167
      %1177 = vst.msk [vmem:[%s340 + $0x4] sm:$0xf] %vm1175, %v1168
      %1178 = vst.msk [vmem:[%s340 + $0x8] sm:$0xf] %vm1175, %v1169
      %1179 = vst.msk [vmem:[%s340 + $0xc] sm:$0xf] %vm1175, %v1170
      %s1180 = smul.u32 2, %s21
      %p1181 = scmp.lt.s32.totalorder %s20, 1
      %s1182 = scalar_select %p1181, %s20, 1
      %p1183 = scmp.lt.s32.totalorder %s1180, 7
      %s1184 = scalar_select %p1183, %s1180, 7
      %s1185 = smul.addr %s1184, 2
      %s1186 = smul.addr %s1182, 16
      %s1187 = sadd.s32 %s1185, %s1186
      %s1188 = smul.addr %s1187, 4
      %s1189 = scalar_lea.vmem %s5, %s1188
      // Predicated region
      $region41: #{f_ext_forward.4} parent=39 // pred_check
        %p1190 = pneg %p171
      $region42: #{f_ext_forward.4} parent=39 // pred_check_branch
        %1192 = sbr.rel (%p1190) target = $region44
      $region43: #{f_ext_forward.4} parent=39 // pred_region
        %s1193 = smul.u32 2, %s21
      $region44: #{f_ext_forward.4} parent=39 // pred_fallthru
        _
    $region40: #{f_ext_forward.4} parent=5 // pred_fallthru
      _
    %p1194 = scmp.le.s32.totalorder 2, %s11
    // Predicated region
    $region45: #{f_ext_forward.4} parent=5 // pred_check
      %p1195 = pneg %p1194
    $region46: #{f_ext_forward.4} parent=5 // pred_check_branch
      %1197 = sbr.rel (%p1195) target = $region48
    $region47: #{f_ext_forward.4} parent=5 // pred_region
      %s1198 = ssub.s32 %s11, 2
      // Predicated region
      $region49: #{f_ext_forward.4} parent=47 // pred_check
        %p1199 = pneg %p177
      $region50: #{f_ext_forward.4} parent=47 // pred_check_branch
        %1201 = sbr.rel (%p1199) target = $region52
      $region51: #{f_ext_forward.4} parent=47 // pred_region
        %s1202 = smul.u32 2, %s23
        %p1203 = scmp.lt.s32.totalorder %s22, 1
        %s1204 = scalar_select %p1203, %s22, 1
        %p1205 = scmp.lt.s32.totalorder %s1202, 7
        %s1206 = scalar_select %p1205, %s1202, 7
        %s1207 = smul.addr %s1206, 2
        %s1208 = smul.addr %s1204, 16
        %s1209 = sadd.s32 %s1207, %s1208
        %s1210 = smul.addr %s1209, 4
        %s1211 = scalar_lea.vmem %s5, %s1210
      $region52: #{f_ext_forward.4} parent=47 // pred_fallthru
        _
    $region48: #{f_ext_forward.4} parent=5 // pred_fallthru
      _
  $region6: #{f_ext_forward.4} parent=0 // loop_footer
    %s15 = sadd.s32 1, %s11
  $region7: #{f_ext_forward.4} parent=0 // loop_footer_branch
    %10 = sbr.rel target = $region3
  $region8: #{f_ext_forward.4} parent=0 // loop_exit
    _

// kernel: f_ext_forward.5
$region0: #{f_ext_forward.5}
  #allocation0 [shape = 'u32[]', space=smem, size = 0x4, offset = 0x4, fixed_abs, tag = 'smem constant byte address 0x4 - core index']
  #allocation1 [shape = 'u32[144,128]{1,0:T(1,128)}', space=vmem, size = 0x12000, scoped, tag = 'internal scratch']
  %s0 = inlined_call_operand.vmem [shape: bf16[2,10,17,128], index: 0, kind: input, shape index: {}, may-alias: {0,1}]
  %s1 = inlined_call_operand.vmem [shape: bf16[2,10,17,128], index: 1, kind: input, shape index: {}, may-alias: {0,1}]
  %s2 = inlined_call_operand.vmem [shape: bf16[3,128,64], index: 2, kind: input, shape index: {}]
  %s3 = inlined_call_operand.vmem [shape: bf16[3,64,64], index: 3, kind: input, shape index: {}]
  %s4 = inlined_call_operand.vmem [shape: f32[1,64], index: 4, kind: input, shape index: {}]
  %s5 = inlined_call_operand.hbm [shape: f32[2,1,64], index: 5, kind: output, shape index: {}]
  %s6 = sld [smem:[#allocation0]]
  $region61: #{f_ext_forward.5} parent=0
    _
  %s8 = ssub.s32 1, %s6
  %s9 = scalar_select 0, %s8, %s6
  $region1: #{f_ext_forward.5} parent=0
    #allocation2 [shape = 'u8[1024]{0}', space=vmem, size = 0x400, scoped, tag = 'output window, operand 0']
    #allocation3 [shape = 's32[2]{0}', space=sflag, size = 0x8, scoped, tag = 'scoped memory for f_ext_forward.5']
    %10 = vsyncpa [#allocation3], 0
    %s11 = scalar_lea.sflag [#allocation3], 1
    %12 = vsyncpa %s11, 0
    loop: start=0, step=1, limit=6
    $region2: #{f_ext_forward.5} parent=1 // loop_pre_header
      _
    $region3: #{f_ext_forward.5} parent=1 // loop_header
      %s14 = sphi 0, %s18
      %p15 = scmp.ge.s32.totalorder %s14, 6
      %s21 = sphi 0, %s33
      %s22 = sphi 0, %s29
      %s23 = sphi 0, %s21
      %s24 = sphi 0, %s22
      %s25 = sphi 0, %s23
      %s26 = sphi 0, %s24
      %s38 = sphi 0, %s40
      %s41 = sphi 0, %s38
      %s42 = sphi 0, %s41
      %s58 = sphi 0, %s42
      %s70 = sphi 0, %s72
      %s73 = sphi 0, %s70
      %s74 = sphi 0, %s73
      %s90 = sphi 0, %s74
      %s94 = sphi 0, %s94
      %s96 = sphi 0, %s94
      %s97 = sphi 0, %s96
      %s111 = sphi 0, %s97
      %s115 = sphi 0, %s115
      %s117 = sphi 0, %s115
      %s118 = sphi 0, %s117
      %s132 = sphi 0, %s118
      %s136 = sphi 0, %s136
      %s138 = sphi 0, %s136
      %s139 = sphi 0, %s138
      %s153 = sphi 0, %s139
      %s159 = sphi 0, %s161
      %s162 = sphi 0, %s159
      %s163 = sphi 0, %s162
      %s179 = sphi 0, %s163
    $region4: #{f_ext_forward.5} parent=1 // loop_header_branch
      %17 = sbr.rel (%p15) target = $region8
    $region5: #{f_ext_forward.5} parent=1 // loop_body
      %s19 = ssub.s32 %s14, 1
      %s20 = ssub.s32 %s14, 2
      %s27 = sadd.s32 1, %s22
      %p28 = scmp.ge.s32.totalorder %s27, 2
      %s29 = scalar_select %p28, 0, %s27
      %s30 = sadd.s32 1, %s21
      %s31 = scalar_select %p28, %s30, %s21
      %p32 = scmp.ge.s32.totalorder %s31, 2
      %s33 = scalar_select %p32, 0, %s31
      %s34 = ssub.s32 %s21, %s33
      %s35 = ssub.s32 %s22, %s29
      %s36 = sor.u32 %s34, %s35
      %p37 = scmp.eq.s32.totalorder %s36, 0
      %s39 = sadd.s32 %s38, 1
      %s40 = scalar_select %p37, %s38, %s39
      %p43 = pneg %p37
      %p44 = scmp.eq.s32.totalorder %s14, 3
      %p45 = por %p43, %p44
      %p46 = scmp.ne.s32.totalorder %s38, %s41
      %p47 = scmp.eq.s32.totalorder %s14, 0
      %p48 = por %p46, %p47
      %p49 = scmp.ne.s32.totalorder %s38, %s41
      %p50 = scmp.eq.s32.totalorder %s19, 3
      %p51 = por %p49, %p50
      %p52 = scmp.ne.s32.totalorder %s41, %s42
      %p53 = scmp.eq.s32.totalorder %s19, 0
      %p54 = por %p52, %p53
      %p55 = scmp.ne.s32.totalorder %s41, %s42
      %p56 = scmp.eq.s32.totalorder %s20, 3
      %p57 = por %p55, %p56
      %p59 = scmp.ne.s32.totalorder %s42, %s58
      %p60 = scmp.eq.s32.totalorder %s20, 0
      %p61 = por %p59, %p60
      %s62 = sadd.s32 %s22, 1
      %s63 = smul.u32 %s62, 4
      %s64 = sadd.s32 %s29, 1
      %s65 = smul.u32 %s64, 4
      %s66 = ssub.s32 %s21, %s33
      %s67 = ssub.s32 %s63, %s65
      %s68 = sor.u32 %s66, %s67
      %p69 = scmp.eq.s32.totalorder %s68, 0
      %s71 = sadd.s32 %s70, 1
      %s72 = scalar_select %p69, %s70, %s71
      %p75 = pneg %p69
      %p76 = scmp.eq.s32.totalorder %s14, 3
      %p77 = por %p75, %p76
      %p78 = scmp.ne.s32.totalorder %s70, %s73
      %p79 = scmp.eq.s32.totalorder %s14, 0
      %p80 = por %p78, %p79
      %p81 = scmp.ne.s32.totalorder %s70, %s73
      %p82 = scmp.eq.s32.totalorder %s19, 3
      %p83 = por %p81, %p82
      %p84 = scmp.ne.s32.totalorder %s73, %s74
      %p85 = scmp.eq.s32.totalorder %s19, 0
      %p86 = por %p84, %p85
      %p87 = scmp.ne.s32.totalorder %s73, %s74
      %p88 = scmp.eq.s32.totalorder %s20, 3
      %p89 = por %p87, %p88
      %p91 = scmp.ne.s32.totalorder %s74, %s90
      %p92 = scmp.eq.s32.totalorder %s20, 0
      %p93 = por %p91, %p92
      %s95 = sadd.s32 %s94, 1
      %p98 = scmp.eq.s32.totalorder %s14, 3
      %p99 = scmp.ne.s32.totalorder %s94, %s96
      %p100 = scmp.eq.s32.totalorder %s14, 0
      %p101 = por %p99, %p100
      %p102 = scmp.ne.s32.totalorder %s94, %s96
      %p103 = scmp.eq.s32.totalorder %s19, 3
      %p104 = por %p102, %p103
      %p105 = scmp.ne.s32.totalorder %s96, %s97
      %p106 = scmp.eq.s32.totalorder %s19, 0
      %p107 = por %p105, %p106
      %p108 = scmp.ne.s32.totalorder %s96, %s97
      %p109 = scmp.eq.s32.totalorder %s20, 3
      %p110 = por %p108, %p109
      %p112 = scmp.ne.s32.totalorder %s97, %s111
      %p113 = scmp.eq.s32.totalorder %s20, 0
      %p114 = por %p112, %p113
      %s116 = sadd.s32 %s115, 1
      %p119 = scmp.eq.s32.totalorder %s14, 3
      %p120 = scmp.ne.s32.totalorder %s115, %s117
      %p121 = scmp.eq.s32.totalorder %s14, 0
      %p122 = por %p120, %p121
      %p123 = scmp.ne.s32.totalorder %s115, %s117
      %p124 = scmp.eq.s32.totalorder %s19, 3
      %p125 = por %p123, %p124
      %p126 = scmp.ne.s32.totalorder %s117, %s118
      %p127 = scmp.eq.s32.totalorder %s19, 0
      %p128 = por %p126, %p127
      %p129 = scmp.ne.s32.totalorder %s117, %s118
      %p130 = scmp.eq.s32.totalorder %s20, 3
      %p131 = por %p129, %p130
      %p133 = scmp.ne.s32.totalorder %s118, %s132
      %p134 = scmp.eq.s32.totalorder %s20, 0
      %p135 = por %p133, %p134
      %s137 = sadd.s32 %s136, 1
      %p140 = scmp.eq.s32.totalorder %s14, 3
      %p141 = scmp.ne.s32.totalorder %s136, %s138
      %p142 = scmp.eq.s32.totalorder %s14, 0
      %p143 = por %p141, %p142
      %p144 = scmp.ne.s32.totalorder %s136, %s138
      %p145 = scmp.eq.s32.totalorder %s19, 3
      %p146 = por %p144, %p145
      %p147 = scmp.ne.s32.totalorder %s138, %s139
      %p148 = scmp.eq.s32.totalorder %s19, 0
      %p149 = por %p147, %p148
      %p150 = scmp.ne.s32.totalorder %s138, %s139
      %p151 = scmp.eq.s32.totalorder %s20, 3
      %p152 = por %p150, %p151
      %p154 = scmp.ne.s32.totalorder %s139, %s153
      %p155 = scmp.eq.s32.totalorder %s20, 0
      %p156 = por %p154, %p155
      %s157 = ssub.s32 %s21, %s33
      %p158 = scmp.eq.s32.totalorder %s157, 0
      %s160 = sadd.s32 %s159, 1
      %s161 = scalar_select %p158, %s159, %s160
      %p164 = pneg %p158
      %p165 = scmp.eq.s32.totalorder %s14, 3
      %p166 = por %p164, %p165
      %p167 = scmp.ne.s32.totalorder %s159, %s162
      %p168 = scmp.eq.s32.totalorder %s14, 0
      %p169 = por %p167, %p168
      %p170 = scmp.ne.s32.totalorder %s159, %s162
      %p171 = scmp.eq.s32.totalorder %s19, 3
      %p172 = por %p170, %p171
      %p173 = scmp.ne.s32.totalorder %s162, %s163
      %p174 = scmp.eq.s32.totalorder %s19, 0
      %p175 = por %p173, %p174
      %p176 = scmp.ne.s32.totalorder %s162, %s163
      %p177 = scmp.eq.s32.totalorder %s20, 3
      %p178 = por %p176, %p177
      %p180 = scmp.ne.s32.totalorder %s163, %s179
      %p181 = scmp.eq.s32.totalorder %s20, 0
      %p182 = por %p180, %p181
      %p183 = scmp.le.s32.totalorder 1, %s14
      %p184 = scmp.lt.s32.totalorder %s14, 5
      %p185 = pnand %p183, %p184
      %p186 = pneg %p185
      // Predicated region
      $region9: #{f_ext_forward.5} parent=5 // pred_check
        _
      $region10: #{f_ext_forward.5} parent=5 // pred_check_branch
        %188 = sbr.rel (%p185) target = $region12
      $region11: #{f_ext_forward.5} parent=5 // pred_region
        %s189 = ssub.s32 %s14, 1
        // Predicated region
        $region13: #{f_ext_forward.5} parent=11 // pred_check
          %p190 = pneg %p107
        $region14: #{f_ext_forward.5} parent=11 // pred_check_branch
          %192 = sbr.rel (%p190) target = $region16
        $region15: #{f_ext_forward.5} parent=11 // pred_region
          _
        $region16: #{f_ext_forward.5} parent=11 // pred_fallthru
          _
        // Predicated region
        $region17: #{f_ext_forward.5} parent=11 // pred_check
          %p193 = pneg %p128
        $region18: #{f_ext_forward.5} parent=11 // pred_check_branch
          %195 = sbr.rel (%p193) target = $region20
        $region19: #{f_ext_forward.5} parent=11 // pred_region
          _
        $region20: #{f_ext_forward.5} parent=11 // pred_fallthru
          _
        // Predicated region
        $region21: #{f_ext_forward.5} parent=11 // pred_check
          %p196 = pneg %p149
        $region22: #{f_ext_forward.5} parent=11 // pred_check_branch
          %198 = sbr.rel (%p196) target = $region24
        $region23: #{f_ext_forward.5} parent=11 // pred_region
          _
        $region24: #{f_ext_forward.5} parent=11 // pred_fallthru
          _
      $region12: #{f_ext_forward.5} parent=5 // pred_fallthru
        _
      %p199 = scmp.lt.s32.totalorder %s14, 4
      // Predicated region
      $region25: #{f_ext_forward.5} parent=5 // pred_check
        %p200 = pneg %p199
      $region26: #{f_ext_forward.5} parent=5 // pred_check_branch
        %202 = sbr.rel (%p200) target = $region28
      $region27: #{f_ext_forward.5} parent=5 // pred_region
        // Predicated region
        $region29: #{f_ext_forward.5} parent=27 // pred_check
          %p203 = pneg %p48
        $region30: #{f_ext_forward.5} parent=27 // pred_check_branch
          %205 = sbr.rel (%p203) target = $region32
        $region31: #{f_ext_forward.5} parent=27 // pred_region
          %s206 = smul.u32 4, %s22
          %s207 = ssub.s32 10, %s206
          %p208 = scmp.lt.s32.totalorder %s207, 4
          %s209 = scalar_select %p208, %s207, 4
          %s210 = smul.u32 64, %s209
          %s211 = smul.u32 %s210, 3
          %p212 = scmp.lt.s32.totalorder %s21, 1
          %s213 = scalar_select %p212, %s21, 1
          %p214 = scmp.lt.s32.totalorder %s206, 9
          %s215 = scalar_select %p214, %s206, 9
          %s216 = smul.addr %s215, 3
          %s217 = smul.addr %s213, 30
          %s218 = sadd.s32 %s216, %s217
          %s219 = smul.addr %s218, 4
          %s220 = scalar_lea.vmem %s0, %s219
          %s221 = smul.u32 4, %s22
          %s222 = ssub.s32 10, %s221
          %p223 = scmp.lt.s32.totalorder %s222, 4
          %s224 = scalar_select %p223, %s222, 4
          %s225 = smul.u32 64, %s224
          %s226 = smul.u32 %s225, 3
        $region32: #{f_ext_forward.5} parent=27 // pred_fallthru
          _
        // Predicated region
        $region33: #{f_ext_forward.5} parent=27 // pred_check
          %p227 = pneg %p80
        $region34: #{f_ext_forward.5} parent=27 // pred_check_branch
          %229 = sbr.rel (%p227) target = $region36
        $region35: #{f_ext_forward.5} parent=27 // pred_region
          %s230 = sadd.s32 %s22, 1
          %s231 = smul.u32 %s230, 4
          %p232 = scmp.lt.s32.totalorder %s21, 1
          %s233 = scalar_select %p232, %s21, 1
          %p234 = scmp.lt.s32.totalorder %s231, 9
          %s235 = scalar_select %p234, %s231, 9
          %s236 = smul.addr %s235, 3
          %s237 = smul.addr %s233, 30
          %s238 = sadd.s32 %s236, %s237
          %s239 = smul.addr %s238, 4
          %s240 = scalar_lea.vmem %s1, %s239
          %s241 = sadd.s32 %s22, 1
          %s242 = smul.u32 %s241, 4
        $region36: #{f_ext_forward.5} parent=27 // pred_fallthru
          _
      $region28: #{f_ext_forward.5} parent=5 // pred_fallthru
        _
      %p243 = scmp.le.s32.totalorder 1, %s14
      %p244 = scmp.lt.s32.totalorder %s14, 5
      %p245 = pnand %p243, %p244
      %p246 = pneg %p245
      // Predicated region
      $region37: #{f_ext_forward.5} parent=5 // pred_check
        _
      $region38: #{f_ext_forward.5} parent=5 // pred_check_branch
        %248 = sbr.rel (%p245) target = $region40
      $region39: #{f_ext_forward.5} parent=5 // pred_region
        %s249 = ssub.s32 %s14, 1
        %s250 = smul.u32 4, %s24
        %s251 = ssub.s32 10, %s250
        %p252 = scmp.lt.s32.totalorder %s251, 4
        %s253 = scalar_select %p252, %s251, 4
        %s254 = smul.u32 64, %s253
        %s255 = smul.u32 %s254, 3
        %p256 = scmp.lt.s32.totalorder %s23, 1
        %s257 = scalar_select %p256, %s23, 1
        %p258 = scmp.lt.s32.totalorder %s250, 9
        %s259 = scalar_select %p258, %s250, 9
        %s260 = smul.addr %s259, 3
        %s261 = smul.addr %s257, 30
        %s262 = sadd.s32 %s260, %s261
        %s263 = smul.addr %s262, 4
        %s264 = scalar_lea.vmem %s0, %s263
        %p265 = pneg %p54
        %p266 = pneg %p51
        %s267 = sadd.s32 %s24, 1
        %s268 = smul.u32 %s267, 4
        %p269 = scmp.lt.s32.totalorder %s23, 1
        %s270 = scalar_select %p269, %s23, 1
        %p271 = scmp.lt.s32.totalorder %s268, 9
        %s272 = scalar_select %p271, %s268, 9
        %s273 = smul.addr %s272, 3
        %s274 = smul.addr %s270, 30
        %s275 = sadd.s32 %s273, %s274
        %s276 = smul.addr %s275, 4
        %s277 = scalar_lea.vmem %s1, %s276
        %p278 = pneg %p86
        %p279 = pneg %p83
        %p280 = pneg %p107
        %p281 = pneg %p104
        %p282 = pneg %p128
        %p283 = pneg %p125
        %p284 = pneg %p149
        %p285 = pneg %p146
        %p286 = pneg %p175
        %p287 = pneg %p172
        %s288 = sand.u32 %s162, 1
        %s289 = scalar_lea.sflag [#allocation3], %s288
        %s290 = sand.u32 %s162, 1
        %s291 = scalar_lea.vmem [#allocation2], %s290
        %s292 = smul.u32 4, %s24
        %s293 = ssub.s32 10, %s292
        %p294 = scmp.lt.s32.totalorder %s293, 4
        %s295 = scalar_select %p294, %s293, 4
        %s296 = smul.u32 64, %s295
        %s297 = smul.u32 %s296, 3
        %p298 = scmp.lt.s32.totalorder %s23, 1
        %s299 = scalar_select %p298, %s23, 1
        %p300 = scmp.lt.s32.totalorder %s292, 9
        %s301 = scalar_select %p300, %s292, 9
        %s302 = smul.addr %s301, 3
        %s303 = smul.addr %s299, 30
        %s304 = sadd.s32 %s302, %s303
        %s305 = smul.addr %s304, 4
        %s306 = scalar_lea.vmem %s0, %s305
        %s307 = smul.u32 4, %s24
        %s308 = ssub.s32 10, %s307
        %p309 = scmp.lt.s32.totalorder %s308, 4
        %s310 = scalar_select %p309, %s308, 4
        %s311 = smul.u32 64, %s310
        %s312 = smul.u32 %s311, 3
        %s313 = sadd.s32 %s24, 1
        %s314 = smul.u32 %s313, 4
        %p315 = scmp.lt.s32.totalorder %s23, 1
        %s316 = scalar_select %p315, %s23, 1
        %p317 = scmp.lt.s32.totalorder %s314, 9
        %s318 = scalar_select %p317, %s314, 9
        %s319 = smul.addr %s318, 3
        %s320 = smul.addr %s316, 30
        %s321 = sadd.s32 %s319, %s320
        %s322 = smul.addr %s321, 4
        %s323 = scalar_lea.vmem %s1, %s322
        %s324 = sadd.s32 %s24, 1
        %s325 = smul.u32 %s324, 4
        %p327 = scmp.eq.s32.totalorder %s24, 0
        // Predicated region
        $region41: #{f_ext_forward.5} parent=39 // pred_check
          %p328 = pneg %p327
        $region42: #{f_ext_forward.5} parent=39 // pred_check_branch
          %330 = sbr.rel (%p328) target = $region44
        $region43: #{f_ext_forward.5} parent=39 // pred_region
          %vm331 = vcmask 516096
          %332 = vst.msk [vmem:[%s291] sm:$0x1] %vm331, 0.0
        $region44: #{f_ext_forward.5} parent=39 // pred_fallthru
          _
        %v333 = vld [vmem:[%s306] sm:$0xf]
        %v334 = vld [vmem:[%s306 + $0x4] sm:$0xf]
        %v335 = vld [vmem:[%s306 + $0x8] sm:$0x1]
        %v336 = vld [vmem:[%s306 + $0xc] sm:$0xf]
        %v337 = vld [vmem:[%s306 + $0x10] sm:$0xf]
        %v338 = vld [vmem:[%s306 + $0x14] sm:$0x1]
        %v339 = vld [vmem:[%s306 + $0x18] sm:$0xf]
        %v340 = vld [vmem:[%s306 + $0x1c] sm:$0xf]
        %v341 = vld [vmem:[%s306 + $0x20] sm:$0x1]
        %v342 = vld [vmem:[%s306 + $0x24] sm:$0xf]
        %v343 = vld [vmem:[%s306 + $0x28] sm:$0xf]
        %v344 = vld [vmem:[%s306 + $0x2c] sm:$0x1]
        %v345 = vld [vmem:[%s323] sm:$0xf]
        %v346 = vld [vmem:[%s323 + $0x4] sm:$0xf]
        %v347 = vld [vmem:[%s323 + $0x8] sm:$0x1]
        %vm348 = vsmask.f32 3328
        %vm349 = vsmask.f32 7440
        %vm350 = vmor %vm348, %vm349
        %v352 = vshrl.u32 %v333, 16
        %v354 = vrot.slane %v352, 4
        %v355 = vshll.u32 %v333, 16
        %v357 = vrot.slane %v355, 5
        %v358 = vor.u32 %v354, %v357
        %v359 = vrot.slane %v358, 4
        %v361 = vshll.u32 %v334, 16
        %v363 = vrot.slane %v361, 5
        %v364 = vsel %vm350, %v359, %v363
        %v365 = vshrl.u32 %v334, 16
        %v367 = vrot.slane %v365, 4
        %v368 = vor.u32 %v367, %v363
        %v369 = vrot.slane %v368, 4
        %v371 = vshll.u32 %v335, 16
        %v373 = vrot.slane %v371, 5
        %v374 = vsel %vm350, %v369, %v373
        %v376 = vshrl.u32 %v339, 16
        %v378 = vrot.slane %v376, 4
        %v379 = vshll.u32 %v339, 16
        %v381 = vrot.slane %v379, 5
        %v382 = vor.u32 %v378, %v381
        %v383 = vrot.slane %v382, 4
        %v385 = vshll.u32 %v340, 16
        %v387 = vrot.slane %v385, 5
        %v388 = vsel %vm350, %v383, %v387
        %v389 = vshrl.u32 %v340, 16
        %v391 = vrot.slane %v389, 4
        %v392 = vor.u32 %v391, %v387
        %v393 = vrot.slane %v392, 4
        %v395 = vshll.u32 %v341, 16
        %v397 = vrot.slane %v395, 5
        %v398 = vsel %vm350, %v393, %v397
        %v399 = vld [vmem:[%s2] sm:$0xf]
        %v400 = vld [vmem:[%s2 + $0x4] sm:$0xf]
        %v401 = vld [vmem:[%s2 + $0x8] sm:$0xf]
        %v402 = vld [vmem:[%s2 + $0xc] sm:$0xf]
        %v403 = vld [vmem:[%s2 + $0x10] sm:$0xf]
        %v404 = vld [vmem:[%s2 + $0x14] sm:$0xf]
        %v405 = vld [vmem:[%s2 + $0x18] sm:$0xf]
        %v406 = vld [vmem:[%s2 + $0x1c] sm:$0xf]
        %v407 = vld [vmem:[%s2 + $0x20] sm:$0xf]
        %v408 = vld [vmem:[%s2 + $0x24] sm:$0xf]
        %v409 = vld [vmem:[%s2 + $0x28] sm:$0xf]
        %v410 = vld [vmem:[%s2 + $0x2c] sm:$0xf]
        %v411 = vld [vmem:[%s2 + $0x30] sm:$0xf]
        %v412 = vld [vmem:[%s2 + $0x34] sm:$0xf]
        %v413 = vld [vmem:[%s2 + $0x38] sm:$0xf]
        %v414 = vld [vmem:[%s2 + $0x3c] sm:$0xf]
        %v415 = vld [vmem:[%s3] sm:$0xf]
        %v416 = vld [vmem:[%s3 + $0x4] sm:$0xf]
        %v417 = vld [vmem:[%s3 + $0x8] sm:$0xf]
        %v418 = vld [vmem:[%s3 + $0xc] sm:$0xf]
        %v419 = vld [vmem:[%s3 + $0x10] sm:$0xf]
        %v420 = vld [vmem:[%s3 + $0x14] sm:$0xf]
        %v421 = vld [vmem:[%s3 + $0x18] sm:$0xf]
        %v422 = vld [vmem:[%s3 + $0x1c] sm:$0xf]
        %v423 = vunpack.c.l.b16 %v364
        %v424 = vunpack.c.l.b16 %v374
        %v425 = vunpack.c.l.b16 %v388
        %v426 = vunpack.c.l.b16 %v398
        %v427 = vpack.c.b16 %v424, %v423
        %v428 = vpack.c.b16 %v426, %v425
        %v437 = vunpack.c.l.b16 %v415
        %v438 = vunpack.c.l.b16 %v416
        %v439 = vunpack.c.l.b16 %v417
        %v440 = vunpack.c.l.b16 %v418
        %v441 = vunpack.c.l.b16 %v419
        %v442 = vunpack.c.l.b16 %v420
        %v443 = vunpack.c.l.b16 %v421
        %v444 = vunpack.c.l.b16 %v422
        %v445 = vpack.c.b16 %v438, %v437
        %v446 = vpack.c.b16 %v440, %v439
        %v447 = vpack.c.b16 %v442, %v441
        %v448 = vpack.c.b16 %v444, %v443
        %vm453 = vcmask 523264
        %v455 = vsel %vm453, %v427, 0
        %v458 = vsel %vm453, %v428, 0
        %460 = vmatprep.subr.bf16.mxu0 0
        %461 = vmatpush1.bf16.msra.mxu0 %v445
        %462 = vmatprep.subr.bf16.mxu0 0
        %463 = vmatpush1.bf16.msra.mxu0 %v446
        %464 = vmatprep.subr.bf16.mxu0 0
        %465 = vmatpush1.bf16.msra.mxu0 %v447
        %466 = vmatprep.subr.bf16.mxu0 0
        %467 = vmatpush1.bf16.msra.mxu0 %v448
        %468 = vmatprep.subr.bf16.mxu0 0
        %469 = vmatpush1.bf16.msra.mxu0 0
        %470 = vmatprep.subr.bf16.mxu0 0
        %471 = vmatpush1.bf16.msra.mxu0 0
        %472 = vmatprep.subr.bf16.mxu0 0
        %473 = vmatpush1.bf16.msra.mxu0 0
        %474 = vmatprep.subr.bf16.mxu0 0
        %475 = vmatpush1.bf16.msra.mxu0 0
        %476 = vmatprep.subr.bf16.mxu0 0
        %477 = vmatpush1.bf16.msra.mxu0 0
        %478 = vmatprep.subr.bf16.mxu0 0
        %479 = vmatpush1.bf16.msra.mxu0 0
        %480 = vmatprep.subr.bf16.mxu0 0
        %481 = vmatpush1.bf16.msra.mxu0 0
        %482 = vmatprep.subr.bf16.mxu0 0
        %483 = vmatpush1.bf16.msra.mxu0 0
        %484 = vmatprep.subr.bf16.mxu0 0
        %485 = vmatpush1.bf16.msra.mxu0 0
        %486 = vmatprep.subr.bf16.mxu0 0
        %487 = vmatpush1.bf16.msra.mxu0 0
        %488 = vmatprep.subr.bf16.mxu0 0
        %489 = vmatpush1.bf16.msra.mxu0 0
        %490 = vmatprep.subr.bf16.mxu0 0
        %491 = vmatpush1.bf16.msra.mxu0 0
        %492 = vmatprep.mubr.bf16.mxu0 0
        %493 = vmatmul.mubr.bf16.gmra.mrb[0].mxu0 %v455
        %v494 = vpop.f32.mrb[0].mxu0
        %v495 = vadd.f32 0.0, %v494
        %v496 = vpop.f32.mrb[0].mxu0
        %v497 = vpop.f32.mrb[0].mxu0
        %v498 = vadd.f32 0.0, %v497
        %v499 = vpop.f32.mrb[0].mxu0
        %500 = vmatprep.mubr.bf16.mxu0 0
        %501 = vmatmul.mubr.bf16.gmra.mrb[0].mxu0 %v458
        %v502 = vpop.f32.mrb[0].mxu0
        %v503 = vadd.f32 0.0, %v502
        %v504 = vpop.f32.mrb[0].mxu0
        %v505 = vpop.f32.mrb[0].mxu0
        %v506 = vadd.f32 0.0, %v505
        %v507 = vpop.f32.mrb[0].mxu0
        %508 = vdwg.mxu0
        %v513 = vunpack.c.l.b16 %v333
        %v514 = vunpack.c.l.b16 %v334
        %v515 = vunpack.c.l.b16 %v339
        %v516 = vunpack.c.l.b16 %v340
        %v517 = vpack.c.b16 %v514, %v513
        %v518 = vpack.c.b16 %v516, %v515
        %v537 = vunpack.c.l.b16 %v399
        %v538 = vunpack.c.l.b16 %v400
        %v539 = vunpack.c.l.b16 %v401
        %v540 = vunpack.c.l.b16 %v402
        %v541 = vunpack.c.l.b16 %v403
        %v542 = vunpack.c.l.b16 %v404
        %v543 = vunpack.c.l.b16 %v405
        %v544 = vunpack.c.l.b16 %v406
        %v545 = vunpack.c.l.b16 %v407
        %v546 = vunpack.c.l.b16 %v408
        %v547 = vunpack.c.l.b16 %v409
        %v548 = vunpack.c.l.b16 %v410
        %v549 = vunpack.c.l.b16 %v411
        %v550 = vunpack.c.l.b16 %v412
        %v551 = vunpack.c.l.b16 %v413
        %v552 = vunpack.c.l.b16 %v414
        %v553 = vpack.c.b16 %v538, %v537
        %v554 = vpack.c.b16 %v540, %v539
        %v555 = vpack.c.b16 %v542, %v541
        %v556 = vpack.c.b16 %v544, %v543
        %v557 = vpack.c.b16 %v546, %v545
        %v558 = vpack.c.b16 %v548, %v547
        %v559 = vpack.c.b16 %v550, %v549
        %v560 = vpack.c.b16 %v552, %v551
        %569 = vmatprep.subr.bf16.mxu0 0
        %570 = vmatpush1.bf16.msra.mxu0 %v553
        %571 = vmatprep.subr.bf16.mxu0 0
        %572 = vmatpush1.bf16.msra.mxu0 %v554
        %573 = vmatprep.subr.bf16.mxu0 0
        %574 = vmatpush1.bf16.msra.mxu0 %v555
        %575 = vmatprep.subr.bf16.mxu0 0
        %576 = vmatpush1.bf16.msra.mxu0 %v556
        %577 = vmatprep.subr.bf16.mxu0 0
        %578 = vmatpush1.bf16.msra.mxu0 %v557
        %579 = vmatprep.subr.bf16.mxu0 0
        %580 = vmatpush1.bf16.msra.mxu0 %v558
        %581 = vmatprep.subr.bf16.mxu0 0
        %582 = vmatpush1.bf16.msra.mxu0 %v559
        %583 = vmatprep.subr.bf16.mxu0 0
        %584 = vmatpush1.bf16.msra.mxu0 %v560
        %585 = vmatprep.subr.bf16.mxu0 0
        %586 = vmatpush1.bf16.msra.mxu0 0
        %587 = vmatprep.subr.bf16.mxu0 0
        %588 = vmatpush1.bf16.msra.mxu0 0
        %589 = vmatprep.subr.bf16.mxu0 0
        %590 = vmatpush1.bf16.msra.mxu0 0
        %591 = vmatprep.subr.bf16.mxu0 0
        %592 = vmatpush1.bf16.msra.mxu0 0
        %593 = vmatprep.subr.bf16.mxu0 0
        %594 = vmatpush1.bf16.msra.mxu0 0
        %595 = vmatprep.subr.bf16.mxu0 0
        %596 = vmatpush1.bf16.msra.mxu0 0
        %597 = vmatprep.subr.bf16.mxu0 0
        %598 = vmatpush1.bf16.msra.mxu0 0
        %599 = vmatprep.subr.bf16.mxu0 0
        %600 = vmatpush1.bf16.msra.mxu0 0
        %601 = vmatprep.mubr.bf16.mxu0 0
        %602 = vmatmul.mubr.bf16.gmra.mrb[0].mxu0 %v517
        %v603 = vpop.f32.mrb[0].mxu0
        %v604 = vadd.f32 %v495, %v603
        %v605 = vpop.f32.mrb[0].mxu0
        %v606 = vpop.f32.mrb[0].mxu0
        %v607 = vadd.f32 %v498, %v606
        %v608 = vpop.f32.mrb[0].mxu0
        %609 = vmatprep.mubr.bf16.mxu0 0
        %610 = vmatmul.mubr.bf16.gmra.mrb[0].mxu0 %v518
        %v611 = vpop.f32.mrb[0].mxu0
        %v612 = vadd.f32 %v503, %v611
        %v613 = vpop.f32.mrb[0].mxu0
        %v614 = vpop.f32.mrb[0].mxu0
        %v615 = vadd.f32 %v506, %v614
        %v616 = vpop.f32.mrb[0].mxu0
        %617 = vdwg.mxu0
        %v619 = vshrl.u32 %v336, 16
        %v621 = vrot.slane %v619, 4
        %v622 = vshll.u32 %v336, 16
        %v624 = vrot.slane %v622, 5
        %v625 = vor.u32 %v621, %v624
        %v626 = vrot.slane %v625, 4
        %v628 = vshll.u32 %v337, 16
        %v630 = vrot.slane %v628, 5
        %v631 = vsel %vm350, %v626, %v630
        %v632 = vshrl.u32 %v337, 16
        %v634 = vrot.slane %v632, 4
        %v635 = vor.u32 %v634, %v630
        %v636 = vrot.slane %v635, 4
        %v638 = vshll.u32 %v338, 16
        %v640 = vrot.slane %v638, 5
        %v641 = vsel %vm350, %v636, %v640
        %v643 = vshrl.u32 %v342, 16
        %v645 = vrot.slane %v643, 4
        %v646 = vshll.u32 %v342, 16
        %v648 = vrot.slane %v646, 5
        %v649 = vor.u32 %v645, %v648
        %v650 = vrot.slane %v649, 4
        %v652 = vshll.u32 %v343, 16
        %v654 = vrot.slane %v652, 5
        %v655 = vsel %vm350, %v650, %v654
        %v656 = vshrl.u32 %v343, 16
        %v658 = vrot.slane %v656, 4
        %v659 = vor.u32 %v658, %v654
        %v660 = vrot.slane %v659, 4
        %v662 = vshll.u32 %v344, 16
        %v664 = vrot.slane %v662, 5
        %v665 = vsel %vm350, %v660, %v664
        %s666 = scalar_lea.vmem %s2, 64
        %v667 = vld [vmem:[%s666] sm:$0xf]
        %v668 = vld [vmem:[%s666 + $0x4] sm:$0xf]
        %v669 = vld [vmem:[%s666 + $0x8] sm:$0xf]
        %v670 = vld [vmem:[%s666 + $0xc] sm:$0xf]
        %v671 = vld [vmem:[%s666 + $0x10] sm:$0xf]
        %v672 = vld [vmem:[%s666 + $0x14] sm:$0xf]
        %v673 = vld [vmem:[%s666 + $0x18] sm:$0xf]
        %v674 = vld [vmem:[%s666 + $0x1c] sm:$0xf]
        %v675 = vld [vmem:[%s666 + $0x20] sm:$0xf]
        %v676 = vld [vmem:[%s666 + $0x24] sm:$0xf]
        %v677 = vld [vmem:[%s666 + $0x28] sm:$0xf]
        %v678 = vld [vmem:[%s666 + $0x2c] sm:$0xf]
        %v679 = vld [vmem:[%s666 + $0x30] sm:$0xf]
        %v680 = vld [vmem:[%s666 + $0x34] sm:$0xf]
        %v681 = vld [vmem:[%s666 + $0x38] sm:$0xf]
        %v682 = vld [vmem:[%s666 + $0x3c] sm:$0xf]
        %v687 = vunpack.c.l.b16 %v336
        %v688 = vunpack.c.l.b16 %v337
        %v689 = vunpack.c.l.b16 %v342
        %v690 = vunpack.c.l.b16 %v343
        %v691 = vpack.c.b16 %v688, %v687
        %v692 = vpack.c.b16 %v690, %v689
        %v711 = vunpack.c.l.b16 %v667
        %v712 = vunpack.c.l.b16 %v668
        %v713 = vunpack.c.l.b16 %v669
        %v714 = vunpack.c.l.b16 %v670
        %v715 = vunpack.c.l.b16 %v671
        %v716 = vunpack.c.l.b16 %v672
        %v717 = vunpack.c.l.b16 %v673
        %v718 = vunpack.c.l.b16 %v674
        %v719 = vunpack.c.l.b16 %v675
        %v720 = vunpack.c.l.b16 %v676
        %v721 = vunpack.c.l.b16 %v677
        %v722 = vunpack.c.l.b16 %v678
        %v723 = vunpack.c.l.b16 %v679
        %v724 = vunpack.c.l.b16 %v680
        %v725 = vunpack.c.l.b16 %v681
        %v726 = vunpack.c.l.b16 %v682
        %v727 = vpack.c.b16 %v712, %v711
        %v728 = vpack.c.b16 %v714, %v713
        %v729 = vpack.c.b16 %v716, %v715
        %v730 = vpack.c.b16 %v718, %v717
        %v731 = vpack.c.b16 %v720, %v719
        %v732 = vpack.c.b16 %v722, %v721
        %v733 = vpack.c.b16 %v724, %v723
        %v734 = vpack.c.b16 %v726, %v725
        %743 = vmatprep.subr.bf16.mxu0 0
        %744 = vmatpush1.bf16.msra.mxu0 %v727
        %745 = vmatprep.subr.bf16.mxu0 0
        %746 = vmatpush1.bf16.msra.mxu0 %v728
        %747 = vmatprep.subr.bf16.mxu0 0
        %748 = vmatpush1.bf16.msra.mxu0 %v729
        %749 = vmatprep.subr.bf16.mxu0 0
        %750 = vmatpush1.bf16.msra.mxu0 %v730
        %751 = vmatprep.subr.bf16.mxu0 0
        %752 = vmatpush1.bf16.msra.mxu0 %v731
        %753 = vmatprep.subr.bf16.mxu0 0
        %754 = vmatpush1.bf16.msra.mxu0 %v732
        %755 = vmatprep.subr.bf16.mxu0 0
        %756 = vmatpush1.bf16.msra.mxu0 %v733
        %757 = vmatprep.subr.bf16.mxu0 0
        %758 = vmatpush1.bf16.msra.mxu0 %v734
        %759 = vmatprep.subr.bf16.mxu0 0
        %760 = vmatpush1.bf16.msra.mxu0 0
        %761 = vmatprep.subr.bf16.mxu0 0
        %762 = vmatpush1.bf16.msra.mxu0 0
        %763 = vmatprep.subr.bf16.mxu0 0
        %764 = vmatpush1.bf16.msra.mxu0 0
        %765 = vmatprep.subr.bf16.mxu0 0
        %766 = vmatpush1.bf16.msra.mxu0 0
        %767 = vmatprep.subr.bf16.mxu0 0
        %768 = vmatpush1.bf16.msra.mxu0 0
        %769 = vmatprep.subr.bf16.mxu0 0
        %770 = vmatpush1.bf16.msra.mxu0 0
        %771 = vmatprep.subr.bf16.mxu0 0
        %772 = vmatpush1.bf16.msra.mxu0 0
        %773 = vmatprep.subr.bf16.mxu0 0
        %774 = vmatpush1.bf16.msra.mxu0 0
        %775 = vmatprep.mubr.bf16.mxu0 0
        %776 = vmatmul.mubr.bf16.gmra.mrb[0].mxu0 %v691
        %v777 = vpop.f32.mrb[0].mxu0
        %v778 = vadd.f32 0.0, %v777
        %v779 = vpop.f32.mrb[0].mxu0
        %v780 = vpop.f32.mrb[0].mxu0
        %v781 = vadd.f32 0.0, %v780
        %v782 = vpop.f32.mrb[0].mxu0
        %783 = vmatprep.mubr.bf16.mxu0 0
        %784 = vmatmul.mubr.bf16.gmra.mrb[0].mxu0 %v692
        %v785 = vpop.f32.mrb[0].mxu0
        %v786 = vadd.f32 0.0, %v785
        %v787 = vpop.f32.mrb[0].mxu0
        %v788 = vpop.f32.mrb[0].mxu0
        %v789 = vadd.f32 0.0, %v788
        %v790 = vpop.f32.mrb[0].mxu0
        %791 = vdwg.mxu0
        %v792 = vadd.f32 %v604, %v778
        %v793 = vadd.f32 %v607, %v781
        %v794 = vadd.f32 %v612, %v786
        %v795 = vadd.f32 %v615, %v789
        %s796 = scalar_lea.vmem %s3, 32
        %v797 = vld [vmem:[%s796] sm:$0xf]
        %v798 = vld [vmem:[%s796 + $0x4] sm:$0xf]
        %v799 = vld [vmem:[%s796 + $0x8] sm:$0xf]
        %v800 = vld [vmem:[%s796 + $0xc] sm:$0xf]
        %v801 = vld [vmem:[%s796 + $0x10] sm:$0xf]
        %v802 = vld [vmem:[%s796 + $0x14] sm:$0xf]
        %v803 = vld [vmem:[%s796 + $0x18] sm:$0xf]
        %v804 = vld [vmem:[%s796 + $0x1c] sm:$0xf]
        %v805 = vunpack.c.l.b16 %v631
        %v806 = vunpack.c.l.b16 %v641
        %v807 = vunpack.c.l.b16 %v655
        %v808 = vunpack.c.l.b16 %v665
        %v809 = vpack.c.b16 %v806, %v805
        %v810 = vpack.c.b16 %v808, %v807
        %v819 = vunpack.c.l.b16 %v797
        %v820 = vunpack.c.l.b16 %v798
        %v821 = vunpack.c.l.b16 %v799
        %v822 = vunpack.c.l.b16 %v800
        %v823 = vunpack.c.l.b16 %v801
        %v824 = vunpack.c.l.b16 %v802
        %v825 = vunpack.c.l.b16 %v803
        %v826 = vunpack.c.l.b16 %v804
        %v827 = vpack.c.b16 %v820, %v819
        %v828 = vpack.c.b16 %v822, %v821
        %v829 = vpack.c.b16 %v824, %v823
        %v830 = vpack.c.b16 %v826, %v825
        %v836 = vsel %vm453, %v809, 0
        %v839 = vsel %vm453, %v810, 0
        %841 = vmatprep.subr.bf16.mxu0 0
        %842 = vmatpush1.bf16.msra.mxu0 %v827
        %843 = vmatprep.subr.bf16.mxu0 0
        %844 = vmatpush1.bf16.msra.mxu0 %v828
        %845 = vmatprep.subr.bf16.mxu0 0
        %846 = vmatpush1.bf16.msra.mxu0 %v829
        %847 = vmatprep.subr.bf16.mxu0 0
        %848 = vmatpush1.bf16.msra.mxu0 %v830
        %849 = vmatprep.subr.bf16.mxu0 0
        %850 = vmatpush1.bf16.msra.mxu0 0
        %851 = vmatprep.subr.bf16.mxu0 0
        %852 = vmatpush1.bf16.msra.mxu0 0
        %853 = vmatprep.subr.bf16.mxu0 0
        %854 = vmatpush1.bf16.msra.mxu0 0
        %855 = vmatprep.subr.bf16.mxu0 0
        %856 = vmatpush1.bf16.msra.mxu0 0
        %857 = vmatprep.subr.bf16.mxu0 0
        %858 = vmatpush1.bf16.msra.mxu0 0
        %859 = vmatprep.subr.bf16.mxu0 0
        %860 = vmatpush1.bf16.msra.mxu0 0
        %861 = vmatprep.subr.bf16.mxu0 0
        %862 = vmatpush1.bf16.msra.mxu0 0
        %863 = vmatprep.subr.bf16.mxu0 0
        %864 = vmatpush1.bf16.msra.mxu0 0
        %865 = vmatprep.subr.bf16.mxu0 0
        %866 = vmatpush1.bf16.msra.mxu0 0
        %867 = vmatprep.subr.bf16.mxu0 0
        %868 = vmatpush1.bf16.msra.mxu0 0
        %869 = vmatprep.subr.bf16.mxu0 0
        %870 = vmatpush1.bf16.msra.mxu0 0
        %871 = vmatprep.subr.bf16.mxu0 0
        %872 = vmatpush1.bf16.msra.mxu0 0
        %873 = vmatprep.mubr.bf16.mxu0 0
        %874 = vmatmul.mubr.bf16.gmra.mrb[0].mxu0 %v836
        %v875 = vpop.f32.mrb[0].mxu0
        %v876 = vadd.f32 0.0, %v875
        %v877 = vpop.f32.mrb[0].mxu0
        %v878 = vpop.f32.mrb[0].mxu0
        %v879 = vadd.f32 0.0, %v878
        %v880 = vpop.f32.mrb[0].mxu0
        %881 = vmatprep.mubr.bf16.mxu0 0
        %882 = vmatmul.mubr.bf16.gmra.mrb[0].mxu0 %v839
        %v883 = vpop.f32.mrb[0].mxu0
        %v884 = vadd.f32 0.0, %v883
        %v885 = vpop.f32.mrb[0].mxu0
        %v886 = vpop.f32.mrb[0].mxu0
        %v887 = vadd.f32 0.0, %v886
        %v888 = vpop.f32.mrb[0].mxu0
        %889 = vdwg.mxu0
        %v890 = vadd.f32 %v792, %v876
        %v891 = vadd.f32 %v793, %v879
        %v892 = vadd.f32 %v794, %v884
        %v893 = vadd.f32 %v795, %v887
        %v895 = vshrl.u32 %v345, 16
        %v897 = vrot.slane %v895, 4
        %v898 = vshll.u32 %v345, 16
        %v900 = vrot.slane %v898, 5
        %v901 = vor.u32 %v897, %v900
        %v902 = vrot.slane %v901, 4
        %v904 = vshll.u32 %v346, 16
        %v906 = vrot.slane %v904, 5
        %v907 = vsel %vm350, %v902, %v906
        %v908 = vshrl.u32 %v346, 16
        %v910 = vrot.slane %v908, 4
        %v911 = vor.u32 %v910, %v906
        %v912 = vrot.slane %v911, 4
        %v914 = vshll.u32 %v347, 16
        %v916 = vrot.slane %v914, 5
        %v917 = vsel %vm350, %v912, %v916
        %s918 = scalar_lea.vmem %s2, 128
        %v919 = vld [vmem:[%s918] sm:$0xf]
        %v920 = vld [vmem:[%s918 + $0x4] sm:$0xf]
        %v921 = vld [vmem:[%s918 + $0x8] sm:$0xf]
        %v922 = vld [vmem:[%s918 + $0xc] sm:$0xf]
        %v923 = vld [vmem:[%s918 + $0x10] sm:$0xf]
        %v924 = vld [vmem:[%s918 + $0x14] sm:$0xf]
        %v925 = vld [vmem:[%s918 + $0x18] sm:$0xf]
        %v926 = vld [vmem:[%s918 + $0x1c] sm:$0xf]
        %v927 = vld [vmem:[%s918 + $0x20] sm:$0xf]
        %v928 = vld [vmem:[%s918 + $0x24] sm:$0xf]
        %v929 = vld [vmem:[%s918 + $0x28] sm:$0xf]
        %v930 = vld [vmem:[%s918 + $0x2c] sm:$0xf]
        %v931 = vld [vmem:[%s918 + $0x30] sm:$0xf]
        %v932 = vld [vmem:[%s918 + $0x34] sm:$0xf]
        %v933 = vld [vmem:[%s918 + $0x38] sm:$0xf]
        %v934 = vld [vmem:[%s918 + $0x3c] sm:$0xf]
        %v937 = vunpack.c.l.b16 %v345
        %v938 = vunpack.c.l.b16 %v346
        %v939 = vpack.c.b16 %v938, %v937
        %v957 = vunpack.c.l.b16 %v919
        %v958 = vunpack.c.l.b16 %v920
        %v959 = vunpack.c.l.b16 %v921
        %v960 = vunpack.c.l.b16 %v922
        %v961 = vunpack.c.l.b16 %v923
        %v962 = vunpack.c.l.b16 %v924
        %v963 = vunpack.c.l.b16 %v925
        %v964 = vunpack.c.l.b16 %v926
        %v965 = vunpack.c.l.b16 %v927
        %v966 = vunpack.c.l.b16 %v928
        %v967 = vunpack.c.l.b16 %v929
        %v968 = vunpack.c.l.b16 %v930
        %v969 = vunpack.c.l.b16 %v931
        %v970 = vunpack.c.l.b16 %v932
        %v971 = vunpack.c.l.b16 %v933
        %v972 = vunpack.c.l.b16 %v934
        %v973 = vpack.c.b16 %v958, %v957
        %v974 = vpack.c.b16 %v960, %v959
        %v975 = vpack.c.b16 %v962, %v961
        %v976 = vpack.c.b16 %v964, %v963
        %v977 = vpack.c.b16 %v966, %v965
        %v978 = vpack.c.b16 %v968, %v967
        %v979 = vpack.c.b16 %v970, %v969
        %v980 = vpack.c.b16 %v972, %v971
        %989 = vmatprep.subr.bf16.mxu0 0
        %990 = vmatpush1.bf16.msra.mxu0 %v973
        %991 = vmatprep.subr.bf16.mxu0 0
        %992 = vmatpush1.bf16.msra.mxu0 %v974
        %993 = vmatprep.subr.bf16.mxu0 0
        %994 = vmatpush1.bf16.msra.mxu0 %v975
        %995 = vmatprep.subr.bf16.mxu0 0
        %996 = vmatpush1.bf16.msra.mxu0 %v976
        %997 = vmatprep.subr.bf16.mxu0 0
        %998 = vmatpush1.bf16.msra.mxu0 %v977
        %999 = vmatprep.subr.bf16.mxu0 0
        %1000 = vmatpush1.bf16.msra.mxu0 %v978
        %1001 = vmatprep.subr.bf16.mxu0 0
        %1002 = vmatpush1.bf16.msra.mxu0 %v979
        %1003 = vmatprep.subr.bf16.mxu0 0
        %1004 = vmatpush1.bf16.msra.mxu0 %v980
        %1005 = vmatprep.subr.bf16.mxu0 0
        %1006 = vmatpush1.bf16.msra.mxu0 0
        %1007 = vmatprep.subr.bf16.mxu0 0
        %1008 = vmatpush1.bf16.msra.mxu0 0
        %1009 = vmatprep.subr.bf16.mxu0 0
        %1010 = vmatpush1.bf16.msra.mxu0 0
        %1011 = vmatprep.subr.bf16.mxu0 0
        %1012 = vmatpush1.bf16.msra.mxu0 0
        %1013 = vmatprep.subr.bf16.mxu0 0
        %1014 = vmatpush1.bf16.msra.mxu0 0
        %1015 = vmatprep.subr.bf16.mxu0 0
        %1016 = vmatpush1.bf16.msra.mxu0 0
        %1017 = vmatprep.subr.bf16.mxu0 0
        %1018 = vmatpush1.bf16.msra.mxu0 0
        %1019 = vmatprep.subr.bf16.mxu0 0
        %1020 = vmatpush1.bf16.msra.mxu0 0
        %1021 = vmatprep.mubr.bf16.mxu0 0
        %1022 = vmatmul.mubr.bf16.gmra.mrb[0].mxu0 %v518
        %v1023 = vpop.f32.mrb[0].mxu0
        %v1024 = vadd.f32 0.0, %v1023
        %v1025 = vpop.f32.mrb[0].mxu0
        %v1026 = vpop.f32.mrb[0].mxu0
        %v1027 = vadd.f32 0.0, %v1026
        %v1028 = vpop.f32.mrb[0].mxu0
        %1029 = vmatprep.mubr.bf16.mxu0 0
        %1030 = vmatmul.mubr.bf16.gmra.mrb[0].mxu0 %v939
        %v1031 = vpop.f32.mrb[0].mxu0
        %v1032 = vadd.f32 0.0, %v1031
        %v1033 = vpop.f32.mrb[0].mxu0
        %v1034 = vpop.f32.mrb[0].mxu0
        %v1035 = vadd.f32 0.0, %v1034
        %v1036 = vpop.f32.mrb[0].mxu0
        %1037 = vdwg.mxu0
        %v1038 = vadd.f32 %v890, %v1024
        %v1039 = vadd.f32 %v891, %v1027
        %v1040 = vadd.f32 %v892, %v1032
        %v1041 = vadd.f32 %v893, %v1035
        %s1042 = scalar_lea.vmem %s3, 64
        %v1043 = vld [vmem:[%s1042] sm:$0xf]
        %v1044 = vld [vmem:[%s1042 + $0x4] sm:$0xf]
        %v1045 = vld [vmem:[%s1042 + $0x8] sm:$0xf]
        %v1046 = vld [vmem:[%s1042 + $0xc] sm:$0xf]
        %v1047 = vld [vmem:[%s1042 + $0x10] sm:$0xf]
        %v1048 = vld [vmem:[%s1042 + $0x14] sm:$0xf]
        %v1049 = vld [vmem:[%s1042 + $0x18] sm:$0xf]
        %v1050 = vld [vmem:[%s1042 + $0x1c] sm:$0xf]
        %v1051 = vunpack.c.l.b16 %v907
        %v1052 = vunpack.c.l.b16 %v917
        %v1053 = vpack.c.b16 %v1052, %v1051
        %v1062 = vunpack.c.l.b16 %v1043
        %v1063 = vunpack.c.l.b16 %v1044
        %v1064 = vunpack.c.l.b16 %v1045
        %v1065 = vunpack.c.l.b16 %v1046
        %v1066 = vunpack.c.l.b16 %v1047
        %v1067 = vunpack.c.l.b16 %v1048
        %v1068 = vunpack.c.l.b16 %v1049
        %v1069 = vunpack.c.l.b16 %v1050
        %v1070 = vpack.c.b16 %v1063, %v1062
        %v1071 = vpack.c.b16 %v1065, %v1064
        %v1072 = vpack.c.b16 %v1067, %v1066
        %v1073 = vpack.c.b16 %v1069, %v1068
        %v1079 = vsel %vm453, %v1053, 0
        %1081 = vmatprep.subr.bf16.mxu0 0
        %1082 = vmatpush1.bf16.msra.mxu0 %v1070
        %1083 = vmatprep.subr.bf16.mxu0 0
        %1084 = vmatpush1.bf16.msra.mxu0 %v1071
        %1085 = vmatprep.subr.bf16.mxu0 0
        %1086 = vmatpush1.bf16.msra.mxu0 %v1072
        %1087 = vmatprep.subr.bf16.mxu0 0
        %1088 = vmatpush1.bf16.msra.mxu0 %v1073
        %1089 = vmatprep.subr.bf16.mxu0 0
        %1090 = vmatpush1.bf16.msra.mxu0 0
        %1091 = vmatprep.subr.bf16.mxu0 0
        %1092 = vmatpush1.bf16.msra.mxu0 0
        %1093 = vmatprep.subr.bf16.mxu0 0
        %1094 = vmatpush1.bf16.msra.mxu0 0
        %1095 = vmatprep.subr.bf16.mxu0 0
        %1096 = vmatpush1.bf16.msra.mxu0 0
        %1097 = vmatprep.subr.bf16.mxu0 0
        %1098 = vmatpush1.bf16.msra.mxu0 0
        %1099 = vmatprep.subr.bf16.mxu0 0
        %1100 = vmatpush1.bf16.msra.mxu0 0
        %1101 = vmatprep.subr.bf16.mxu0 0
        %1102 = vmatpush1.bf16.msra.mxu0 0
        %1103 = vmatprep.subr.bf16.mxu0 0
        %1104 = vmatpush1.bf16.msra.mxu0 0
        %1105 = vmatprep.subr.bf16.mxu0 0
        %1106 = vmatpush1.bf16.msra.mxu0 0
        %1107 = vmatprep.subr.bf16.mxu0 0
        %1108 = vmatpush1.bf16.msra.mxu0 0
        %1109 = vmatprep.subr.bf16.mxu0 0
        %1110 = vmatpush1.bf16.msra.mxu0 0
        %1111 = vmatprep.subr.bf16.mxu0 0
        %1112 = vmatpush1.bf16.msra.mxu0 0
        %1113 = vmatprep.mubr.bf16.mxu0 0
        %1114 = vmatmul.mubr.bf16.gmra.mrb[0].mxu0 %v458
        %v1115 = vpop.f32.mrb[0].mxu0
        %v1116 = vadd.f32 0.0, %v1115
        %v1117 = vpop.f32.mrb[0].mxu0
        %v1118 = vpop.f32.mrb[0].mxu0
        %v1119 = vadd.f32 0.0, %v1118
        %v1120 = vpop.f32.mrb[0].mxu0
        %1121 = vmatprep.mubr.bf16.mxu0 0
        %1122 = vmatmul.mubr.bf16.gmra.mrb[0].mxu0 %v1079
        %v1123 = vpop.f32.mrb[0].mxu0
        %v1124 = vadd.f32 0.0, %v1123
        %v1125 = vpop.f32.mrb[0].mxu0
        %v1126 = vpop.f32.mrb[0].mxu0
        %v1127 = vadd.f32 0.0, %v1126
        %v1128 = vpop.f32.mrb[0].mxu0
        %1129 = vdwg.mxu0
        %v1130 = vadd.f32 %v1038, %v1116
        %v1131 = vadd.f32 %v1039, %v1119
        %v1132 = vadd.f32 %v1040, %v1124
        %v1133 = vadd.f32 %v1041, %v1127
        %v1134 = vld [vmem:[%s4] sm:$0x1]
        %v1136 = vlaneseq
        %v1137 = vshrl.u32 %v1136, 7
        %v1138 = vsub.s32 0, %v1137
        %v1139 = vrot.slane %v1134, %v1138
        %v1141 = vadd.f32 %v1130, %v1139
        %v1142 = vadd.f32 %v1131, %v1139
        %v1143 = vadd.f32 %v1132, %v1139
        %v1144 = vadd.f32 %v1133, %v1139
        %v1145 = vmax.f32 %v1141, 0.0
        %v1146 = vmax.f32 %v1142, 0.0
        %v1147 = vmax.f32 %v1143, 0.0
        %v1148 = vmax.f32 %v1144, 0.0
        %s1149 = smul.u32 %s24, 2
        %v1150 = vstv %s1149
        %v1151 = vadd.s32 %v1150, 1
        %v1152 = vlaneseq
        %v1153 = vshrl.u32 %v1152, 7
        %v1154 = vadd.s32 %v1153, 8
        %vm1155 = vcmp.lt.s32.totalorder %v1150, 4
        %vm1156 = vcmp.lt.s32.totalorder %v1151, 4
        %vm1157 = vcmp.lt.s32.totalorder %v1153, 4
        %vm1158 = vcmp.lt.s32.totalorder %v1154, 4
        %vm1159 = vmand %vm1155, %vm1157
        %vm1160 = vmand %vm1155, %vm1158
        %vm1161 = vmand %vm1156, %vm1157
        %vm1162 = vmand %vm1156, %vm1158
        %v1163 = vsel %vm1159, 1, 0
        %v1164 = vsel %vm1160, 1, 0
        %v1165 = vsel %vm1161, 1, 0
        %v1166 = vsel %vm1162, 1, 0
        %vm1167 = vcmp.eq.s32.totalorder %v1163, 1
        %vm1168 = vcmp.eq.s32.totalorder %v1164, 1
        %vm1169 = vcmp.eq.s32.totalorder %v1165, 1
        %vm1170 = vcmp.eq.s32.totalorder %v1166, 1
        %v1171 = vsel %vm1167, %v1145, 0.0
        %v1172 = vsel %vm1168, %v1146, 0.0
        %v1173 = vsel %vm1169, %v1147, 0.0
        %v1174 = vsel %vm1170, %v1148, 0.0
        %v1175 = vld [vmem:[%s291] sm:$0x1]
        %v1176 = vsel %vm453, %v1171, 0.0
        %v1177 = vsel %vm453, %v1172, 0.0
        %v1178 = vadd.f32 %v1176, %v1177
        %v1179 = vsel %vm453, %v1173, 0.0
        %v1180 = vadd.f32 %v1178, %v1179
        %v1181 = vsel %vm453, %v1174, 0.0
        %v1182 = vadd.f32 %v1180, %v1181
        %v1183 = vrot.slane %v1182, 4
        %v1184 = vadd.f32 %v1182, %v1183
        %v1185 = vrot.slane %v1184, 2
        %v1186 = vadd.f32 %v1184, %v1185
        %v1187 = vrot.slane %v1186, 1
        %v1188 = vadd.f32 %v1186, %v1187
        %v1189 = vadd.f32 %v1175, %v1188
        %vm1190 = vcmask 516096
        %1191 = vst.msk [vmem:[%s291] sm:$0x1] %vm1190, %v1189
        %p1192 = scmp.eq.s32.totalorder %s24, 1
        // Predicated region
        $region45: #{f_ext_forward.5} parent=39 // pred_check
          %p1193 = pneg %p1192
        $region46: #{f_ext_forward.5} parent=39 // pred_check_branch
          %1195 = sbr.rel (%p1193) target = $region48
        $region47: #{f_ext_forward.5} parent=39 // pred_region
          %v1196 = vld [vmem:[%s291] sm:$0x1]
          %v1197 = vmul.f32 %v1196, 0.0625
          %1198 = vst.msk [vmem:[%s291] sm:$0x1] %vm1190, %v1197
        $region48: #{f_ext_forward.5} parent=39 // pred_fallthru
          _
        %s1199 = sand.u32 %s162, 1
        %s1200 = scalar_lea.sflag [#allocation3], %s1199
        %s1201 = sand.u32 %s162, 1
        %s1202 = scalar_lea.vmem [#allocation2], %s1201
        // Predicated region
        $region49: #{f_ext_forward.5} parent=39 // pred_check
          %p1203 = pneg %p172
        $region50: #{f_ext_forward.5} parent=39 // pred_check_branch
          %1205 = sbr.rel (%p1203) target = $region52
        $region51: #{f_ext_forward.5} parent=39 // pred_region
          %s1207 = ssub.s32 16, 16
          %1208 = vsyncadd %s1200, %s1207
          %s1209 = smul.addr %s23, 16
          %s1210 = scalar_lea.hbm %s5, %s1209
          %s1212 = sshll.u32 %s1202, 4
          %s1213 = int_to_ptr.vmem [resolvable:$true] %s1212
          %1215 = dma.vmem_to_hbm [thread:$0]  %s1213, 16, %s1210, %s1200
        $region52: #{f_ext_forward.5} parent=39 // pred_fallthru
          _
      $region40: #{f_ext_forward.5} parent=5 // pred_fallthru
        _
      %p1216 = scmp.le.s32.totalorder 2, %s14
      // Predicated region
      $region53: #{f_ext_forward.5} parent=5 // pred_check
        %p1217 = pneg %p1216
      $region54: #{f_ext_forward.5} parent=5 // pred_check_branch
        %1219 = sbr.rel (%p1217) target = $region56
      $region55: #{f_ext_forward.5} parent=5 // pred_region
        %s1220 = ssub.s32 %s14, 2
        // Predicated region
        $region57: #{f_ext_forward.5} parent=55 // pred_check
          %p1221 = pneg %p178
        $region58: #{f_ext_forward.5} parent=55 // pred_check_branch
          %1223 = sbr.rel (%p1221) target = $region60
        $region59: #{f_ext_forward.5} parent=55 // pred_region
          %s1224 = sand.u32 %s163, 1
          %s1225 = scalar_lea.sflag [#allocation3], %s1224
          %s1226 = sand.u32 %s163, 1
          %s1227 = scalar_lea.vmem [#allocation2], %s1226
          %1228 = dma.done %s1225, 16
        $region60: #{f_ext_forward.5} parent=55 // pred_fallthru
          _
      $region56: #{f_ext_forward.5} parent=5 // pred_fallthru
        _
    $region6: #{f_ext_forward.5} parent=1 // loop_footer
      %s18 = sadd.s32 1, %s14
    $region7: #{f_ext_forward.5} parent=1 // loop_footer_branch
      %13 = sbr.rel target = $region3
    $region8: #{f_ext_forward.5} parent=1 // loop_exit
      _
    %1229 = vsyncpa [#allocation3], 1
    %s1230 = scalar_lea.sflag [#allocation3], 1
    %1231 = vsyncpa %s1230, 1

</llo_original>
